<compile_context>
chip_gen: v6e
topology: v6e:2x2x1
jax: 0.10.0
libtpu: 0.0.40
codegen_flags: <defaults>
</compile_context>

<pallas_src>
import math
import functools

import jax
import jax.numpy as jnp
from jax.experimental import pallas as pl
from jax.experimental.pallas import tpu as pltpu


# ---------------------------------------------------------------------------
# small BERT-ish config (bert-base-chinese is 768/12/12; this is a tiny clone)
# ---------------------------------------------------------------------------
CFG = dict(
    hidden=32,        # hidden_size
    heads=4,          # num_attention_heads
    layers=2,         # num_hidden_layers
    inter=128,        # intermediate_size (4 * hidden)
    vocab=64,         # vocab_size (also classify output dim, per the module)
    max_pos=16,       # max_position_embeddings
    type_vocab=2,     # token_type vocab
    ln_eps=1e-12,
)
VOCAB_PAD = 128       # classify width padded to a full 128-lane vreg
NEG_BIG = -1e9        # bias on padded vocab columns -> exp() underflows to exactly 0


# ---------------------------------------------------------------------------
# in-kernel helpers (traced inside the Pallas kernels)
# ---------------------------------------------------------------------------
def _layer_norm(x, g, b, eps=CFG["ln_eps"]):
    mu = jnp.mean(x, axis=-1, keepdims=True)
    var = jnp.mean((x - mu) ** 2, axis=-1, keepdims=True)
    return (x - mu) * jax.lax.rsqrt(var + eps) * g + b


def _gelu(x):
    # TODO(synk): HF BERT uses exact erf-GELU; tanh approximation used here.
    return 0.5 * x * (1.0 + jnp.tanh(0.7978845608028654 * (x + 0.044715 * x * x * x)))


def _forward_logits(ids_ref, mask_ref, wemb_ref, pos_ref, gvec_ref, lvec_ref,
                    wqkv_ref, wo_ref, wi_ref, wf_ref, clsw_ref,
                    *, S, num_heads, num_layers):
    """Fused forward for ONE batch element: embeddings -> encoder stack -> (S, Vp) logits."""
    V, H = wemb_ref.shape
    hd = H // num_heads
    gv = gvec_ref[...]                                            # (8, 128) packed globals

    # ---- embeddings fused in-kernel: one-hot gather on the MXU + pos/type add ----
    ids = ids_ref[...]                                            # (S, 1) int32
    onehot = (jax.lax.broadcasted_iota(jnp.int32, (S, V), 1) == ids).astype(jnp.float32)
    emb = jnp.dot(onehot, wemb_ref[...], preferred_element_type=jnp.float32) + pos_ref[...]
    h = _layer_norm(emb, gv[0:1, :H], gv[1:2, :H])                # (S, H) f32

    # ---- additive attention mask built in-kernel from the (1,1,S) key mask ----
    maskadd = (1.0 - mask_ref[...]) * -10000.0                    # broadcasts over (heads, Sq, Sk)

    for l in range(num_layers):        # static unroll: all layer weights VMEM-resident
        lv = lvec_ref[l]                                          # (8, 128) packed per-layer vectors
        hb = h.astype(jnp.bfloat16)

        # fused Q/K/V projection (1/sqrt(head_dim) pre-folded into the Q columns at init)
        qkv = jnp.dot(hb, wqkv_ref[l], preferred_element_type=jnp.float32) + lv[0:1, :3 * H]
        q3 = qkv[:, 0 * H:1 * H].reshape(S, num_heads, hd).astype(jnp.bfloat16)
        k3 = qkv[:, 1 * H:2 * H].reshape(S, num_heads, hd).astype(jnp.bfloat16)
        v3 = qkv[:, 2 * H:3 * H].reshape(S, num_heads, hd).astype(jnp.bfloat16)

        # head-batched attention: no per-head Python loop, no lane-axis concatenate
        s = jnp.einsum('qhd,khd->hqk', q3, k3,
                       preferred_element_type=jnp.float32) + maskadd          # (heads, S, S)
        s = s - jnp.max(s, axis=-1, keepdims=True)
        p = jnp.exp(s)
        p = p * pl.reciprocal(jnp.sum(p, axis=-1, keepdims=True), approx=True)
        ctx = jnp.einsum('hqk,khd->qhd', p.astype(jnp.bfloat16), v3,
                         preferred_element_type=jnp.float32).reshape(S, H)

        attn = jnp.dot(ctx.astype(jnp.bfloat16), wo_ref[l],
                       preferred_element_type=jnp.float32) + lv[1:2, :H]
        a = _layer_norm(attn + h, lv[2:3, :H], lv[3:4, :H])

        ffn = jnp.dot(a.astype(jnp.bfloat16), wi_ref[l],
                      preferred_element_type=jnp.float32) + lv[4:5, :]
        ffn = _gelu(ffn)
        ffn = jnp.dot(ffn.astype(jnp.bfloat16), wf_ref[l],
                      preferred_element_type=jnp.float32) + lv[5:6, :H]
        h = _layer_norm(ffn + a, lv[6:7, :H], lv[7:8, :H])

    # lane-padded classify head: pads have zero weight / -1e9 bias -> exp() == 0 exactly
    logits = jnp.dot(h.astype(jnp.bfloat16), clsw_ref[...],
                     preferred_element_type=jnp.float32) + gv[2:3, :]         # (S, Vp)
    return logits


# ---------------------------------------------------------------------------
# Pallas kernels (one fused call per branch, grid over batch elements)
# ---------------------------------------------------------------------------
def lm_probs_kernel(ids_ref, mask_ref, wemb_ref, pos_ref, gvec_ref, lvec_ref,
                    wqkv_ref, wo_ref, wi_ref, wf_ref, clsw_ref, out_ref,
                    *, S, num_heads, num_layers):
    logits = _forward_logits(ids_ref, mask_ref, wemb_ref, pos_ref, gvec_ref, lvec_ref,
                             wqkv_ref, wo_ref, wi_ref, wf_ref, clsw_ref,
                             S=S, num_heads=num_heads, num_layers=num_layers)
    logits = logits - jnp.max(logits, axis=-1, keepdims=True)
    e = jnp.exp(logits)
    # exact divide here so probabilities sum to 1 (approx reciprocal kept in attention only)
    out_ref[...] = e / jnp.sum(e, axis=-1, keepdims=True)


def lm_loss_kernel(ids_ref, mask_ref, wemb_ref, pos_ref, gvec_ref, lvec_ref,
                   wqkv_ref, wo_ref, wi_ref, wf_ref, clsw_ref, y_ref, out_ref,
                   *, S, num_heads, num_layers):
    logits = _forward_logits(ids_ref, mask_ref, wemb_ref, pos_ref, gvec_ref, lvec_ref,
                             wqkv_ref, wo_ref, wi_ref, wf_ref, clsw_ref,
                             S=S, num_heads=num_heads, num_layers=num_layers)
    Vp = logits.shape[-1]
    m = jnp.max(logits, axis=-1, keepdims=True)
    lse = jnp.log(jnp.sum(jnp.exp(logits - m), axis=-1, keepdims=True)) + m
    # target logit selected in-kernel (no one-hot DMA): labels < vocab < Vp
    cols = jax.lax.broadcasted_iota(jnp.int32, (S, Vp), 1)
    tgt = jnp.sum(jnp.where(cols == y_ref[...], logits, 0.0), axis=-1, keepdims=True)
    out_ref[...] = lse - tgt          # per-token CE; mean over B*S taken in the wrapper


# ---------------------------------------------------------------------------
# parameter init (deterministic, synthetic; layer weights stacked on axis 0)
# ---------------------------------------------------------------------------
def init_params(key, cfg):
    # TODO(synk): real module loads pretrained bert-base-chinese; synthetic init here.
    H, I, V, L = cfg["hidden"], cfg["inter"], cfg["vocab"], cfg["layers"]
    nh = cfg["heads"]
    hd = H // nh
    Vp = VOCAB_PAD
    std = 0.02
    keys = iter(jax.random.split(key, 16))

    def rnd(shape):
        return std * jax.random.normal(next(keys), shape, dtype=jnp.float32)

    # fused QKV weight, attention scale 1/sqrt(head_dim) folded into the Q columns
    wqkv = rnd((L, H, 3 * H)).at[:, :, :H].multiply(1.0 / math.sqrt(hd)).astype(jnp.bfloat16)

    # classify head padded to 128 lanes: zero weights on pad columns
    cls_w = jnp.concatenate([rnd((H, V)), jnp.zeros((H, Vp - V), jnp.float32)],
                            axis=1).astype(jnp.bfloat16)

    # packed "global" vectors: row0 emb_ln_gamma, row1 emb_ln_beta, row2 classify bias (+NEG_BIG pads)
    gvec = jnp.zeros((8, 128), jnp.float32)
    gvec = gvec.at[0, :H].set(1.0)
    gvec = gvec.at[2, V:Vp].set(NEG_BIG)

    # packed per-layer vectors, rows: [bqkv, bo, g1, b1, bi, bf, g2, b2]
    lvec = jnp.zeros((L, 8, 128), jnp.float32)
    lvec = lvec.at[:, 2, :H].set(1.0)      # attention-output LayerNorm gamma
    lvec = lvec.at[:, 6, :H].set(1.0)      # FFN-output LayerNorm gamma

    return dict(
        word_emb=rnd((V, H)),
        pos_emb=rnd((cfg["max_pos"], H)),
        type_emb=rnd((cfg["type_vocab"], H)),
        gvec=gvec, lvec=lvec,
        wqkv=wqkv,
        wo=rnd((L, H, H)).astype(jnp.bfloat16),
        wi=rnd((L, H, I)).astype(jnp.bfloat16),
        wf=rnd((L, I, H)).astype(jnp.bfloat16),
        cls_w=cls_w,
    )


# ---------------------------------------------------------------------------
# LanguageModel.forward equivalent
# ---------------------------------------------------------------------------
def _const_spec(a):
    """Full-array block with a constant block index (weights resident across the grid)."""
    if a.ndim == 2:
        return pl.BlockSpec(a.shape, lambda b: (0, 0))
    return pl.BlockSpec(a.shape, lambda b: (0, 0, 0))


def language_model_forward(params, x, y=None, mask=None, cfg=CFG):
    B, S = x.shape
    H, V = cfg["hidden"], cfg["vocab"]
    Vp = params["cls_w"].shape[1]

    # per-example inputs: token ids + key mask only (embedding + mask built in-kernel)
    ids = x.reshape(B * S, 1).astype(jnp.int32)
    key_mask = jnp.ones((B, S), jnp.float32) if mask is None else mask.astype(jnp.float32)
    key_mask = key_mask.reshape(B, 1, S)
    # position rows 0..S-1 with token-type row 0 folded in (static slice, wrapper-side glue)
    pos = (params["pos_emb"][:S] + params["type_emb"][0][None, :]).astype(jnp.float32)

    weights = (params["word_emb"], pos, params["gvec"], params["lvec"],
               params["wqkv"], params["wo"], params["wi"], params["wf"],
               params["cls_w"])

    in_specs = [
        pl.BlockSpec((S, 1), lambda b: (b, 0)),          # token ids   (B*S, 1)
        pl.BlockSpec((1, 1, S), lambda b: (b, 0, 0)),    # key mask    (B, 1, S)
    ] + [_const_spec(a) for a in weights]

    statics = dict(S=S, num_heads=cfg["heads"], num_layers=cfg["layers"])
    cparams = pltpu.CompilerParams(dimension_semantics=("parallel",))

    if y is not None:
        labels = y.reshape(B * S, 1).astype(jnp.int32)
        per_tok = pl.pallas_call(
            functools.partial(lm_loss_kernel, **statics),
            grid=(B,),
            in_specs=in_specs + [pl.BlockSpec((S, 1), lambda b: (b, 0))],
            out_specs=pl.BlockSpec((S, 1), lambda b: (b, 0)),
            out_shape=jax.ShapeDtypeStruct((B * S, 1), jnp.float32),
            compiler_params=cparams,
        )(ids, key_mask, *weights, labels)
        # torch F.cross_entropy default: mean over all B*S tokens (no ignore_index)
        return jnp.sum(per_tok) / (B * S)

    probs = pl.pallas_call(
        functools.partial(lm_probs_kernel, **statics),
        grid=(B,),
        in_specs=in_specs,
        out_specs=pl.BlockSpec((S, Vp), lambda b: (b, 0)),
        out_shape=jax.ShapeDtypeStruct((B * S, Vp), jnp.float32),
        compiler_params=cparams,
    )(ids, key_mask, *weights)
    return probs[:, :V].reshape(B, S, V)                 # drop lane-padding columns


# ---------------------------------------------------------------------------
if __name__ == "__main__":
    root = jax.random.PRNGKey(0)
    k_param, k_x, k_y = jax.random.split(root, 3)

    B, S = 2, 8
    params = init_params(k_param, CFG)
    x = jax.random.randint(k_x, (B, S), 0, CFG["vocab"], dtype=jnp.int32)
    y = jax.random.randint(k_y, (B, S), 0, CFG["vocab"], dtype=jnp.int32)
    mask = jnp.ones((B, S), jnp.float32)

    # inference branch (y=None): softmax over vocab
    probs = language_model_forward(params, x, mask=mask)
    # training branch (y given): mean cross-entropy loss
    loss = language_model_forward(params, x, y=y, mask=mask)

    jax.block_until_ready(probs)
    jax.block_until_ready(loss)

    assert probs.shape == (B, S, CFG["vocab"])
    assert jnp.all(jnp.isfinite(probs)) and bool(jnp.isfinite(loss))
    assert jnp.allclose(jnp.sum(probs, axis=-1), 1.0, atol=1e-3)
    print("KERNEL_OK")
</pallas_src>

<mosaic_0001>
module attributes {stable_mosaic.version = 11 : i64} {
  func.func @lm_probs_kernel(%arg0: i32, %arg1: memref<8x1xi32, #tpu.memory_space<vmem>>, %arg2: memref<1x1x8xf32, #tpu.memory_space<vmem>>, %arg3: memref<64x32xf32, #tpu.memory_space<vmem>>, %arg4: memref<8x32xf32, #tpu.memory_space<vmem>>, %arg5: memref<8x128xf32, #tpu.memory_space<vmem>>, %arg6: memref<2x8x128xf32, #tpu.memory_space<vmem>>, %arg7: memref<2x32x96xbf16, #tpu.memory_space<vmem>>, %arg8: memref<2x32x32xbf16, #tpu.memory_space<vmem>>, %arg9: memref<2x32x128xbf16, #tpu.memory_space<vmem>>, %arg10: memref<2x128x32xbf16, #tpu.memory_space<vmem>>, %arg11: memref<32x128xbf16, #tpu.memory_space<vmem>>, %arg12: memref<8x128xf32, #tpu.memory_space<vmem>>) attributes {dimension_semantics = [#tpu.dimension_semantics<parallel>], iteration_bounds = array<i64: 2>, scalar_prefetch = 0 : i64, scratch_operands = 0 : i64, tpu.core_type = #tpu.core_type<tc>, window_params = [{transform_indices = @transform_0, window_bounds = array<i64: 8, 1>}, {transform_indices = @transform_1, window_bounds = array<i64: 1, 1, 8>}, {pipeline_mode = #tpu.pipeline_mode<synchronous>, transform_indices = @transform_2, window_bounds = array<i64: 64, 32>}, {pipeline_mode = #tpu.pipeline_mode<synchronous>, transform_indices = @transform_3, window_bounds = array<i64: 8, 32>}, {pipeline_mode = #tpu.pipeline_mode<synchronous>, transform_indices = @transform_4, window_bounds = array<i64: 8, 128>}, {pipeline_mode = #tpu.pipeline_mode<synchronous>, transform_indices = @transform_5, window_bounds = array<i64: 2, 8, 128>}, {pipeline_mode = #tpu.pipeline_mode<synchronous>, transform_indices = @transform_6, window_bounds = array<i64: 2, 32, 96>}, {pipeline_mode = #tpu.pipeline_mode<synchronous>, transform_indices = @transform_7, window_bounds = array<i64: 2, 32, 32>}, {pipeline_mode = #tpu.pipeline_mode<synchronous>, transform_indices = @transform_8, window_bounds = array<i64: 2, 32, 128>}, {pipeline_mode = #tpu.pipeline_mode<synchronous>, transform_indices = @transform_9, window_bounds = array<i64: 2, 128, 32>}, {pipeline_mode = #tpu.pipeline_mode<synchronous>, transform_indices = @transform_10, window_bounds = array<i64: 32, 128>}, {transform_indices = @transform_11, window_bounds = array<i64: 8, 128>}]} {
    %c0 = arith.constant 0 : index
    %c0_0 = arith.constant 0 : index
    %0 = vector.load %arg5[%c0, %c0_0] : memref<8x128xf32, #tpu.memory_space<vmem>>, vector<8x128xf32>
    %c0_1 = arith.constant 0 : index
    %c0_2 = arith.constant 0 : index
    %1 = vector.load %arg1[%c0_1, %c0_2] : memref<8x1xi32, #tpu.memory_space<vmem>>, vector<8x1xi32>
    %2 = tpu.iota {dimensions = array<i32: 1>} : vector<8x64xi32>
    %3 = vector.broadcast %1 : vector<8x1xi32> to vector<8x64xi32>
    %4 = arith.cmpi eq, %2, %3 : vector<8x64xi32>
    %5 = arith.extui %4 : vector<8x64xi1> to vector<8x64xi32>
    %6 = arith.sitofp %5 : vector<8x64xi32> to vector<8x64xf32>
    %c0_3 = arith.constant 0 : index
    %c0_4 = arith.constant 0 : index
    %7 = vector.load %arg3[%c0_3, %c0_4] : memref<64x32xf32, #tpu.memory_space<vmem>>, vector<64x32xf32>
    %cst = arith.constant dense<0.000000e+00> : vector<8x32xf32>
    %8 = tpu.matmul %6, %7, %cst {dimension_numbers = #tpu.dot_dimension_numbers<[1], [0], [0], [1], [0, 0, 1, 1], [], []>} : vector<8x64xf32>, vector<64x32xf32>, vector<8x32xf32> -> vector<8x32xf32>
    %c0_5 = arith.constant 0 : index
    %c0_6 = arith.constant 0 : index
    %9 = vector.load %arg4[%c0_5, %c0_6] : memref<8x32xf32, #tpu.memory_space<vmem>>, vector<8x32xf32>
    %10 = arith.addf %8, %9 : vector<8x32xf32>
    %11 = vector.extract_strided_slice %0 {offsets = [0, 0], sizes = [1, 32], strides = [1, 1]} : vector<8x128xf32> to vector<1x32xf32>
    %12 = vector.extract_strided_slice %0 {offsets = [1, 0], sizes = [1, 32], strides = [1, 1]} : vector<8x128xf32> to vector<1x32xf32>
    %cst_7 = arith.constant dense<0.000000e+00> : vector<8xf32>
    %13 = vector.multi_reduction <add>, %10, %cst_7 [1] : vector<8x32xf32> to vector<8xf32>
    %14 = vector.shape_cast %13 : vector<8xf32> to vector<8x1xf32>
    %cst_8 = arith.constant 3.200000e+01 : f32
    %15 = vector.broadcast %cst_8 : f32 to vector<8x1xf32>
    %16 = arith.divf %14, %15 : vector<8x1xf32>
    %17 = vector.broadcast %16 : vector<8x1xf32> to vector<8x32xf32>
    %18 = arith.subf %10, %17 : vector<8x32xf32>
    %19 = arith.mulf %18, %18 : vector<8x32xf32>
    %cst_9 = arith.constant dense<0.000000e+00> : vector<8xf32>
    %20 = vector.multi_reduction <add>, %19, %cst_9 [1] : vector<8x32xf32> to vector<8xf32>
    %21 = vector.shape_cast %20 : vector<8xf32> to vector<8x1xf32>
    %cst_10 = arith.constant 3.200000e+01 : f32
    %22 = vector.broadcast %cst_10 : f32 to vector<8x1xf32>
    %23 = arith.divf %21, %22 : vector<8x1xf32>
    %24 = vector.broadcast %16 : vector<8x1xf32> to vector<8x32xf32>
    %25 = arith.subf %10, %24 : vector<8x32xf32>
    %cst_11 = arith.constant 9.99999996E-13 : f32
    %26 = vector.broadcast %cst_11 : f32 to vector<8x1xf32>
    %27 = arith.addf %23, %26 : vector<8x1xf32>
    %28 = math.rsqrt %27 : vector<8x1xf32>
    %29 = vector.broadcast %28 : vector<8x1xf32> to vector<8x32xf32>
    %30 = arith.mulf %25, %29 : vector<8x32xf32>
    %31 = vector.broadcast %11 : vector<1x32xf32> to vector<8x32xf32>
    %32 = arith.mulf %30, %31 : vector<8x32xf32>
    %33 = vector.broadcast %12 : vector<1x32xf32> to vector<8x32xf32>
    %34 = arith.addf %32, %33 : vector<8x32xf32>
    %c0_12 = arith.constant 0 : index
    %c0_13 = arith.constant 0 : index
    %c0_14 = arith.constant 0 : index
    %35 = vector.load %arg2[%c0_12, %c0_13, %c0_14] : memref<1x1x8xf32, #tpu.memory_space<vmem>>, vector<1x1x8xf32>
    %cst_15 = arith.constant 1.000000e+00 : f32
    %36 = vector.broadcast %cst_15 : f32 to vector<1x1x8xf32>
    %37 = arith.subf %36, %35 : vector<1x1x8xf32>
    %cst_16 = arith.constant -1.000000e+04 : f32
    %38 = vector.broadcast %cst_16 : f32 to vector<1x1x8xf32>
    %39 = arith.mulf %37, %38 : vector<1x1x8xf32>
    %c0_17 = arith.constant 0 : index
    %c0_18 = arith.constant 0 : index
    %c0_19 = arith.constant 0 : index
    %40 = vector.load %arg6[%c0_17, %c0_18, %c0_19] : memref<2x8x128xf32, #tpu.memory_space<vmem>>, vector<1x8x128xf32>
    %41 = vector.shape_cast %40 : vector<1x8x128xf32> to vector<8x128xf32>
    %42 = arith.truncf %34 : vector<8x32xf32> to vector<8x32xbf16>
    %c0_20 = arith.constant 0 : index
    %c0_21 = arith.constant 0 : index
    %c0_22 = arith.constant 0 : index
    %43 = vector.load %arg7[%c0_20, %c0_21, %c0_22] : memref<2x32x96xbf16, #tpu.memory_space<vmem>>, vector<1x32x96xbf16>
    %44 = vector.shape_cast %43 : vector<1x32x96xbf16> to vector<32x96xbf16>
    %cst_23 = arith.constant dense<0.000000e+00> : vector<8x96xf32>
    %45 = tpu.matmul %42, %44, %cst_23 {dimension_numbers = #tpu.dot_dimension_numbers<[1], [0], [0], [1], [0, 0, 1, 1], [], []>} : vector<8x32xbf16>, vector<32x96xbf16>, vector<8x96xf32> -> vector<8x96xf32>
    %46 = vector.extract_strided_slice %41 {offsets = [0, 0], sizes = [1, 96], strides = [1, 1]} : vector<8x128xf32> to vector<1x96xf32>
    %47 = vector.broadcast %46 : vector<1x96xf32> to vector<8x96xf32>
    %48 = arith.addf %45, %47 : vector<8x96xf32>
    %49 = vector.extract_strided_slice %48 {offsets = [0, 0], sizes = [8, 32], strides = [1, 1]} : vector<8x96xf32> to vector<8x32xf32>
    %50 = vector.shape_cast %49 : vector<8x32xf32> to vector<8x4x8xf32>
    %51 = arith.truncf %50 : vector<8x4x8xf32> to vector<8x4x8xbf16>
    %52 = vector.extract_strided_slice %48 {offsets = [0, 32], sizes = [8, 32], strides = [1, 1]} : vector<8x96xf32> to vector<8x32xf32>
    %53 = vector.shape_cast %52 : vector<8x32xf32> to vector<8x4x8xf32>
    %54 = arith.truncf %53 : vector<8x4x8xf32> to vector<8x4x8xbf16>
    %55 = vector.extract_strided_slice %48 {offsets = [0, 64], sizes = [8, 32], strides = [1, 1]} : vector<8x96xf32> to vector<8x32xf32>
    %56 = vector.shape_cast %55 : vector<8x32xf32> to vector<8x4x8xf32>
    %57 = arith.truncf %56 : vector<8x4x8xf32> to vector<8x4x8xbf16>
    "tpu.trace_start"() <{level = 10 : i32, message = "qhd,khd->hqk"}> : () -> ()
    %cst_24 = arith.constant dense<0.000000e+00> : vector<4x8x8xf32>
    %58 = tpu.matmul %51, %54, %cst_24 {dimension_numbers = #tpu.dot_dimension_numbers<[2], [2], [0], [0], [0, 1, 0, 0, 1, 0], [1], [1]>} : vector<8x4x8xbf16>, vector<8x4x8xbf16>, vector<4x8x8xf32> -> vector<4x8x8xf32>
    "tpu.trace_stop"() : () -> ()
    %59 = vector.broadcast %39 : vector<1x1x8xf32> to vector<4x8x8xf32>
    %60 = arith.addf %58, %59 : vector<4x8x8xf32>
    %cst_25 = arith.constant dense<0xFF800000> : vector<4x8xf32>
    %61 = vector.multi_reduction <maximumf>, %60, %cst_25 [2] : vector<4x8x8xf32> to vector<4x8xf32>
    %62 = vector.shape_cast %61 : vector<4x8xf32> to vector<4x8x1xf32>
    %63 = vector.broadcast %62 : vector<4x8x1xf32> to vector<4x8x8xf32>
    %64 = arith.subf %60, %63 : vector<4x8x8xf32>
    %65 = math.exp %64 : vector<4x8x8xf32>
    %cst_26 = arith.constant dense<0.000000e+00> : vector<4x8xf32>
    %66 = vector.multi_reduction <add>, %65, %cst_26 [2] : vector<4x8x8xf32> to vector<4x8xf32>
    %67 = vector.shape_cast %66 : vector<4x8xf32> to vector<4x8x1xf32>
    %68 = tpu.reciprocal %67 {approx = true} : vector<4x8x1xf32> -> vector<4x8x1xf32>
    %69 = vector.broadcast %68 : vector<4x8x1xf32> to vector<4x8x8xf32>
    %70 = arith.mulf %65, %69 : vector<4x8x8xf32>
    %71 = arith.truncf %70 : vector<4x8x8xf32> to vector<4x8x8xbf16>
    "tpu.trace_start"() <{level = 10 : i32, message = "hqk,khd->qhd"}> : () -> ()
    %cst_27 = arith.constant dense<0.000000e+00> : vector<4x8x8xf32>
    %72 = tpu.matmul %57, %71, %cst_27 {dimension_numbers = #tpu.dot_dimension_numbers<[0], [2], [2], [1], [0, 1, 0, 2, 1, 1], [1], [0]>} : vector<8x4x8xbf16>, vector<4x8x8xbf16>, vector<4x8x8xf32> -> vector<4x8x8xf32>
    %73 = tpu.transpose %72, [2, 0, 1] : vector<4x8x8xf32> -> vector<8x4x8xf32>
    "tpu.trace_stop"() : () -> ()
    %74 = vector.shape_cast %73 : vector<8x4x8xf32> to vector<8x32xf32>
    %75 = arith.truncf %74 : vector<8x32xf32> to vector<8x32xbf16>
    %c0_28 = arith.constant 0 : index
    %c0_29 = arith.constant 0 : index
    %c0_30 = arith.constant 0 : index
    %76 = vector.load %arg8[%c0_28, %c0_29, %c0_30] : memref<2x32x32xbf16, #tpu.memory_space<vmem>>, vector<1x32x32xbf16>
    %77 = vector.shape_cast %76 : vector<1x32x32xbf16> to vector<32x32xbf16>
    %cst_31 = arith.constant dense<0.000000e+00> : vector<8x32xf32>
    %78 = tpu.matmul %75, %77, %cst_31 {dimension_numbers = #tpu.dot_dimension_numbers<[1], [0], [0], [1], [0, 0, 1, 1], [], []>} : vector<8x32xbf16>, vector<32x32xbf16>, vector<8x32xf32> -> vector<8x32xf32>
    %79 = vector.extract_strided_slice %41 {offsets = [1, 0], sizes = [1, 32], strides = [1, 1]} : vector<8x128xf32> to vector<1x32xf32>
    %80 = vector.broadcast %79 : vector<1x32xf32> to vector<8x32xf32>
    %81 = arith.addf %78, %80 : vector<8x32xf32>
    %82 = arith.addf %81, %34 : vector<8x32xf32>
    %83 = vector.extract_strided_slice %41 {offsets = [2, 0], sizes = [1, 32], strides = [1, 1]} : vector<8x128xf32> to vector<1x32xf32>
    %84 = vector.extract_strided_slice %41 {offsets = [3, 0], sizes = [1, 32], strides = [1, 1]} : vector<8x128xf32> to vector<1x32xf32>
    %cst_32 = arith.constant dense<0.000000e+00> : vector<8xf32>
    %85 = vector.multi_reduction <add>, %82, %cst_32 [1] : vector<8x32xf32> to vector<8xf32>
    %86 = vector.shape_cast %85 : vector<8xf32> to vector<8x1xf32>
    %cst_33 = arith.constant 3.200000e+01 : f32
    %87 = vector.broadcast %cst_33 : f32 to vector<8x1xf32>
    %88 = arith.divf %86, %87 : vector<8x1xf32>
    %89 = vector.broadcast %88 : vector<8x1xf32> to vector<8x32xf32>
    %90 = arith.subf %82, %89 : vector<8x32xf32>
    %91 = arith.mulf %90, %90 : vector<8x32xf32>
    %cst_34 = arith.constant dense<0.000000e+00> : vector<8xf32>
    %92 = vector.multi_reduction <add>, %91, %cst_34 [1] : vector<8x32xf32> to vector<8xf32>
    %93 = vector.shape_cast %92 : vector<8xf32> to vector<8x1xf32>
    %cst_35 = arith.constant 3.200000e+01 : f32
    %94 = vector.broadcast %cst_35 : f32 to vector<8x1xf32>
    %95 = arith.divf %93, %94 : vector<8x1xf32>
    %96 = vector.broadcast %88 : vector<8x1xf32> to vector<8x32xf32>
    %97 = arith.subf %82, %96 : vector<8x32xf32>
    %cst_36 = arith.constant 9.99999996E-13 : f32
    %98 = vector.broadcast %cst_36 : f32 to vector<8x1xf32>
    %99 = arith.addf %95, %98 : vector<8x1xf32>
    %100 = math.rsqrt %99 : vector<8x1xf32>
    %101 = vector.broadcast %100 : vector<8x1xf32> to vector<8x32xf32>
    %102 = arith.mulf %97, %101 : vector<8x32xf32>
    %103 = vector.broadcast %83 : vector<1x32xf32> to vector<8x32xf32>
    %104 = arith.mulf %102, %103 : vector<8x32xf32>
    %105 = vector.broadcast %84 : vector<1x32xf32> to vector<8x32xf32>
    %106 = arith.addf %104, %105 : vector<8x32xf32>
    %107 = arith.truncf %106 : vector<8x32xf32> to vector<8x32xbf16>
    %c0_37 = arith.constant 0 : index
    %c0_38 = arith.constant 0 : index
    %c0_39 = arith.constant 0 : index
    %108 = vector.load %arg9[%c0_37, %c0_38, %c0_39] : memref<2x32x128xbf16, #tpu.memory_space<vmem>>, vector<1x32x128xbf16>
    %109 = vector.shape_cast %108 : vector<1x32x128xbf16> to vector<32x128xbf16>
    %cst_40 = arith.constant dense<0.000000e+00> : vector<8x128xf32>
    %110 = tpu.matmul %107, %109, %cst_40 {dimension_numbers = #tpu.dot_dimension_numbers<[1], [0], [0], [1], [0, 0, 1, 1], [], []>} : vector<8x32xbf16>, vector<32x128xbf16>, vector<8x128xf32> -> vector<8x128xf32>
    %111 = vector.extract_strided_slice %41 {offsets = [4, 0], sizes = [1, 128], strides = [1, 1]} : vector<8x128xf32> to vector<1x128xf32>
    %112 = vector.broadcast %111 : vector<1x128xf32> to vector<8x128xf32>
    %113 = arith.addf %110, %112 : vector<8x128xf32>
    %cst_41 = arith.constant 5.000000e-01 : f32
    %114 = vector.broadcast %cst_41 : f32 to vector<8x128xf32>
    %115 = arith.mulf %114, %113 : vector<8x128xf32>
    %cst_42 = arith.constant 4.471500e-02 : f32
    %116 = vector.broadcast %cst_42 : f32 to vector<8x128xf32>
    %117 = arith.mulf %116, %113 : vector<8x128xf32>
    %118 = arith.mulf %117, %113 : vector<8x128xf32>
    %119 = arith.mulf %118, %113 : vector<8x128xf32>
    %120 = arith.addf %113, %119 : vector<8x128xf32>
    %cst_43 = arith.constant 0.797884583 : f32
    %121 = vector.broadcast %cst_43 : f32 to vector<8x128xf32>
    %122 = arith.mulf %121, %120 : vector<8x128xf32>
    %123 = math.tanh %122 : vector<8x128xf32>
    %cst_44 = arith.constant 1.000000e+00 : f32
    %124 = vector.broadcast %cst_44 : f32 to vector<8x128xf32>
    %125 = arith.addf %124, %123 : vector<8x128xf32>
    %126 = arith.mulf %115, %125 : vector<8x128xf32>
    %127 = arith.truncf %126 : vector<8x128xf32> to vector<8x128xbf16>
    %c0_45 = arith.constant 0 : index
    %c0_46 = arith.constant 0 : index
    %c0_47 = arith.constant 0 : index
    %128 = vector.load %arg10[%c0_45, %c0_46, %c0_47] : memref<2x128x32xbf16, #tpu.memory_space<vmem>>, vector<1x128x32xbf16>
    %129 = vector.shape_cast %128 : vector<1x128x32xbf16> to vector<128x32xbf16>
    %cst_48 = arith.constant dense<0.000000e+00> : vector<8x32xf32>
    %130 = tpu.matmul %127, %129, %cst_48 {dimension_numbers = #tpu.dot_dimension_numbers<[1], [0], [0], [1], [0, 0, 1, 1], [], []>} : vector<8x128xbf16>, vector<128x32xbf16>, vector<8x32xf32> -> vector<8x32xf32>
    %131 = vector.extract_strided_slice %41 {offsets = [5, 0], sizes = [1, 32], strides = [1, 1]} : vector<8x128xf32> to vector<1x32xf32>
    %132 = vector.broadcast %131 : vector<1x32xf32> to vector<8x32xf32>
    %133 = arith.addf %130, %132 : vector<8x32xf32>
    %134 = arith.addf %133, %106 : vector<8x32xf32>
    %135 = vector.extract_strided_slice %41 {offsets = [6, 0], sizes = [1, 32], strides = [1, 1]} : vector<8x128xf32> to vector<1x32xf32>
    %136 = vector.extract_strided_slice %41 {offsets = [7, 0], sizes = [1, 32], strides = [1, 1]} : vector<8x128xf32> to vector<1x32xf32>
    %cst_49 = arith.constant dense<0.000000e+00> : vector<8xf32>
    %137 = vector.multi_reduction <add>, %134, %cst_49 [1] : vector<8x32xf32> to vector<8xf32>
    %138 = vector.shape_cast %137 : vector<8xf32> to vector<8x1xf32>
    %cst_50 = arith.constant 3.200000e+01 : f32
    %139 = vector.broadcast %cst_50 : f32 to vector<8x1xf32>
    %140 = arith.divf %138, %139 : vector<8x1xf32>
    %141 = vector.broadcast %140 : vector<8x1xf32> to vector<8x32xf32>
    %142 = arith.subf %134, %141 : vector<8x32xf32>
    %143 = arith.mulf %142, %142 : vector<8x32xf32>
    %cst_51 = arith.constant dense<0.000000e+00> : vector<8xf32>
    %144 = vector.multi_reduction <add>, %143, %cst_51 [1] : vector<8x32xf32> to vector<8xf32>
    %145 = vector.shape_cast %144 : vector<8xf32> to vector<8x1xf32>
    %cst_52 = arith.constant 3.200000e+01 : f32
    %146 = vector.broadcast %cst_52 : f32 to vector<8x1xf32>
    %147 = arith.divf %145, %146 : vector<8x1xf32>
    %148 = vector.broadcast %140 : vector<8x1xf32> to vector<8x32xf32>
    %149 = arith.subf %134, %148 : vector<8x32xf32>
    %cst_53 = arith.constant 9.99999996E-13 : f32
    %150 = vector.broadcast %cst_53 : f32 to vector<8x1xf32>
    %151 = arith.addf %147, %150 : vector<8x1xf32>
    %152 = math.rsqrt %151 : vector<8x1xf32>
    %153 = vector.broadcast %152 : vector<8x1xf32> to vector<8x32xf32>
    %154 = arith.mulf %149, %153 : vector<8x32xf32>
    %155 = vector.broadcast %135 : vector<1x32xf32> to vector<8x32xf32>
    %156 = arith.mulf %154, %155 : vector<8x32xf32>
    %157 = vector.broadcast %136 : vector<1x32xf32> to vector<8x32xf32>
    %158 = arith.addf %156, %157 : vector<8x32xf32>
    %c1 = arith.constant 1 : index
    %c0_54 = arith.constant 0 : index
    %c0_55 = arith.constant 0 : index
    %159 = vector.load %arg6[%c1, %c0_54, %c0_55] : memref<2x8x128xf32, #tpu.memory_space<vmem>>, vector<1x8x128xf32>
    %160 = vector.shape_cast %159 : vector<1x8x128xf32> to vector<8x128xf32>
    %161 = arith.truncf %158 : vector<8x32xf32> to vector<8x32xbf16>
    %c1_56 = arith.constant 1 : index
    %c0_57 = arith.constant 0 : index
    %c0_58 = arith.constant 0 : index
    %162 = vector.load %arg7[%c1_56, %c0_57, %c0_58] : memref<2x32x96xbf16, #tpu.memory_space<vmem>>, vector<1x32x96xbf16>
    %163 = vector.shape_cast %162 : vector<1x32x96xbf16> to vector<32x96xbf16>
    %cst_59 = arith.constant dense<0.000000e+00> : vector<8x96xf32>
    %164 = tpu.matmul %161, %163, %cst_59 {dimension_numbers = #tpu.dot_dimension_numbers<[1], [0], [0], [1], [0, 0, 1, 1], [], []>} : vector<8x32xbf16>, vector<32x96xbf16>, vector<8x96xf32> -> vector<8x96xf32>
    %165 = vector.extract_strided_slice %160 {offsets = [0, 0], sizes = [1, 96], strides = [1, 1]} : vector<8x128xf32> to vector<1x96xf32>
    %166 = vector.broadcast %165 : vector<1x96xf32> to vector<8x96xf32>
    %167 = arith.addf %164, %166 : vector<8x96xf32>
    %168 = vector.extract_strided_slice %167 {offsets = [0, 0], sizes = [8, 32], strides = [1, 1]} : vector<8x96xf32> to vector<8x32xf32>
    %169 = vector.shape_cast %168 : vector<8x32xf32> to vector<8x4x8xf32>
    %170 = arith.truncf %169 : vector<8x4x8xf32> to vector<8x4x8xbf16>
    %171 = vector.extract_strided_slice %167 {offsets = [0, 32], sizes = [8, 32], strides = [1, 1]} : vector<8x96xf32> to vector<8x32xf32>
    %172 = vector.shape_cast %171 : vector<8x32xf32> to vector<8x4x8xf32>
    %173 = arith.truncf %172 : vector<8x4x8xf32> to vector<8x4x8xbf16>
    %174 = vector.extract_strided_slice %167 {offsets = [0, 64], sizes = [8, 32], strides = [1, 1]} : vector<8x96xf32> to vector<8x32xf32>
    %175 = vector.shape_cast %174 : vector<8x32xf32> to vector<8x4x8xf32>
    %176 = arith.truncf %175 : vector<8x4x8xf32> to vector<8x4x8xbf16>
    "tpu.trace_start"() <{level = 10 : i32, message = "qhd,khd->hqk"}> : () -> ()
    %cst_60 = arith.constant dense<0.000000e+00> : vector<4x8x8xf32>
    %177 = tpu.matmul %170, %173, %cst_60 {dimension_numbers = #tpu.dot_dimension_numbers<[2], [2], [0], [0], [0, 1, 0, 0, 1, 0], [1], [1]>} : vector<8x4x8xbf16>, vector<8x4x8xbf16>, vector<4x8x8xf32> -> vector<4x8x8xf32>
    "tpu.trace_stop"() : () -> ()
    %178 = vector.broadcast %39 : vector<1x1x8xf32> to vector<4x8x8xf32>
    %179 = arith.addf %177, %178 : vector<4x8x8xf32>
    %cst_61 = arith.constant dense<0xFF800000> : vector<4x8xf32>
    %180 = vector.multi_reduction <maximumf>, %179, %cst_61 [2] : vector<4x8x8xf32> to vector<4x8xf32>
    %181 = vector.shape_cast %180 : vector<4x8xf32> to vector<4x8x1xf32>
    %182 = vector.broadcast %181 : vector<4x8x1xf32> to vector<4x8x8xf32>
    %183 = arith.subf %179, %182 : vector<4x8x8xf32>
    %184 = math.exp %183 : vector<4x8x8xf32>
    %cst_62 = arith.constant dense<0.000000e+00> : vector<4x8xf32>
    %185 = vector.multi_reduction <add>, %184, %cst_62 [2] : vector<4x8x8xf32> to vector<4x8xf32>
    %186 = vector.shape_cast %185 : vector<4x8xf32> to vector<4x8x1xf32>
    %187 = tpu.reciprocal %186 {approx = true} : vector<4x8x1xf32> -> vector<4x8x1xf32>
    %188 = vector.broadcast %187 : vector<4x8x1xf32> to vector<4x8x8xf32>
    %189 = arith.mulf %184, %188 : vector<4x8x8xf32>
    %190 = arith.truncf %189 : vector<4x8x8xf32> to vector<4x8x8xbf16>
    "tpu.trace_start"() <{level = 10 : i32, message = "hqk,khd->qhd"}> : () -> ()
    %cst_63 = arith.constant dense<0.000000e+00> : vector<4x8x8xf32>
    %191 = tpu.matmul %176, %190, %cst_63 {dimension_numbers = #tpu.dot_dimension_numbers<[0], [2], [2], [1], [0, 1, 0, 2, 1, 1], [1], [0]>} : vector<8x4x8xbf16>, vector<4x8x8xbf16>, vector<4x8x8xf32> -> vector<4x8x8xf32>
    %192 = tpu.transpose %191, [2, 0, 1] : vector<4x8x8xf32> -> vector<8x4x8xf32>
    "tpu.trace_stop"() : () -> ()
    %193 = vector.shape_cast %192 : vector<8x4x8xf32> to vector<8x32xf32>
    %194 = arith.truncf %193 : vector<8x32xf32> to vector<8x32xbf16>
    %c1_64 = arith.constant 1 : index
    %c0_65 = arith.constant 0 : index
    %c0_66 = arith.constant 0 : index
    %195 = vector.load %arg8[%c1_64, %c0_65, %c0_66] : memref<2x32x32xbf16, #tpu.memory_space<vmem>>, vector<1x32x32xbf16>
    %196 = vector.shape_cast %195 : vector<1x32x32xbf16> to vector<32x32xbf16>
    %cst_67 = arith.constant dense<0.000000e+00> : vector<8x32xf32>
    %197 = tpu.matmul %194, %196, %cst_67 {dimension_numbers = #tpu.dot_dimension_numbers<[1], [0], [0], [1], [0, 0, 1, 1], [], []>} : vector<8x32xbf16>, vector<32x32xbf16>, vector<8x32xf32> -> vector<8x32xf32>
    %198 = vector.extract_strided_slice %160 {offsets = [1, 0], sizes = [1, 32], strides = [1, 1]} : vector<8x128xf32> to vector<1x32xf32>
    %199 = vector.broadcast %198 : vector<1x32xf32> to vector<8x32xf32>
    %200 = arith.addf %197, %199 : vector<8x32xf32>
    %201 = arith.addf %200, %158 : vector<8x32xf32>
    %202 = vector.extract_strided_slice %160 {offsets = [2, 0], sizes = [1, 32], strides = [1, 1]} : vector<8x128xf32> to vector<1x32xf32>
    %203 = vector.extract_strided_slice %160 {offsets = [3, 0], sizes = [1, 32], strides = [1, 1]} : vector<8x128xf32> to vector<1x32xf32>
    %cst_68 = arith.constant dense<0.000000e+00> : vector<8xf32>
    %204 = vector.multi_reduction <add>, %201, %cst_68 [1] : vector<8x32xf32> to vector<8xf32>
    %205 = vector.shape_cast %204 : vector<8xf32> to vector<8x1xf32>
    %cst_69 = arith.constant 3.200000e+01 : f32
    %206 = vector.broadcast %cst_69 : f32 to vector<8x1xf32>
    %207 = arith.divf %205, %206 : vector<8x1xf32>
    %208 = vector.broadcast %207 : vector<8x1xf32> to vector<8x32xf32>
    %209 = arith.subf %201, %208 : vector<8x32xf32>
    %210 = arith.mulf %209, %209 : vector<8x32xf32>
    %cst_70 = arith.constant dense<0.000000e+00> : vector<8xf32>
    %211 = vector.multi_reduction <add>, %210, %cst_70 [1] : vector<8x32xf32> to vector<8xf32>
    %212 = vector.shape_cast %211 : vector<8xf32> to vector<8x1xf32>
    %cst_71 = arith.constant 3.200000e+01 : f32
    %213 = vector.broadcast %cst_71 : f32 to vector<8x1xf32>
    %214 = arith.divf %212, %213 : vector<8x1xf32>
    %215 = vector.broadcast %207 : vector<8x1xf32> to vector<8x32xf32>
    %216 = arith.subf %201, %215 : vector<8x32xf32>
    %cst_72 = arith.constant 9.99999996E-13 : f32
    %217 = vector.broadcast %cst_72 : f32 to vector<8x1xf32>
    %218 = arith.addf %214, %217 : vector<8x1xf32>
    %219 = math.rsqrt %218 : vector<8x1xf32>
    %220 = vector.broadcast %219 : vector<8x1xf32> to vector<8x32xf32>
    %221 = arith.mulf %216, %220 : vector<8x32xf32>
    %222 = vector.broadcast %202 : vector<1x32xf32> to vector<8x32xf32>
    %223 = arith.mulf %221, %222 : vector<8x32xf32>
    %224 = vector.broadcast %203 : vector<1x32xf32> to vector<8x32xf32>
    %225 = arith.addf %223, %224 : vector<8x32xf32>
    %226 = arith.truncf %225 : vector<8x32xf32> to vector<8x32xbf16>
    %c1_73 = arith.constant 1 : index
    %c0_74 = arith.constant 0 : index
    %c0_75 = arith.constant 0 : index
    %227 = vector.load %arg9[%c1_73, %c0_74, %c0_75] : memref<2x32x128xbf16, #tpu.memory_space<vmem>>, vector<1x32x128xbf16>
    %228 = vector.shape_cast %227 : vector<1x32x128xbf16> to vector<32x128xbf16>
    %cst_76 = arith.constant dense<0.000000e+00> : vector<8x128xf32>
    %229 = tpu.matmul %226, %228, %cst_76 {dimension_numbers = #tpu.dot_dimension_numbers<[1], [0], [0], [1], [0, 0, 1, 1], [], []>} : vector<8x32xbf16>, vector<32x128xbf16>, vector<8x128xf32> -> vector<8x128xf32>
    %230 = vector.extract_strided_slice %160 {offsets = [4, 0], sizes = [1, 128], strides = [1, 1]} : vector<8x128xf32> to vector<1x128xf32>
    %231 = vector.broadcast %230 : vector<1x128xf32> to vector<8x128xf32>
    %232 = arith.addf %229, %231 : vector<8x128xf32>
    %cst_77 = arith.constant 5.000000e-01 : f32
    %233 = vector.broadcast %cst_77 : f32 to vector<8x128xf32>
    %234 = arith.mulf %233, %232 : vector<8x128xf32>
    %cst_78 = arith.constant 4.471500e-02 : f32
    %235 = vector.broadcast %cst_78 : f32 to vector<8x128xf32>
    %236 = arith.mulf %235, %232 : vector<8x128xf32>
    %237 = arith.mulf %236, %232 : vector<8x128xf32>
    %238 = arith.mulf %237, %232 : vector<8x128xf32>
    %239 = arith.addf %232, %238 : vector<8x128xf32>
    %cst_79 = arith.constant 0.797884583 : f32
    %240 = vector.broadcast %cst_79 : f32 to vector<8x128xf32>
    %241 = arith.mulf %240, %239 : vector<8x128xf32>
    %242 = math.tanh %241 : vector<8x128xf32>
    %cst_80 = arith.constant 1.000000e+00 : f32
    %243 = vector.broadcast %cst_80 : f32 to vector<8x128xf32>
    %244 = arith.addf %243, %242 : vector<8x128xf32>
    %245 = arith.mulf %234, %244 : vector<8x128xf32>
    %246 = arith.truncf %245 : vector<8x128xf32> to vector<8x128xbf16>
    %c1_81 = arith.constant 1 : index
    %c0_82 = arith.constant 0 : index
    %c0_83 = arith.constant 0 : index
    %247 = vector.load %arg10[%c1_81, %c0_82, %c0_83] : memref<2x128x32xbf16, #tpu.memory_space<vmem>>, vector<1x128x32xbf16>
    %248 = vector.shape_cast %247 : vector<1x128x32xbf16> to vector<128x32xbf16>
    %cst_84 = arith.constant dense<0.000000e+00> : vector<8x32xf32>
    %249 = tpu.matmul %246, %248, %cst_84 {dimension_numbers = #tpu.dot_dimension_numbers<[1], [0], [0], [1], [0, 0, 1, 1], [], []>} : vector<8x128xbf16>, vector<128x32xbf16>, vector<8x32xf32> -> vector<8x32xf32>
    %250 = vector.extract_strided_slice %160 {offsets = [5, 0], sizes = [1, 32], strides = [1, 1]} : vector<8x128xf32> to vector<1x32xf32>
    %251 = vector.broadcast %250 : vector<1x32xf32> to vector<8x32xf32>
    %252 = arith.addf %249, %251 : vector<8x32xf32>
    %253 = arith.addf %252, %225 : vector<8x32xf32>
    %254 = vector.extract_strided_slice %160 {offsets = [6, 0], sizes = [1, 32], strides = [1, 1]} : vector<8x128xf32> to vector<1x32xf32>
    %255 = vector.extract_strided_slice %160 {offsets = [7, 0], sizes = [1, 32], strides = [1, 1]} : vector<8x128xf32> to vector<1x32xf32>
    %cst_85 = arith.constant dense<0.000000e+00> : vector<8xf32>
    %256 = vector.multi_reduction <add>, %253, %cst_85 [1] : vector<8x32xf32> to vector<8xf32>
    %257 = vector.shape_cast %256 : vector<8xf32> to vector<8x1xf32>
    %cst_86 = arith.constant 3.200000e+01 : f32
    %258 = vector.broadcast %cst_86 : f32 to vector<8x1xf32>
    %259 = arith.divf %257, %258 : vector<8x1xf32>
    %260 = vector.broadcast %259 : vector<8x1xf32> to vector<8x32xf32>
    %261 = arith.subf %253, %260 : vector<8x32xf32>
    %262 = arith.mulf %261, %261 : vector<8x32xf32>
    %cst_87 = arith.constant dense<0.000000e+00> : vector<8xf32>
    %263 = vector.multi_reduction <add>, %262, %cst_87 [1] : vector<8x32xf32> to vector<8xf32>
    %264 = vector.shape_cast %263 : vector<8xf32> to vector<8x1xf32>
    %cst_88 = arith.constant 3.200000e+01 : f32
    %265 = vector.broadcast %cst_88 : f32 to vector<8x1xf32>
    %266 = arith.divf %264, %265 : vector<8x1xf32>
    %267 = vector.broadcast %259 : vector<8x1xf32> to vector<8x32xf32>
    %268 = arith.subf %253, %267 : vector<8x32xf32>
    %cst_89 = arith.constant 9.99999996E-13 : f32
    %269 = vector.broadcast %cst_89 : f32 to vector<8x1xf32>
    %270 = arith.addf %266, %269 : vector<8x1xf32>
    %271 = math.rsqrt %270 : vector<8x1xf32>
    %272 = vector.broadcast %271 : vector<8x1xf32> to vector<8x32xf32>
    %273 = arith.mulf %268, %272 : vector<8x32xf32>
    %274 = vector.broadcast %254 : vector<1x32xf32> to vector<8x32xf32>
    %275 = arith.mulf %273, %274 : vector<8x32xf32>
    %276 = vector.broadcast %255 : vector<1x32xf32> to vector<8x32xf32>
    %277 = arith.addf %275, %276 : vector<8x32xf32>
    %278 = arith.truncf %277 : vector<8x32xf32> to vector<8x32xbf16>
    %c0_90 = arith.constant 0 : index
    %c0_91 = arith.constant 0 : index
    %279 = vector.load %arg11[%c0_90, %c0_91] : memref<32x128xbf16, #tpu.memory_space<vmem>>, vector<32x128xbf16>
    %cst_92 = arith.constant dense<0.000000e+00> : vector<8x128xf32>
    %280 = tpu.matmul %278, %279, %cst_92 {dimension_numbers = #tpu.dot_dimension_numbers<[1], [0], [0], [1], [0, 0, 1, 1], [], []>} : vector<8x32xbf16>, vector<32x128xbf16>, vector<8x128xf32> -> vector<8x128xf32>
    %281 = vector.extract_strided_slice %0 {offsets = [2, 0], sizes = [1, 128], strides = [1, 1]} : vector<8x128xf32> to vector<1x128xf32>
    %282 = vector.broadcast %281 : vector<1x128xf32> to vector<8x128xf32>
    %283 = arith.addf %280, %282 : vector<8x128xf32>
    %cst_93 = arith.constant dense<0xFF800000> : vector<8xf32>
    %284 = vector.multi_reduction <maximumf>, %283, %cst_93 [1] : vector<8x128xf32> to vector<8xf32>
    %285 = vector.shape_cast %284 : vector<8xf32> to vector<8x1xf32>
    %286 = vector.broadcast %285 : vector<8x1xf32> to vector<8x128xf32>
    %287 = arith.subf %283, %286 : vector<8x128xf32>
    %288 = math.exp %287 : vector<8x128xf32>
    %cst_94 = arith.constant dense<0.000000e+00> : vector<8xf32>
    %289 = vector.multi_reduction <add>, %288, %cst_94 [1] : vector<8x128xf32> to vector<8xf32>
    %290 = vector.shape_cast %289 : vector<8xf32> to vector<8x1xf32>
    %291 = vector.broadcast %290 : vector<8x1xf32> to vector<8x128xf32>
    %292 = arith.divf %288, %291 : vector<8x128xf32>
    %c0_95 = arith.constant 0 : index
    %c0_96 = arith.constant 0 : index
    %293 = vector.load %arg12[%c0_95, %c0_96] : memref<8x128xf32, #tpu.memory_space<vmem>>, vector<8x128xf32>
    tpu.vector_store %arg12[%c0_95, %c0_96], %292 {strides = array<i32>} : memref<8x128xf32, #tpu.memory_space<vmem>>, vector<8x128xf32>,
    return
  }
  func.func @transform_0(%arg0: i32) -> (i32, i32) {
    %c0_i32 = arith.constant 0 : i32
    %c0_i32_0 = arith.constant 0 : i32
    return %arg0, %c0_i32 : i32, i32
  }
  func.func @transform_1(%arg0: i32) -> (i32, i32, i32) {
    %c0_i32 = arith.constant 0 : i32
    %c0_i32_0 = arith.constant 0 : i32
    %c0_i32_1 = arith.constant 0 : i32
    return %arg0, %c0_i32, %c0_i32_0 : i32, i32, i32
  }
  func.func @transform_2(%arg0: i32) -> (i32, i32) {
    %c0_i32 = arith.constant 0 : i32
    %c0_i32_0 = arith.constant 0 : i32
    %c0_i32_1 = arith.constant 0 : i32
    return %c0_i32, %c0_i32_0 : i32, i32
  }
  func.func @transform_3(%arg0: i32) -> (i32, i32) {
    %c0_i32 = arith.constant 0 : i32
    %c0_i32_0 = arith.constant 0 : i32
    %c0_i32_1 = arith.constant 0 : i32
    return %c0_i32, %c0_i32_0 : i32, i32
  }
  func.func @transform_4(%arg0: i32) -> (i32, i32) {
    %c0_i32 = arith.constant 0 : i32
    %c0_i32_0 = arith.constant 0 : i32
    %c0_i32_1 = arith.constant 0 : i32
    return %c0_i32, %c0_i32_0 : i32, i32
  }
  func.func @transform_5(%arg0: i32) -> (i32, i32, i32) {
    %c0_i32 = arith.constant 0 : i32
    %c0_i32_0 = arith.constant 0 : i32
    %c0_i32_1 = arith.constant 0 : i32
    %c0_i32_2 = arith.constant 0 : i32
    return %c0_i32, %c0_i32_0, %c0_i32_1 : i32, i32, i32
  }
  func.func @transform_6(%arg0: i32) -> (i32, i32, i32) {
    %c0_i32 = arith.constant 0 : i32
    %c0_i32_0 = arith.constant 0 : i32
    %c0_i32_1 = arith.constant 0 : i32
    %c0_i32_2 = arith.constant 0 : i32
    return %c0_i32, %c0_i32_0, %c0_i32_1 : i32, i32, i32
  }
  func.func @transform_7(%arg0: i32) -> (i32, i32, i32) {
    %c0_i32 = arith.constant 0 : i32
    %c0_i32_0 = arith.constant 0 : i32
    %c0_i32_1 = arith.constant 0 : i32
    %c0_i32_2 = arith.constant 0 : i32
    return %c0_i32, %c0_i32_0, %c0_i32_1 : i32, i32, i32
  }
  func.func @transform_8(%arg0: i32) -> (i32, i32, i32) {
    %c0_i32 = arith.constant 0 : i32
    %c0_i32_0 = arith.constant 0 : i32
    %c0_i32_1 = arith.constant 0 : i32
    %c0_i32_2 = arith.constant 0 : i32
    return %c0_i32, %c0_i32_0, %c0_i32_1 : i32, i32, i32
  }
  func.func @transform_9(%arg0: i32) -> (i32, i32, i32) {
    %c0_i32 = arith.constant 0 : i32
    %c0_i32_0 = arith.constant 0 : i32
    %c0_i32_1 = arith.constant 0 : i32
    %c0_i32_2 = arith.constant 0 : i32
    return %c0_i32, %c0_i32_0, %c0_i32_1 : i32, i32, i32
  }
  func.func @transform_10(%arg0: i32) -> (i32, i32) {
    %c0_i32 = arith.constant 0 : i32
    %c0_i32_0 = arith.constant 0 : i32
    %c0_i32_1 = arith.constant 0 : i32
    return %c0_i32, %c0_i32_0 : i32, i32
  }
  func.func @transform_11(%arg0: i32) -> (i32, i32) {
    %c0_i32 = arith.constant 0 : i32
    %c0_i32_0 = arith.constant 0 : i32
    return %arg0, %c0_i32 : i32, i32
  }
}

</mosaic_0001>

<llo_original>
// kernel: tpu_custom_call.1
$region0: #{tpu_custom_call.1}
  #allocation0 [shape = 'u32[]', space=smem, size = 0x4, offset = 0x4, fixed_abs, tag = 'smem constant byte address 0x4 - core index']
  #allocation1 [shape = 'u32[144,128]{1,0:T(1,128)}', space=vmem, size = 0x12000, scoped, tag = 'internal scratch']
  %s0 = inlined_call_operand.vmem [shape: s32[16,1], index: 0, kind: input, shape index: {}]
  %s1 = inlined_call_operand.vmem [shape: f32[2,1,8], index: 1, kind: input, shape index: {}]
  %s2 = inlined_call_operand.vmem [shape: f32[64,32], index: 2, kind: input, shape index: {}]
  %s3 = inlined_call_operand.vmem [shape: f32[8,32], index: 3, kind: input, shape index: {}]
  %s4 = inlined_call_operand.vmem [shape: f32[8,128], index: 4, kind: input, shape index: {}]
  %s5 = inlined_call_operand.vmem [shape: f32[2,8,128], index: 5, kind: input, shape index: {}]
  %s6 = inlined_call_operand.vmem [shape: bf16[2,32,96], index: 6, kind: input, shape index: {}]
  %s7 = inlined_call_operand.vmem [shape: bf16[2,32,32], index: 7, kind: input, shape index: {}]
  %s8 = inlined_call_operand.vmem [shape: bf16[2,32,128], index: 8, kind: input, shape index: {}]
  %s9 = inlined_call_operand.vmem [shape: bf16[2,128,32], index: 9, kind: input, shape index: {}]
  %s10 = inlined_call_operand.vmem [shape: bf16[32,128], index: 10, kind: input, shape index: {}]
  %s11 = inlined_call_operand.hbm [shape: f32[16,128], index: 11, kind: output, shape index: {}]
  %s12 = sld [smem:[#allocation0]]
  $region77: #{tpu_custom_call.1} parent=0
    _
  %s14 = ssub.s32 1, %s12
  %s15 = scalar_select 0, %s14, %s12
  $region1: #{tpu_custom_call.1} parent=0
    #allocation2 [shape = 'u8[8192]{0}', space=vmem, size = 0x2000, scoped, tag = 'output window, operand 0']
    #allocation3 [shape = 's32[2]{0}', space=sflag, size = 0x8, scoped, tag = 'scoped memory for tpu_custom_call.1']
    %16 = vsyncpa [#allocation3], 0
    %s17 = scalar_lea.sflag [#allocation3], 1
    %18 = vsyncpa %s17, 0
    loop: start=0, step=1, limit=4
    $region2: #{tpu_custom_call.1} parent=1 // loop_pre_header
      _
    $region3: #{tpu_custom_call.1} parent=1 // loop_header
      %s20 = sphi 0, %s24
      %p21 = scmp.ge.s32.totalorder %s20, 4
      %s30 = sphi 0, %s32
      %s33 = sphi 0, %s30
      %s34 = sphi 0, %s33
      %s50 = sphi 0, %s34
      %s56 = sphi 0, %s58
      %s59 = sphi 0, %s56
      %s60 = sphi 0, %s59
      %s76 = sphi 0, %s60
      %s80 = sphi 0, %s80
      %s82 = sphi 0, %s80
      %s83 = sphi 0, %s82
      %s97 = sphi 0, %s83
      %s101 = sphi 0, %s101
      %s103 = sphi 0, %s101
      %s104 = sphi 0, %s103
      %s118 = sphi 0, %s104
      %s122 = sphi 0, %s122
      %s124 = sphi 0, %s122
      %s125 = sphi 0, %s124
      %s139 = sphi 0, %s125
      %s143 = sphi 0, %s143
      %s145 = sphi 0, %s143
      %s146 = sphi 0, %s145
      %s160 = sphi 0, %s146
      %s164 = sphi 0, %s164
      %s166 = sphi 0, %s164
      %s167 = sphi 0, %s166
      %s181 = sphi 0, %s167
      %s185 = sphi 0, %s185
      %s187 = sphi 0, %s185
      %s188 = sphi 0, %s187
      %s202 = sphi 0, %s188
      %s206 = sphi 0, %s206
      %s208 = sphi 0, %s206
      %s209 = sphi 0, %s208
      %s223 = sphi 0, %s209
      %s227 = sphi 0, %s227
      %s229 = sphi 0, %s227
      %s230 = sphi 0, %s229
      %s244 = sphi 0, %s230
      %s248 = sphi 0, %s248
      %s250 = sphi 0, %s248
      %s251 = sphi 0, %s250
      %s265 = sphi 0, %s251
      %s271 = sphi 0, %s273
      %s274 = sphi 0, %s271
      %s275 = sphi 0, %s274
      %s291 = sphi 0, %s275
    $region4: #{tpu_custom_call.1} parent=1 // loop_header_branch
      %23 = sbr.rel (%p21) target = $region8
    $region5: #{tpu_custom_call.1} parent=1 // loop_body
      %s25 = ssub.s32 %s20, 1
      %s26 = ssub.s32 %s20, 2
      %s27 = sadd.s32 %s20, 1
      %s28 = ssub.s32 %s20, %s27
      %p29 = scmp.eq.s32.totalorder %s28, 0
      %s31 = sadd.s32 %s30, 1
      %s32 = scalar_select %p29, %s30, %s31
      %p35 = pneg %p29
      %p36 = scmp.eq.s32.totalorder %s20, 1
      %p37 = por %p35, %p36
      %p38 = scmp.ne.s32.totalorder %s30, %s33
      %p39 = scmp.eq.s32.totalorder %s20, 0
      %p40 = por %p38, %p39
      %p41 = scmp.ne.s32.totalorder %s30, %s33
      %p42 = scmp.eq.s32.totalorder %s25, 1
      %p43 = por %p41, %p42
      %p44 = scmp.ne.s32.totalorder %s33, %s34
      %p45 = scmp.eq.s32.totalorder %s25, 0
      %p46 = por %p44, %p45
      %p47 = scmp.ne.s32.totalorder %s33, %s34
      %p48 = scmp.eq.s32.totalorder %s26, 1
      %p49 = por %p47, %p48
      %p51 = scmp.ne.s32.totalorder %s34, %s50
      %p52 = scmp.eq.s32.totalorder %s26, 0
      %p53 = por %p51, %p52
      %s54 = ssub.s32 %s20, %s27
      %p55 = scmp.eq.s32.totalorder %s54, 0
      %s57 = sadd.s32 %s56, 1
      %s58 = scalar_select %p55, %s56, %s57
      %p61 = pneg %p55
      %p62 = scmp.eq.s32.totalorder %s20, 1
      %p63 = por %p61, %p62
      %p64 = scmp.ne.s32.totalorder %s56, %s59
      %p65 = scmp.eq.s32.totalorder %s20, 0
      %p66 = por %p64, %p65
      %p67 = scmp.ne.s32.totalorder %s56, %s59
      %p68 = scmp.eq.s32.totalorder %s25, 1
      %p69 = por %p67, %p68
      %p70 = scmp.ne.s32.totalorder %s59, %s60
      %p71 = scmp.eq.s32.totalorder %s25, 0
      %p72 = por %p70, %p71
      %p73 = scmp.ne.s32.totalorder %s59, %s60
      %p74 = scmp.eq.s32.totalorder %s26, 1
      %p75 = por %p73, %p74
      %p77 = scmp.ne.s32.totalorder %s60, %s76
      %p78 = scmp.eq.s32.totalorder %s26, 0
      %p79 = por %p77, %p78
      %s81 = sadd.s32 %s80, 1
      %p84 = scmp.eq.s32.totalorder %s20, 1
      %p85 = scmp.ne.s32.totalorder %s80, %s82
      %p86 = scmp.eq.s32.totalorder %s20, 0
      %p87 = por %p85, %p86
      %p88 = scmp.ne.s32.totalorder %s80, %s82
      %p89 = scmp.eq.s32.totalorder %s25, 1
      %p90 = por %p88, %p89
      %p91 = scmp.ne.s32.totalorder %s82, %s83
      %p92 = scmp.eq.s32.totalorder %s25, 0
      %p93 = por %p91, %p92
      %p94 = scmp.ne.s32.totalorder %s82, %s83
      %p95 = scmp.eq.s32.totalorder %s26, 1
      %p96 = por %p94, %p95
      %p98 = scmp.ne.s32.totalorder %s83, %s97
      %p99 = scmp.eq.s32.totalorder %s26, 0
      %p100 = por %p98, %p99
      %s102 = sadd.s32 %s101, 1
      %p105 = scmp.eq.s32.totalorder %s20, 1
      %p106 = scmp.ne.s32.totalorder %s101, %s103
      %p107 = scmp.eq.s32.totalorder %s20, 0
      %p108 = por %p106, %p107
      %p109 = scmp.ne.s32.totalorder %s101, %s103
      %p110 = scmp.eq.s32.totalorder %s25, 1
      %p111 = por %p109, %p110
      %p112 = scmp.ne.s32.totalorder %s103, %s104
      %p113 = scmp.eq.s32.totalorder %s25, 0
      %p114 = por %p112, %p113
      %p115 = scmp.ne.s32.totalorder %s103, %s104
      %p116 = scmp.eq.s32.totalorder %s26, 1
      %p117 = por %p115, %p116
      %p119 = scmp.ne.s32.totalorder %s104, %s118
      %p120 = scmp.eq.s32.totalorder %s26, 0
      %p121 = por %p119, %p120
      %s123 = sadd.s32 %s122, 1
      %p126 = scmp.eq.s32.totalorder %s20, 1
      %p127 = scmp.ne.s32.totalorder %s122, %s124
      %p128 = scmp.eq.s32.totalorder %s20, 0
      %p129 = por %p127, %p128
      %p130 = scmp.ne.s32.totalorder %s122, %s124
      %p131 = scmp.eq.s32.totalorder %s25, 1
      %p132 = por %p130, %p131
      %p133 = scmp.ne.s32.totalorder %s124, %s125
      %p134 = scmp.eq.s32.totalorder %s25, 0
      %p135 = por %p133, %p134
      %p136 = scmp.ne.s32.totalorder %s124, %s125
      %p137 = scmp.eq.s32.totalorder %s26, 1
      %p138 = por %p136, %p137
      %p140 = scmp.ne.s32.totalorder %s125, %s139
      %p141 = scmp.eq.s32.totalorder %s26, 0
      %p142 = por %p140, %p141
      %s144 = sadd.s32 %s143, 1
      %p147 = scmp.eq.s32.totalorder %s20, 1
      %p148 = scmp.ne.s32.totalorder %s143, %s145
      %p149 = scmp.eq.s32.totalorder %s20, 0
      %p150 = por %p148, %p149
      %p151 = scmp.ne.s32.totalorder %s143, %s145
      %p152 = scmp.eq.s32.totalorder %s25, 1
      %p153 = por %p151, %p152
      %p154 = scmp.ne.s32.totalorder %s145, %s146
      %p155 = scmp.eq.s32.totalorder %s25, 0
      %p156 = por %p154, %p155
      %p157 = scmp.ne.s32.totalorder %s145, %s146
      %p158 = scmp.eq.s32.totalorder %s26, 1
      %p159 = por %p157, %p158
      %p161 = scmp.ne.s32.totalorder %s146, %s160
      %p162 = scmp.eq.s32.totalorder %s26, 0
      %p163 = por %p161, %p162
      %s165 = sadd.s32 %s164, 1
      %p168 = scmp.eq.s32.totalorder %s20, 1
      %p169 = scmp.ne.s32.totalorder %s164, %s166
      %p170 = scmp.eq.s32.totalorder %s20, 0
      %p171 = por %p169, %p170
      %p172 = scmp.ne.s32.totalorder %s164, %s166
      %p173 = scmp.eq.s32.totalorder %s25, 1
      %p174 = por %p172, %p173
      %p175 = scmp.ne.s32.totalorder %s166, %s167
      %p176 = scmp.eq.s32.totalorder %s25, 0
      %p177 = por %p175, %p176
      %p178 = scmp.ne.s32.totalorder %s166, %s167
      %p179 = scmp.eq.s32.totalorder %s26, 1
      %p180 = por %p178, %p179
      %p182 = scmp.ne.s32.totalorder %s167, %s181
      %p183 = scmp.eq.s32.totalorder %s26, 0
      %p184 = por %p182, %p183
      %s186 = sadd.s32 %s185, 1
      %p189 = scmp.eq.s32.totalorder %s20, 1
      %p190 = scmp.ne.s32.totalorder %s185, %s187
      %p191 = scmp.eq.s32.totalorder %s20, 0
      %p192 = por %p190, %p191
      %p193 = scmp.ne.s32.totalorder %s185, %s187
      %p194 = scmp.eq.s32.totalorder %s25, 1
      %p195 = por %p193, %p194
      %p196 = scmp.ne.s32.totalorder %s187, %s188
      %p197 = scmp.eq.s32.totalorder %s25, 0
      %p198 = por %p196, %p197
      %p199 = scmp.ne.s32.totalorder %s187, %s188
      %p200 = scmp.eq.s32.totalorder %s26, 1
      %p201 = por %p199, %p200
      %p203 = scmp.ne.s32.totalorder %s188, %s202
      %p204 = scmp.eq.s32.totalorder %s26, 0
      %p205 = por %p203, %p204
      %s207 = sadd.s32 %s206, 1
      %p210 = scmp.eq.s32.totalorder %s20, 1
      %p211 = scmp.ne.s32.totalorder %s206, %s208
      %p212 = scmp.eq.s32.totalorder %s20, 0
      %p213 = por %p211, %p212
      %p214 = scmp.ne.s32.totalorder %s206, %s208
      %p215 = scmp.eq.s32.totalorder %s25, 1
      %p216 = por %p214, %p215
      %p217 = scmp.ne.s32.totalorder %s208, %s209
      %p218 = scmp.eq.s32.totalorder %s25, 0
      %p219 = por %p217, %p218
      %p220 = scmp.ne.s32.totalorder %s208, %s209
      %p221 = scmp.eq.s32.totalorder %s26, 1
      %p222 = por %p220, %p221
      %p224 = scmp.ne.s32.totalorder %s209, %s223
      %p225 = scmp.eq.s32.totalorder %s26, 0
      %p226 = por %p224, %p225
      %s228 = sadd.s32 %s227, 1
      %p231 = scmp.eq.s32.totalorder %s20, 1
      %p232 = scmp.ne.s32.totalorder %s227, %s229
      %p233 = scmp.eq.s32.totalorder %s20, 0
      %p234 = por %p232, %p233
      %p235 = scmp.ne.s32.totalorder %s227, %s229
      %p236 = scmp.eq.s32.totalorder %s25, 1
      %p237 = por %p235, %p236
      %p238 = scmp.ne.s32.totalorder %s229, %s230
      %p239 = scmp.eq.s32.totalorder %s25, 0
      %p240 = por %p238, %p239
      %p241 = scmp.ne.s32.totalorder %s229, %s230
      %p242 = scmp.eq.s32.totalorder %s26, 1
      %p243 = por %p241, %p242
      %p245 = scmp.ne.s32.totalorder %s230, %s244
      %p246 = scmp.eq.s32.totalorder %s26, 0
      %p247 = por %p245, %p246
      %s249 = sadd.s32 %s248, 1
      %p252 = scmp.eq.s32.totalorder %s20, 1
      %p253 = scmp.ne.s32.totalorder %s248, %s250
      %p254 = scmp.eq.s32.totalorder %s20, 0
      %p255 = por %p253, %p254
      %p256 = scmp.ne.s32.totalorder %s248, %s250
      %p257 = scmp.eq.s32.totalorder %s25, 1
      %p258 = por %p256, %p257
      %p259 = scmp.ne.s32.totalorder %s250, %s251
      %p260 = scmp.eq.s32.totalorder %s25, 0
      %p261 = por %p259, %p260
      %p262 = scmp.ne.s32.totalorder %s250, %s251
      %p263 = scmp.eq.s32.totalorder %s26, 1
      %p264 = por %p262, %p263
      %p266 = scmp.ne.s32.totalorder %s251, %s265
      %p267 = scmp.eq.s32.totalorder %s26, 0
      %p268 = por %p266, %p267
      %s269 = ssub.s32 %s20, %s27
      %p270 = scmp.eq.s32.totalorder %s269, 0
      %s272 = sadd.s32 %s271, 1
      %s273 = scalar_select %p270, %s271, %s272
      %p276 = pneg %p270
      %p277 = scmp.eq.s32.totalorder %s20, 1
      %p278 = por %p276, %p277
      %p279 = scmp.ne.s32.totalorder %s271, %s274
      %p280 = scmp.eq.s32.totalorder %s20, 0
      %p281 = por %p279, %p280
      %p282 = scmp.ne.s32.totalorder %s271, %s274
      %p283 = scmp.eq.s32.totalorder %s25, 1
      %p284 = por %p282, %p283
      %p285 = scmp.ne.s32.totalorder %s274, %s275
      %p286 = scmp.eq.s32.totalorder %s25, 0
      %p287 = por %p285, %p286
      %p288 = scmp.ne.s32.totalorder %s274, %s275
      %p289 = scmp.eq.s32.totalorder %s26, 1
      %p290 = por %p288, %p289
      %p292 = scmp.ne.s32.totalorder %s275, %s291
      %p293 = scmp.eq.s32.totalorder %s26, 0
      %p294 = por %p292, %p293
      %p295 = scmp.le.s32.totalorder 1, %s20
      %p296 = scmp.lt.s32.totalorder %s20, 3
      %p297 = pnand %p295, %p296
      %p298 = pneg %p297
      // Predicated region
      $region9: #{tpu_custom_call.1} parent=5 // pred_check
        _
      $region10: #{tpu_custom_call.1} parent=5 // pred_check_branch
        %300 = sbr.rel (%p297) target = $region12
      $region11: #{tpu_custom_call.1} parent=5 // pred_region
        %s301 = ssub.s32 %s20, 1
        // Predicated region
        $region13: #{tpu_custom_call.1} parent=11 // pred_check
          %p302 = pneg %p93
        $region14: #{tpu_custom_call.1} parent=11 // pred_check_branch
          %304 = sbr.rel (%p302) target = $region16
        $region15: #{tpu_custom_call.1} parent=11 // pred_region
          _
        $region16: #{tpu_custom_call.1} parent=11 // pred_fallthru
          _
        // Predicated region
        $region17: #{tpu_custom_call.1} parent=11 // pred_check
          %p305 = pneg %p114
        $region18: #{tpu_custom_call.1} parent=11 // pred_check_branch
          %307 = sbr.rel (%p305) target = $region20
        $region19: #{tpu_custom_call.1} parent=11 // pred_region
          _
        $region20: #{tpu_custom_call.1} parent=11 // pred_fallthru
          _
        // Predicated region
        $region21: #{tpu_custom_call.1} parent=11 // pred_check
          %p308 = pneg %p135
        $region22: #{tpu_custom_call.1} parent=11 // pred_check_branch
          %310 = sbr.rel (%p308) target = $region24
        $region23: #{tpu_custom_call.1} parent=11 // pred_region
          _
        $region24: #{tpu_custom_call.1} parent=11 // pred_fallthru
          _
        // Predicated region
        $region25: #{tpu_custom_call.1} parent=11 // pred_check
          %p311 = pneg %p156
        $region26: #{tpu_custom_call.1} parent=11 // pred_check_branch
          %313 = sbr.rel (%p311) target = $region28
        $region27: #{tpu_custom_call.1} parent=11 // pred_region
          _
        $region28: #{tpu_custom_call.1} parent=11 // pred_fallthru
          _
        // Predicated region
        $region29: #{tpu_custom_call.1} parent=11 // pred_check
          %p314 = pneg %p177
        $region30: #{tpu_custom_call.1} parent=11 // pred_check_branch
          %316 = sbr.rel (%p314) target = $region32
        $region31: #{tpu_custom_call.1} parent=11 // pred_region
          _
        $region32: #{tpu_custom_call.1} parent=11 // pred_fallthru
          _
        // Predicated region
        $region33: #{tpu_custom_call.1} parent=11 // pred_check
          %p317 = pneg %p198
        $region34: #{tpu_custom_call.1} parent=11 // pred_check_branch
          %319 = sbr.rel (%p317) target = $region36
        $region35: #{tpu_custom_call.1} parent=11 // pred_region
          _
        $region36: #{tpu_custom_call.1} parent=11 // pred_fallthru
          _
        // Predicated region
        $region37: #{tpu_custom_call.1} parent=11 // pred_check
          %p320 = pneg %p219
        $region38: #{tpu_custom_call.1} parent=11 // pred_check_branch
          %322 = sbr.rel (%p320) target = $region40
        $region39: #{tpu_custom_call.1} parent=11 // pred_region
          _
        $region40: #{tpu_custom_call.1} parent=11 // pred_fallthru
          _
        // Predicated region
        $region41: #{tpu_custom_call.1} parent=11 // pred_check
          %p323 = pneg %p240
        $region42: #{tpu_custom_call.1} parent=11 // pred_check_branch
          %325 = sbr.rel (%p323) target = $region44
        $region43: #{tpu_custom_call.1} parent=11 // pred_region
          _
        $region44: #{tpu_custom_call.1} parent=11 // pred_fallthru
          _
        // Predicated region
        $region45: #{tpu_custom_call.1} parent=11 // pred_check
          %p326 = pneg %p261
        $region46: #{tpu_custom_call.1} parent=11 // pred_check_branch
          %328 = sbr.rel (%p326) target = $region48
        $region47: #{tpu_custom_call.1} parent=11 // pred_region
          _
        $region48: #{tpu_custom_call.1} parent=11 // pred_fallthru
          _
      $region12: #{tpu_custom_call.1} parent=5 // pred_fallthru
        _
      %p329 = scmp.lt.s32.totalorder %s20, 2
      // Predicated region
      $region49: #{tpu_custom_call.1} parent=5 // pred_check
        %p330 = pneg %p329
      $region50: #{tpu_custom_call.1} parent=5 // pred_check_branch
        %332 = sbr.rel (%p330) target = $region52
      $region51: #{tpu_custom_call.1} parent=5 // pred_region
        // Predicated region
        $region53: #{tpu_custom_call.1} parent=51 // pred_check
          %p333 = pneg %p40
        $region54: #{tpu_custom_call.1} parent=51 // pred_check_branch
          %335 = sbr.rel (%p333) target = $region56
        $region55: #{tpu_custom_call.1} parent=51 // pred_region
          %p336 = scmp.lt.s32.totalorder %s20, 1
          %s337 = scalar_select %p336, %s20, 1
          %s338 = smul.addr %s337, 8
          %s339 = scalar_lea.vmem %s0, %s338
        $region56: #{tpu_custom_call.1} parent=51 // pred_fallthru
          _
        // Predicated region
        $region57: #{tpu_custom_call.1} parent=51 // pred_check
          %p340 = pneg %p66
        $region58: #{tpu_custom_call.1} parent=51 // pred_check_branch
          %342 = sbr.rel (%p340) target = $region60
        $region59: #{tpu_custom_call.1} parent=51 // pred_region
          %p343 = scmp.lt.s32.totalorder %s20, 1
          %s344 = scalar_select %p343, %s20, 1
          %s345 = scalar_lea.vmem %s1, %s344
        $region60: #{tpu_custom_call.1} parent=51 // pred_fallthru
          _
      $region52: #{tpu_custom_call.1} parent=5 // pred_fallthru
        _
      %p346 = scmp.le.s32.totalorder 1, %s20
      %p347 = scmp.lt.s32.totalorder %s20, 3
      %p348 = pnand %p346, %p347
      %p349 = pneg %p348
      // Predicated region
      $region61: #{tpu_custom_call.1} parent=5 // pred_check
        _
      $region62: #{tpu_custom_call.1} parent=5 // pred_check_branch
        %351 = sbr.rel (%p348) target = $region64
      $region63: #{tpu_custom_call.1} parent=5 // pred_region
        %s352 = ssub.s32 %s20, 1
        %p353 = scmp.lt.s32.totalorder %s25, 1
        %s354 = scalar_select %p353, %s25, 1
        %s355 = smul.addr %s354, 8
        %s356 = scalar_lea.vmem %s0, %s355
        %p357 = pneg %p46
        %p358 = pneg %p43
        %p359 = scmp.lt.s32.totalorder %s25, 1
        %s360 = scalar_select %p359, %s25, 1
        %s361 = scalar_lea.vmem %s1, %s360
        %p362 = pneg %p72
        %p363 = pneg %p69
        %p364 = pneg %p93
        %p365 = pneg %p90
        %p366 = pneg %p114
        %p367 = pneg %p111
        %p368 = pneg %p135
        %p369 = pneg %p132
        %p370 = pneg %p156
        %p371 = pneg %p153
        %p372 = pneg %p177
        %p373 = pneg %p174
        %p374 = pneg %p198
        %p375 = pneg %p195
        %p376 = pneg %p219
        %p377 = pneg %p216
        %p378 = pneg %p240
        %p379 = pneg %p237
        %p380 = pneg %p261
        %p381 = pneg %p258
        %p382 = pneg %p287
        %p383 = pneg %p284
        %s384 = sand.u32 %s274, 1
        %s385 = scalar_lea.sflag [#allocation3], %s384
        %s386 = sand.u32 %s274, 1
        %s387 = smul.addr %s386, 8
        %s388 = scalar_lea.vmem [#allocation2], %s387
        %p389 = scmp.lt.s32.totalorder %s25, 1
        %s390 = scalar_select %p389, %s25, 1
        %s391 = smul.addr %s390, 8
        %s392 = scalar_lea.vmem %s0, %s391
        %p393 = scmp.lt.s32.totalorder %s25, 1
        %s394 = scalar_select %p393, %s25, 1
        %s395 = scalar_lea.vmem %s1, %s394
        %v397 = vld [vmem:[%s4] sm:$0xff]
        %v398 = vld [vmem:[%s392] sm:$0xff]
        %v399 = vlaneseq
        %v400 = vand.u32 %v399, 127
        %401 = vset.pattern.permute.xlu0 0
        %402 = vperm.xlu0 %401, %v398
        %v403 = vpop.permute.xlu0 %402
        %vm404 = vcmp.eq.s32.totalorder %v400, %v403
        %v405 = vsel %vm404, 1, 0
        %v406 = vcvt.s32.f32 %v405
        %v407 = vld [vmem:[%s2] sm:$0xff]
        %v408 = vld [vmem:[%s2 + $0x8] sm:$0xff]
        %v409 = vld [vmem:[%s2 + $0x10] sm:$0xff]
        %v410 = vld [vmem:[%s2 + $0x18] sm:$0xff]
        %v411 = vld [vmem:[%s2 + $0x20] sm:$0xff]
        %v412 = vld [vmem:[%s2 + $0x28] sm:$0xff]
        %v413 = vld [vmem:[%s2 + $0x30] sm:$0xff]
        %v414 = vld [vmem:[%s2 + $0x38] sm:$0xff]
        %v415 = vld [vmem:[%s3] sm:$0xff]
        %vm416 = vcmask 523264
        %v418 = vsel %vm416, %v406, 0
        %420 = vmatprep.subr.mxu0 0.0
        %421 = vmatpush1.msra.mxu0 0.0
        %422 = vmatprep.subr.mxu0 0.0
        %423 = vmatpush1.msra.mxu0 0.0
        %424 = vmatprep.subr.mxu0 0.0
        %425 = vmatpush1.msra.mxu0 0.0
        %426 = vmatprep.subr.mxu0 0.0
        %427 = vmatpush1.msra.mxu0 0.0
        %428 = vmatprep.subr.mxu0 0.0
        %429 = vmatpush1.msra.mxu0 0.0
        %430 = vmatprep.subr.mxu0 0.0
        %431 = vmatpush1.msra.mxu0 0.0
        %432 = vmatprep.subr.mxu0 0.0
        %433 = vmatpush1.msra.mxu0 0.0
        %434 = vmatprep.subr.mxu0 0.0
        %435 = vmatpush1.msra.mxu0 0.0
        %436 = vmatprep.subr.mxu0 0.0
        %437 = vmatpush1.msra.mxu0 %v414
        %438 = vmatprep.subr.mxu0 0.0
        %439 = vmatpush1.msra.mxu0 %v413
        %440 = vmatprep.subr.mxu0 0.0
        %441 = vmatpush1.msra.mxu0 %v412
        %442 = vmatprep.subr.mxu0 0.0
        %443 = vmatpush1.msra.mxu0 %v411
        %444 = vmatprep.subr.mxu0 0.0
        %445 = vmatpush1.msra.mxu0 %v410
        %446 = vmatprep.subr.mxu0 0.0
        %447 = vmatpush1.msra.mxu0 %v409
        %448 = vmatprep.subr.mxu0 0.0
        %449 = vmatpush1.msra.mxu0 %v408
        %450 = vmatprep.subr.mxu0 0.0
        %451 = vmatpush1.msra.mxu0 %v407
        %452 = vmatprep.subr.mxu0 0.0
        %453 = vmatpush2.msra.mxu0 0.0
        %454 = vmatprep.subr.mxu0 0.0
        %455 = vmatpush2.msra.mxu0 0.0
        %456 = vmatprep.subr.mxu0 0.0
        %457 = vmatpush2.msra.mxu0 0.0
        %458 = vmatprep.subr.mxu0 0.0
        %459 = vmatpush2.msra.mxu0 0.0
        %460 = vmatprep.subr.mxu0 0.0
        %461 = vmatpush2.msra.mxu0 0.0
        %462 = vmatprep.subr.mxu0 0.0
        %463 = vmatpush2.msra.mxu0 0.0
        %464 = vmatprep.subr.mxu0 0.0
        %465 = vmatpush2.msra.mxu0 0.0
        %466 = vmatprep.subr.mxu0 0.0
        %467 = vmatpush2.msra.mxu0 0.0
        %468 = vmatprep.subr.mxu0 0.0
        %469 = vmatpush2.msra.mxu0 0.0
        %470 = vmatprep.subr.mxu0 0.0
        %471 = vmatpush2.msra.mxu0 0.0
        %472 = vmatprep.subr.mxu0 0.0
        %473 = vmatpush2.msra.mxu0 0.0
        %474 = vmatprep.subr.mxu0 0.0
        %475 = vmatpush2.msra.mxu0 0.0
        %476 = vmatprep.subr.mxu0 0.0
        %477 = vmatpush2.msra.mxu0 0.0
        %478 = vmatprep.subr.mxu0 0.0
        %479 = vmatpush2.msra.mxu0 0.0
        %480 = vmatprep.subr.mxu0 0.0
        %481 = vmatpush2.msra.mxu0 0.0
        %482 = vmatprep.subr.mxu0 0.0
        %483 = vmatpush2.msra.mxu0 0.0
        %484 = vmatprep.mubr.f32.mxu0 0.0
        %485 = vmatmul.mubr.f32.gmra.mxu0 %v418
        %v486 = vpop.f32.mrf.mxu0
        %v487 = vadd.f32 %v415, %v486
        %v488 = vpop.f32.mrf.mxu0
        %489 = vdwg.mxu0
        %vm490 = vcmask 261120
        %v491 = vsel %vm490, %v487, 0.0
        %492 = vadd.xlane.f32.xlu0 %v491
        %v493 = vpop.xlane.xlu0 %492
        %v494 = vrcp.pop 32.0
        %v495 = vmul.f32 %v493, %v494
        %v496 = vsub.f32 %v487, %v495
        %v497 = vmul.f32 %v496, %v496
        %v498 = vsel %vm490, %v497, 0.0
        %499 = vadd.xlane.f32.xlu0 %v498
        %v500 = vpop.xlane.xlu0 %499
        %v501 = vmul.f32 %v500, %v494
        %v502 = vadd.f32 %v501, 1e-12
        %v503 = vrsqrt.pop %v502
        %v504 = vmul.f32 %v496, %v503
        %v505 = vlaneseq
        %v506 = vshrl.u32 %v505, 7
        %v507 = vsub.s32 0, %v506
        %v508 = vrot.slane %v397, %v507
        %v509 = vmul.f32 %v504, %v508
        %v510 = vlaneseq
        %v511 = vshrl.u32 %v510, 7
        %v512 = vsub.s32 1, %v511
        %v513 = vrot.slane %v397, %v512
        %v514 = vadd.f32 %v509, %v513
        %v515 = vld [vmem:[%s395] sm:$0x1]
        %v516 = vsub.f32 1.0, %v515
        %v517 = vmul.f32 %v516, -10000.0
        %v518 = vld [vmem:[%s5] sm:$0xff]
        %v519 = vpack.c.bf16 %v514, %v514
        %v520 = vld [vmem:[%s6] sm:$0xf]
        %v521 = vld [vmem:[%s6 + $0x4] sm:$0xf]
        %v522 = vld [vmem:[%s6 + $0x8] sm:$0xf]
        %v523 = vld [vmem:[%s6 + $0xc] sm:$0xf]
        %v524 = vlaneseq
        %v525 = vshrl.u32 %v524, 7
        %v526 = vsub.s32 0, %v525
        %v527 = vrot.slane %v518, %v526
        %v532 = vunpack.c.l.b16 %v520
        %v533 = vunpack.c.l.b16 %v521
        %v534 = vunpack.c.l.b16 %v522
        %v535 = vunpack.c.l.b16 %v523
        %v536 = vpack.c.b16 %v533, %v532
        %v537 = vpack.c.b16 %v535, %v534
        %v541 = vsel %vm490, %v519, 0
        %543 = vmatprep.subr.bf16.mxu0 0
        %544 = vmatpush1.bf16.msra.mxu0 0
        %545 = vmatprep.subr.bf16.mxu0 0
        %546 = vmatpush1.bf16.msra.mxu0 0
        %547 = vmatprep.subr.bf16.mxu0 0
        %548 = vmatpush1.bf16.msra.mxu0 0
        %549 = vmatprep.subr.bf16.mxu0 0
        %550 = vmatpush1.bf16.msra.mxu0 0
        %551 = vmatprep.subr.bf16.mxu0 0
        %552 = vmatpush1.bf16.msra.mxu0 0
        %553 = vmatprep.subr.bf16.mxu0 0
        %554 = vmatpush1.bf16.msra.mxu0 0
        %555 = vmatprep.subr.bf16.mxu0 0
        %556 = vmatpush1.bf16.msra.mxu0 %v537
        %557 = vmatprep.subr.bf16.mxu0 0
        %558 = vmatpush1.bf16.msra.mxu0 %v536
        %559 = vmatprep.subr.bf16.mxu0 0
        %560 = vmatpush2.bf16.msra.mxu0 0
        %561 = vmatprep.subr.bf16.mxu0 0
        %562 = vmatpush2.bf16.msra.mxu0 0
        %563 = vmatprep.subr.bf16.mxu0 0
        %564 = vmatpush2.bf16.msra.mxu0 0
        %565 = vmatprep.subr.bf16.mxu0 0
        %566 = vmatpush2.bf16.msra.mxu0 0
        %567 = vmatprep.subr.bf16.mxu0 0
        %568 = vmatpush2.bf16.msra.mxu0 0
        %569 = vmatprep.subr.bf16.mxu0 0
        %570 = vmatpush2.bf16.msra.mxu0 0
        %571 = vmatprep.subr.bf16.mxu0 0
        %572 = vmatpush2.bf16.msra.mxu0 0
        %573 = vmatprep.subr.bf16.mxu0 0
        %574 = vmatpush2.bf16.msra.mxu0 0
        %575 = vmatprep.mubr.bf16.mxu0 0
        %576 = vmatmul.mubr.bf16.gmra.mxu0 %v541
        %v577 = vpop.f32.mrf.mxu0
        %v578 = vadd.f32 %v527, %v577
        %v579 = vpop.f32.mrf.mxu0
        %v580 = vpop.f32.mrf.mxu0
        %v581 = vpop.f32.mrf.mxu0
        %582 = vdwg.mxu0
        %584 = vrot.lane.b32.xlu0 %v578, 120
        %v585 = vpop.permute.xlu0 %584
        %587 = vrot.lane.b32.xlu0 %v578, 112
        %v588 = vpop.permute.xlu0 %587
        %590 = vrot.lane.b32.xlu0 %v578, 104
        %v591 = vpop.permute.xlu0 %590
        %v593 = vcombine.low %v578, %v588
        %v594 = vcombine.high %v578, %v588
        %v596 = vunpack.c.l.s4 1983009808
        %v597 = vunpack.c.0.s8 %v596
        %v598 = vlaneseq
        %v599 = vshrl.u32 %v598, 7
        %v600 = vsub.s32 %v597, %v599
        %v601 = vrot.slane %v593, %v600
        %v603 = vunpack.c.l.s4 1983009808
        %v604 = vunpack.c.0.s8 %v603
        %v605 = vlaneseq
        %v606 = vshrl.u32 %v605, 7
        %v607 = vsub.s32 %v604, %v606
        %v608 = vrot.slane %v594, %v607
        %v609 = vcombine.low %v585, %v591
        %v610 = vcombine.high %v585, %v591
        %v612 = vunpack.c.l.s4 1983009808
        %v613 = vunpack.c.0.s8 %v612
        %v614 = vlaneseq
        %v615 = vshrl.u32 %v614, 7
        %v616 = vsub.s32 %v613, %v615
        %v617 = vrot.slane %v609, %v616
        %v619 = vunpack.c.l.s4 1983009808
        %v620 = vunpack.c.0.s8 %v619
        %v621 = vlaneseq
        %v622 = vshrl.u32 %v621, 7
        %v623 = vsub.s32 %v620, %v622
        %v624 = vrot.slane %v610, %v623
        %v625 = vcombine.low %v601, %v617
        %v626 = vcombine.high %v601, %v617
        %v628 = vunpack.c.l.s4 1934713408
        %v629 = vunpack.c.0.s8 %v628
        %v630 = vlaneseq
        %v631 = vshrl.u32 %v630, 7
        %v632 = vsub.s32 %v629, %v631
        %v633 = vrot.slane %v625, %v632
        %v635 = vunpack.c.l.s4 1934713408
        %v636 = vunpack.c.0.s8 %v635
        %v637 = vlaneseq
        %v638 = vshrl.u32 %v637, 7
        %v639 = vsub.s32 %v636, %v638
        %v640 = vrot.slane %v626, %v639
        %v641 = vcombine.low %v608, %v624
        %v642 = vcombine.high %v608, %v624
        %v644 = vunpack.c.l.s4 1934713408
        %v645 = vunpack.c.0.s8 %v644
        %v646 = vlaneseq
        %v647 = vshrl.u32 %v646, 7
        %v648 = vsub.s32 %v645, %v647
        %v649 = vrot.slane %v641, %v648
        %v651 = vunpack.c.l.s4 1934713408
        %v652 = vunpack.c.0.s8 %v651
        %v653 = vlaneseq
        %v654 = vshrl.u32 %v653, 7
        %v655 = vsub.s32 %v652, %v654
        %v656 = vrot.slane %v642, %v655
        %v657 = vcombine.high %v633, 0.0
        %v658 = vcombine.high %v640, 0.0
        %v659 = vcombine.high %v649, 0.0
        %v660 = vcombine.high %v656, 0.0
        %v661 = vpack.c.bf16 %v633, %v633
        %v662 = vpack.c.bf16 %v657, %v657
        %v663 = vpack.c.bf16 %v640, %v640
        %v664 = vpack.c.bf16 %v658, %v658
        %v665 = vpack.c.bf16 %v649, %v649
        %v666 = vpack.c.bf16 %v659, %v659
        %v667 = vpack.c.bf16 %v656, %v656
        %v668 = vpack.c.bf16 %v660, %v660
        %669 = vrot.lane.b32.xlu0 %v578, 96
        %v670 = vpop.permute.xlu0 %669
        %671 = vrot.lane.b32.xlu0 %v585, 96
        %v672 = vpop.permute.xlu0 %671
        %673 = vrot.lane.b32.xlu0 %v588, 96
        %v674 = vpop.permute.xlu0 %673
        %675 = vrot.lane.b32.xlu0 %v591, 96
        %v676 = vpop.permute.xlu0 %675
        %v681 = vcombine.low %v670, %v674
        %v682 = vcombine.high %v670, %v674
        %v684 = vunpack.c.l.s4 1983009808
        %v685 = vunpack.c.0.s8 %v684
        %v686 = vlaneseq
        %v687 = vshrl.u32 %v686, 7
        %v688 = vsub.s32 %v685, %v687
        %v689 = vrot.slane %v681, %v688
        %v691 = vunpack.c.l.s4 1983009808
        %v692 = vunpack.c.0.s8 %v691
        %v693 = vlaneseq
        %v694 = vshrl.u32 %v693, 7
        %v695 = vsub.s32 %v692, %v694
        %v696 = vrot.slane %v682, %v695
        %v697 = vcombine.low %v672, %v676
        %v698 = vcombine.high %v672, %v676
        %v700 = vunpack.c.l.s4 1983009808
        %v701 = vunpack.c.0.s8 %v700
        %v702 = vlaneseq
        %v703 = vshrl.u32 %v702, 7
        %v704 = vsub.s32 %v701, %v703
        %v705 = vrot.slane %v697, %v704
        %v707 = vunpack.c.l.s4 1983009808
        %v708 = vunpack.c.0.s8 %v707
        %v709 = vlaneseq
        %v710 = vshrl.u32 %v709, 7
        %v711 = vsub.s32 %v708, %v710
        %v712 = vrot.slane %v698, %v711
        %v713 = vcombine.low %v689, %v705
        %v714 = vcombine.high %v689, %v705
        %v716 = vunpack.c.l.s4 1934713408
        %v717 = vunpack.c.0.s8 %v716
        %v718 = vlaneseq
        %v719 = vshrl.u32 %v718, 7
        %v720 = vsub.s32 %v717, %v719
        %v721 = vrot.slane %v713, %v720
        %v723 = vunpack.c.l.s4 1934713408
        %v724 = vunpack.c.0.s8 %v723
        %v725 = vlaneseq
        %v726 = vshrl.u32 %v725, 7
        %v727 = vsub.s32 %v724, %v726
        %v728 = vrot.slane %v714, %v727
        %v729 = vcombine.low %v696, %v712
        %v730 = vcombine.high %v696, %v712
        %v732 = vunpack.c.l.s4 1934713408
        %v733 = vunpack.c.0.s8 %v732
        %v734 = vlaneseq
        %v735 = vshrl.u32 %v734, 7
        %v736 = vsub.s32 %v733, %v735
        %v737 = vrot.slane %v729, %v736
        %v739 = vunpack.c.l.s4 1934713408
        %v740 = vunpack.c.0.s8 %v739
        %v741 = vlaneseq
        %v742 = vshrl.u32 %v741, 7
        %v743 = vsub.s32 %v740, %v742
        %v744 = vrot.slane %v730, %v743
        %v745 = vcombine.high %v721, 0.0
        %v746 = vcombine.high %v728, 0.0
        %v747 = vcombine.high %v737, 0.0
        %v748 = vcombine.high %v744, 0.0
        %v749 = vpack.c.bf16 %v721, %v721
        %v750 = vpack.c.bf16 %v745, %v745
        %v751 = vpack.c.bf16 %v728, %v728
        %v752 = vpack.c.bf16 %v746, %v746
        %v753 = vpack.c.bf16 %v737, %v737
        %v754 = vpack.c.bf16 %v747, %v747
        %v755 = vpack.c.bf16 %v744, %v744
        %v756 = vpack.c.bf16 %v748, %v748
        %757 = vrot.lane.b32.xlu0 %v578, 64
        %v758 = vpop.permute.xlu0 %757
        %759 = vrot.lane.b32.xlu0 %v585, 64
        %v760 = vpop.permute.xlu0 %759
        %761 = vrot.lane.b32.xlu0 %v588, 64
        %v762 = vpop.permute.xlu0 %761
        %763 = vrot.lane.b32.xlu0 %v591, 64
        %v764 = vpop.permute.xlu0 %763
        %v769 = vcombine.low %v758, %v762
        %v770 = vcombine.high %v758, %v762
        %v772 = vunpack.c.l.s4 1983009808
        %v773 = vunpack.c.0.s8 %v772
        %v774 = vlaneseq
        %v775 = vshrl.u32 %v774, 7
        %v776 = vsub.s32 %v773, %v775
        %v777 = vrot.slane %v769, %v776
        %v779 = vunpack.c.l.s4 1983009808
        %v780 = vunpack.c.0.s8 %v779
        %v781 = vlaneseq
        %v782 = vshrl.u32 %v781, 7
        %v783 = vsub.s32 %v780, %v782
        %v784 = vrot.slane %v770, %v783
        %v785 = vcombine.low %v760, %v764
        %v786 = vcombine.high %v760, %v764
        %v788 = vunpack.c.l.s4 1983009808
        %v789 = vunpack.c.0.s8 %v788
        %v790 = vlaneseq
        %v791 = vshrl.u32 %v790, 7
        %v792 = vsub.s32 %v789, %v791
        %v793 = vrot.slane %v785, %v792
        %v795 = vunpack.c.l.s4 1983009808
        %v796 = vunpack.c.0.s8 %v795
        %v797 = vlaneseq
        %v798 = vshrl.u32 %v797, 7
        %v799 = vsub.s32 %v796, %v798
        %v800 = vrot.slane %v786, %v799
        %v801 = vcombine.low %v777, %v793
        %v802 = vcombine.high %v777, %v793
        %v804 = vunpack.c.l.s4 1934713408
        %v805 = vunpack.c.0.s8 %v804
        %v806 = vlaneseq
        %v807 = vshrl.u32 %v806, 7
        %v808 = vsub.s32 %v805, %v807
        %v809 = vrot.slane %v801, %v808
        %v811 = vunpack.c.l.s4 1934713408
        %v812 = vunpack.c.0.s8 %v811
        %v813 = vlaneseq
        %v814 = vshrl.u32 %v813, 7
        %v815 = vsub.s32 %v812, %v814
        %v816 = vrot.slane %v802, %v815
        %v817 = vcombine.low %v784, %v800
        %v818 = vcombine.high %v784, %v800
        %v820 = vunpack.c.l.s4 1934713408
        %v821 = vunpack.c.0.s8 %v820
        %v822 = vlaneseq
        %v823 = vshrl.u32 %v822, 7
        %v824 = vsub.s32 %v821, %v823
        %v825 = vrot.slane %v817, %v824
        %v827 = vunpack.c.l.s4 1934713408
        %v828 = vunpack.c.0.s8 %v827
        %v829 = vlaneseq
        %v830 = vshrl.u32 %v829, 7
        %v831 = vsub.s32 %v828, %v830
        %v832 = vrot.slane %v818, %v831
        %v833 = vcombine.high %v809, 0.0
        %v834 = vcombine.high %v816, 0.0
        %v835 = vcombine.high %v825, 0.0
        %v836 = vcombine.high %v832, 0.0
        %v837 = vpack.c.bf16 %v809, %v809
        %v838 = vpack.c.bf16 %v833, %v833
        %v839 = vpack.c.bf16 %v816, %v816
        %v840 = vpack.c.bf16 %v834, %v834
        %v841 = vpack.c.bf16 %v825, %v825
        %v842 = vpack.c.bf16 %v835, %v835
        %v843 = vpack.c.bf16 %v832, %v832
        %v844 = vpack.c.bf16 %v836, %v836
        %v846 = vlaneseq
        %v847 = vshrl.u32 %v846, 7
        %v848 = vsub.s32 0, %v847
        %v849 = vrot.slane %v517, %v848
        %v851 = vcombine.low %v661, %v665
        %v853 = vunpack.c.l.s4 1983009808
        %v854 = vunpack.c.0.s8 %v853
        %v855 = vlaneseq
        %v856 = vshrl.u32 %v855, 7
        %v857 = vsub.s32 %v854, %v856
        %v858 = vrot.slane %v851, %v857
        %v859 = vcombine.low %v663, %v667
        %v861 = vunpack.c.l.s4 1983009808
        %v862 = vunpack.c.0.s8 %v861
        %v863 = vlaneseq
        %v864 = vshrl.u32 %v863, 7
        %v865 = vsub.s32 %v862, %v864
        %v866 = vrot.slane %v859, %v865
        %v867 = vcombine.low %v858, %v866
        %v869 = vunpack.c.l.s4 1934713408
        %v870 = vunpack.c.0.s8 %v869
        %v871 = vlaneseq
        %v872 = vshrl.u32 %v871, 7
        %v873 = vsub.s32 %v870, %v872
        %v874 = vrot.slane %v867, %v873
        %v875 = vcombine.high %v874, 0
        %v876 = vcombine.low %v662, %v666
        %v878 = vunpack.c.l.s4 1983009808
        %v879 = vunpack.c.0.s8 %v878
        %v880 = vlaneseq
        %v881 = vshrl.u32 %v880, 7
        %v882 = vsub.s32 %v879, %v881
        %v883 = vrot.slane %v876, %v882
        %v884 = vcombine.low %v664, %v668
        %v886 = vunpack.c.l.s4 1983009808
        %v887 = vunpack.c.0.s8 %v886
        %v888 = vlaneseq
        %v889 = vshrl.u32 %v888, 7
        %v890 = vsub.s32 %v887, %v889
        %v891 = vrot.slane %v884, %v890
        %v892 = vcombine.low %v883, %v891
        %v894 = vunpack.c.l.s4 1934713408
        %v895 = vunpack.c.0.s8 %v894
        %v896 = vlaneseq
        %v897 = vshrl.u32 %v896, 7
        %v898 = vsub.s32 %v895, %v897
        %v899 = vrot.slane %v892, %v898
        %v900 = vcombine.high %v899, 0
        %v903 = vpack.i.b16 %v899, %v874
        %v904 = vshrl.u32 %v874, 16
        %v905 = vshrl.u32 %v899, 16
        %v906 = vpack.i.b16 %v905, %v904
        %v909 = vpack.i.b16 %v900, %v875
        %v910 = vshrl.u32 %v875, 16
        %v911 = vshrl.u32 %v900, 16
        %v912 = vpack.i.b16 %v911, %v910
        %913 = vxpose.xlu0.c.b16.start [1/8] %v749, 128
        %914 = vxpose.xlu0.c.b16.cont [2/8] 0, 128
        %915 = vxpose.xlu0.c.b16.cont [3/8] 0, 128
        %916 = vxpose.xlu0.c.b16.cont [4/8] 0, 128
        %917 = vxpose.xlu0.c.b16.cont [5/8] 0, 128
        %918 = vxpose.xlu0.c.b16.cont [6/8] 0, 128
        %919 = vxpose.xlu0.c.b16.cont [7/8] 0, 128
        %920 = vxpose.xlu0.c.b16.end [8/8] 0, 128
        %v921 = vpop.trf.xlu0
        %v922 = vpop.trf.xlu0
        %v923 = vpop.trf.xlu0
        %v924 = vpop.trf.xlu0
        %v925 = vpop.trf.xlu0
        %v926 = vpop.trf.xlu0
        %v927 = vpop.trf.xlu0
        %v928 = vpop.trf.xlu0
        %929 = vxpose.xlu0.c.b16.start [1/8] %v750, 128
        %930 = vxpose.xlu0.c.b16.cont [2/8] 0, 128
        %931 = vxpose.xlu0.c.b16.cont [3/8] 0, 128
        %932 = vxpose.xlu0.c.b16.cont [4/8] 0, 128
        %933 = vxpose.xlu0.c.b16.cont [5/8] 0, 128
        %934 = vxpose.xlu0.c.b16.cont [6/8] 0, 128
        %935 = vxpose.xlu0.c.b16.cont [7/8] 0, 128
        %936 = vxpose.xlu0.c.b16.end [8/8] 0, 128
        %v937 = vpop.trf.xlu0
        %v938 = vpop.trf.xlu0
        %v939 = vpop.trf.xlu0
        %v940 = vpop.trf.xlu0
        %v941 = vpop.trf.xlu0
        %v942 = vpop.trf.xlu0
        %v943 = vpop.trf.xlu0
        %v944 = vpop.trf.xlu0
        %945 = vxpose.xlu0.c.b16.start [1/8] %v751, 128
        %946 = vxpose.xlu0.c.b16.cont [2/8] 0, 128
        %947 = vxpose.xlu0.c.b16.cont [3/8] 0, 128
        %948 = vxpose.xlu0.c.b16.cont [4/8] 0, 128
        %949 = vxpose.xlu0.c.b16.cont [5/8] 0, 128
        %950 = vxpose.xlu0.c.b16.cont [6/8] 0, 128
        %951 = vxpose.xlu0.c.b16.cont [7/8] 0, 128
        %952 = vxpose.xlu0.c.b16.end [8/8] 0, 128
        %v953 = vpop.trf.xlu0
        %v954 = vpop.trf.xlu0
        %v955 = vpop.trf.xlu0
        %v956 = vpop.trf.xlu0
        %v957 = vpop.trf.xlu0
        %v958 = vpop.trf.xlu0
        %v959 = vpop.trf.xlu0
        %v960 = vpop.trf.xlu0
        %961 = vxpose.xlu0.c.b16.start [1/8] %v752, 128
        %962 = vxpose.xlu0.c.b16.cont [2/8] 0, 128
        %963 = vxpose.xlu0.c.b16.cont [3/8] 0, 128
        %964 = vxpose.xlu0.c.b16.cont [4/8] 0, 128
        %965 = vxpose.xlu0.c.b16.cont [5/8] 0, 128
        %966 = vxpose.xlu0.c.b16.cont [6/8] 0, 128
        %967 = vxpose.xlu0.c.b16.cont [7/8] 0, 128
        %968 = vxpose.xlu0.c.b16.end [8/8] 0, 128
        %v969 = vpop.trf.xlu0
        %v970 = vpop.trf.xlu0
        %v971 = vpop.trf.xlu0
        %v972 = vpop.trf.xlu0
        %v973 = vpop.trf.xlu0
        %v974 = vpop.trf.xlu0
        %v975 = vpop.trf.xlu0
        %v976 = vpop.trf.xlu0
        %977 = vxpose.xlu0.c.b16.start [1/8] %v753, 128
        %978 = vxpose.xlu0.c.b16.cont [2/8] 0, 128
        %979 = vxpose.xlu0.c.b16.cont [3/8] 0, 128
        %980 = vxpose.xlu0.c.b16.cont [4/8] 0, 128
        %981 = vxpose.xlu0.c.b16.cont [5/8] 0, 128
        %982 = vxpose.xlu0.c.b16.cont [6/8] 0, 128
        %983 = vxpose.xlu0.c.b16.cont [7/8] 0, 128
        %984 = vxpose.xlu0.c.b16.end [8/8] 0, 128
        %v985 = vpop.trf.xlu0
        %v986 = vpop.trf.xlu0
        %v987 = vpop.trf.xlu0
        %v988 = vpop.trf.xlu0
        %v989 = vpop.trf.xlu0
        %v990 = vpop.trf.xlu0
        %v991 = vpop.trf.xlu0
        %v992 = vpop.trf.xlu0
        %993 = vxpose.xlu0.c.b16.start [1/8] %v754, 128
        %994 = vxpose.xlu0.c.b16.cont [2/8] 0, 128
        %995 = vxpose.xlu0.c.b16.cont [3/8] 0, 128
        %996 = vxpose.xlu0.c.b16.cont [4/8] 0, 128
        %997 = vxpose.xlu0.c.b16.cont [5/8] 0, 128
        %998 = vxpose.xlu0.c.b16.cont [6/8] 0, 128
        %999 = vxpose.xlu0.c.b16.cont [7/8] 0, 128
        %1000 = vxpose.xlu0.c.b16.end [8/8] 0, 128
        %v1001 = vpop.trf.xlu0
        %v1002 = vpop.trf.xlu0
        %v1003 = vpop.trf.xlu0
        %v1004 = vpop.trf.xlu0
        %v1005 = vpop.trf.xlu0
        %v1006 = vpop.trf.xlu0
        %v1007 = vpop.trf.xlu0
        %v1008 = vpop.trf.xlu0
        %1009 = vxpose.xlu0.c.b16.start [1/8] %v755, 128
        %1010 = vxpose.xlu0.c.b16.cont [2/8] 0, 128
        %1011 = vxpose.xlu0.c.b16.cont [3/8] 0, 128
        %1012 = vxpose.xlu0.c.b16.cont [4/8] 0, 128
        %1013 = vxpose.xlu0.c.b16.cont [5/8] 0, 128
        %1014 = vxpose.xlu0.c.b16.cont [6/8] 0, 128
        %1015 = vxpose.xlu0.c.b16.cont [7/8] 0, 128
        %1016 = vxpose.xlu0.c.b16.end [8/8] 0, 128
        %v1017 = vpop.trf.xlu0
        %v1018 = vpop.trf.xlu0
        %v1019 = vpop.trf.xlu0
        %v1020 = vpop.trf.xlu0
        %v1021 = vpop.trf.xlu0
        %v1022 = vpop.trf.xlu0
        %v1023 = vpop.trf.xlu0
        %v1024 = vpop.trf.xlu0
        %1025 = vxpose.xlu0.c.b16.start [1/8] %v756, 128
        %1026 = vxpose.xlu0.c.b16.cont [2/8] 0, 128
        %1027 = vxpose.xlu0.c.b16.cont [3/8] 0, 128
        %1028 = vxpose.xlu0.c.b16.cont [4/8] 0, 128
        %1029 = vxpose.xlu0.c.b16.cont [5/8] 0, 128
        %1030 = vxpose.xlu0.c.b16.cont [6/8] 0, 128
        %1031 = vxpose.xlu0.c.b16.cont [7/8] 0, 128
        %1032 = vxpose.xlu0.c.b16.end [8/8] 0, 128
        %v1033 = vpop.trf.xlu0
        %v1034 = vpop.trf.xlu0
        %v1035 = vpop.trf.xlu0
        %v1036 = vpop.trf.xlu0
        %v1037 = vpop.trf.xlu0
        %v1038 = vpop.trf.xlu0
        %v1039 = vpop.trf.xlu0
        %v1040 = vpop.trf.xlu0
        %v1041 = vcombine.low %v921, %v985
        %v1043 = vunpack.c.l.s4 1983009808
        %v1044 = vunpack.c.0.s8 %v1043
        %v1045 = vlaneseq
        %v1046 = vshrl.u32 %v1045, 7
        %v1047 = vsub.s32 %v1044, %v1046
        %v1048 = vrot.slane %v1041, %v1047
        %v1049 = vcombine.low %v953, %v1017
        %v1051 = vunpack.c.l.s4 1983009808
        %v1052 = vunpack.c.0.s8 %v1051
        %v1053 = vlaneseq
        %v1054 = vshrl.u32 %v1053, 7
        %v1055 = vsub.s32 %v1052, %v1054
        %v1056 = vrot.slane %v1049, %v1055
        %v1057 = vcombine.low %v1048, %v1056
        %v1058 = vcombine.high %v1048, %v1056
        %v1060 = vunpack.c.l.s4 1934713408
        %v1061 = vunpack.c.0.s8 %v1060
        %v1062 = vlaneseq
        %v1063 = vshrl.u32 %v1062, 7
        %v1064 = vsub.s32 %v1061, %v1063
        %v1065 = vrot.slane %v1057, %v1064
        %v1067 = vunpack.c.l.s4 1934713408
        %v1068 = vunpack.c.0.s8 %v1067
        %v1069 = vlaneseq
        %v1070 = vshrl.u32 %v1069, 7
        %v1071 = vsub.s32 %v1068, %v1070
        %v1072 = vrot.slane %v1058, %v1071
        %v1073 = vcombine.high %v1065, 0
        %v1074 = vcombine.high %v1072, 0
        %v1075 = vcombine.low %v937, %v1001
        %v1077 = vunpack.c.l.s4 1983009808
        %v1078 = vunpack.c.0.s8 %v1077
        %v1079 = vlaneseq
        %v1080 = vshrl.u32 %v1079, 7
        %v1081 = vsub.s32 %v1078, %v1080
        %v1082 = vrot.slane %v1075, %v1081
        %v1083 = vcombine.low %v969, %v1033
        %v1085 = vunpack.c.l.s4 1983009808
        %v1086 = vunpack.c.0.s8 %v1085
        %v1087 = vlaneseq
        %v1088 = vshrl.u32 %v1087, 7
        %v1089 = vsub.s32 %v1086, %v1088
        %v1090 = vrot.slane %v1083, %v1089
        %v1091 = vcombine.low %v1082, %v1090
        %v1092 = vcombine.high %v1082, %v1090
        %v1094 = vunpack.c.l.s4 1934713408
        %v1095 = vunpack.c.0.s8 %v1094
        %v1096 = vlaneseq
        %v1097 = vshrl.u32 %v1096, 7
        %v1098 = vsub.s32 %v1095, %v1097
        %v1099 = vrot.slane %v1091, %v1098
        %v1101 = vunpack.c.l.s4 1934713408
        %v1102 = vunpack.c.0.s8 %v1101
        %v1103 = vlaneseq
        %v1104 = vshrl.u32 %v1103, 7
        %v1105 = vsub.s32 %v1102, %v1104
        %v1106 = vrot.slane %v1092, %v1105
        %v1107 = vcombine.high %v1099, 0
        %v1108 = vcombine.high %v1106, 0
        %v1111 = vpack.i.b16 %v1099, %v1065
        %v1113 = vshrl.u32 %v1065, 16
        %v1114 = vshrl.u32 %v1099, 16
        %v1115 = vpack.i.b16 %v1114, %v1113
        %v1119 = vpack.i.b16 %v1107, %v1073
        %v1121 = vshrl.u32 %v1073, 16
        %v1122 = vshrl.u32 %v1107, 16
        %v1123 = vpack.i.b16 %v1122, %v1121
        %v1127 = vpack.i.b16 %v1106, %v1072
        %v1129 = vshrl.u32 %v1072, 16
        %v1130 = vshrl.u32 %v1106, 16
        %v1131 = vpack.i.b16 %v1130, %v1129
        %v1135 = vpack.i.b16 %v1108, %v1074
        %v1137 = vshrl.u32 %v1074, 16
        %v1138 = vshrl.u32 %v1108, 16
        %v1139 = vpack.i.b16 %v1138, %v1137
        %1141 = vxpose.xlu0.c.b16.start [1/8] %v1111, 128
        %1142 = vxpose.xlu0.c.b16.cont [2/8] 0, 128
        %1143 = vxpose.xlu0.c.b16.cont [3/8] 0, 128
        %1144 = vxpose.xlu0.c.b16.cont [4/8] 0, 128
        %1145 = vxpose.xlu0.c.b16.cont [5/8] 0, 128
        %1146 = vxpose.xlu0.c.b16.cont [6/8] 0, 128
        %1147 = vxpose.xlu0.c.b16.cont [7/8] 0, 128
        %1148 = vxpose.xlu0.c.b16.end [8/8] 0, 128
        %v1149 = vpop.trf.xlu0
        %v1150 = vpop.trf.xlu0
        %v1151 = vpop.trf.xlu0
        %v1152 = vpop.trf.xlu0
        %v1153 = vpop.trf.xlu0
        %v1154 = vpop.trf.xlu0
        %v1155 = vpop.trf.xlu0
        %v1156 = vpop.trf.xlu0
        %1157 = vxpose.xlu0.c.b16.start [1/8] %v1115, 128
        %1158 = vxpose.xlu0.c.b16.cont [2/8] 0, 128
        %1159 = vxpose.xlu0.c.b16.cont [3/8] 0, 128
        %1160 = vxpose.xlu0.c.b16.cont [4/8] 0, 128
        %1161 = vxpose.xlu0.c.b16.cont [5/8] 0, 128
        %1162 = vxpose.xlu0.c.b16.cont [6/8] 0, 128
        %1163 = vxpose.xlu0.c.b16.cont [7/8] 0, 128
        %1164 = vxpose.xlu0.c.b16.end [8/8] 0, 128
        %v1165 = vpop.trf.xlu0
        %v1166 = vpop.trf.xlu0
        %v1167 = vpop.trf.xlu0
        %v1168 = vpop.trf.xlu0
        %v1169 = vpop.trf.xlu0
        %v1170 = vpop.trf.xlu0
        %v1171 = vpop.trf.xlu0
        %v1172 = vpop.trf.xlu0
        %1173 = vxpose.xlu0.c.b16.start [1/8] %v1119, 128
        %1174 = vxpose.xlu0.c.b16.cont [2/8] 0, 128
        %1175 = vxpose.xlu0.c.b16.cont [3/8] 0, 128
        %1176 = vxpose.xlu0.c.b16.cont [4/8] 0, 128
        %1177 = vxpose.xlu0.c.b16.cont [5/8] 0, 128
        %1178 = vxpose.xlu0.c.b16.cont [6/8] 0, 128
        %1179 = vxpose.xlu0.c.b16.cont [7/8] 0, 128
        %1180 = vxpose.xlu0.c.b16.end [8/8] 0, 128
        %v1181 = vpop.trf.xlu0
        %v1182 = vpop.trf.xlu0
        %v1183 = vpop.trf.xlu0
        %v1184 = vpop.trf.xlu0
        %v1185 = vpop.trf.xlu0
        %v1186 = vpop.trf.xlu0
        %v1187 = vpop.trf.xlu0
        %v1188 = vpop.trf.xlu0
        %1189 = vxpose.xlu0.c.b16.start [1/8] %v1123, 128
        %1190 = vxpose.xlu0.c.b16.cont [2/8] 0, 128
        %1191 = vxpose.xlu0.c.b16.cont [3/8] 0, 128
        %1192 = vxpose.xlu0.c.b16.cont [4/8] 0, 128
        %1193 = vxpose.xlu0.c.b16.cont [5/8] 0, 128
        %1194 = vxpose.xlu0.c.b16.cont [6/8] 0, 128
        %1195 = vxpose.xlu0.c.b16.cont [7/8] 0, 128
        %1196 = vxpose.xlu0.c.b16.end [8/8] 0, 128
        %v1197 = vpop.trf.xlu0
        %v1198 = vpop.trf.xlu0
        %v1199 = vpop.trf.xlu0
        %v1200 = vpop.trf.xlu0
        %v1201 = vpop.trf.xlu0
        %v1202 = vpop.trf.xlu0
        %v1203 = vpop.trf.xlu0
        %v1204 = vpop.trf.xlu0
        %1205 = vxpose.xlu0.c.b16.start [1/8] %v1127, 128
        %1206 = vxpose.xlu0.c.b16.cont [2/8] 0, 128
        %1207 = vxpose.xlu0.c.b16.cont [3/8] 0, 128
        %1208 = vxpose.xlu0.c.b16.cont [4/8] 0, 128
        %1209 = vxpose.xlu0.c.b16.cont [5/8] 0, 128
        %1210 = vxpose.xlu0.c.b16.cont [6/8] 0, 128
        %1211 = vxpose.xlu0.c.b16.cont [7/8] 0, 128
        %1212 = vxpose.xlu0.c.b16.end [8/8] 0, 128
        %v1213 = vpop.trf.xlu0
        %v1214 = vpop.trf.xlu0
        %v1215 = vpop.trf.xlu0
        %v1216 = vpop.trf.xlu0
        %v1217 = vpop.trf.xlu0
        %v1218 = vpop.trf.xlu0
        %v1219 = vpop.trf.xlu0
        %v1220 = vpop.trf.xlu0
        %1221 = vxpose.xlu0.c.b16.start [1/8] %v1131, 128
        %1222 = vxpose.xlu0.c.b16.cont [2/8] 0, 128
        %1223 = vxpose.xlu0.c.b16.cont [3/8] 0, 128
        %1224 = vxpose.xlu0.c.b16.cont [4/8] 0, 128
        %1225 = vxpose.xlu0.c.b16.cont [5/8] 0, 128
        %1226 = vxpose.xlu0.c.b16.cont [6/8] 0, 128
        %1227 = vxpose.xlu0.c.b16.cont [7/8] 0, 128
        %1228 = vxpose.xlu0.c.b16.end [8/8] 0, 128
        %v1229 = vpop.trf.xlu0
        %v1230 = vpop.trf.xlu0
        %v1231 = vpop.trf.xlu0
        %v1232 = vpop.trf.xlu0
        %v1233 = vpop.trf.xlu0
        %v1234 = vpop.trf.xlu0
        %v1235 = vpop.trf.xlu0
        %v1236 = vpop.trf.xlu0
        %1237 = vxpose.xlu0.c.b16.start [1/8] %v1135, 128
        %1238 = vxpose.xlu0.c.b16.cont [2/8] 0, 128
        %1239 = vxpose.xlu0.c.b16.cont [3/8] 0, 128
        %1240 = vxpose.xlu0.c.b16.cont [4/8] 0, 128
        %1241 = vxpose.xlu0.c.b16.cont [5/8] 0, 128
        %1242 = vxpose.xlu0.c.b16.cont [6/8] 0, 128
        %1243 = vxpose.xlu0.c.b16.cont [7/8] 0, 128
        %1244 = vxpose.xlu0.c.b16.end [8/8] 0, 128
        %v1245 = vpop.trf.xlu0
        %v1246 = vpop.trf.xlu0
        %v1247 = vpop.trf.xlu0
        %v1248 = vpop.trf.xlu0
        %v1249 = vpop.trf.xlu0
        %v1250 = vpop.trf.xlu0
        %v1251 = vpop.trf.xlu0
        %v1252 = vpop.trf.xlu0
        %1253 = vxpose.xlu0.c.b16.start [1/8] %v1139, 128
        %1254 = vxpose.xlu0.c.b16.cont [2/8] 0, 128
        %1255 = vxpose.xlu0.c.b16.cont [3/8] 0, 128
        %1256 = vxpose.xlu0.c.b16.cont [4/8] 0, 128
        %1257 = vxpose.xlu0.c.b16.cont [5/8] 0, 128
        %1258 = vxpose.xlu0.c.b16.cont [6/8] 0, 128
        %1259 = vxpose.xlu0.c.b16.cont [7/8] 0, 128
        %1260 = vxpose.xlu0.c.b16.end [8/8] 0, 128
        %v1261 = vpop.trf.xlu0
        %v1262 = vpop.trf.xlu0
        %v1263 = vpop.trf.xlu0
        %v1264 = vpop.trf.xlu0
        %v1265 = vpop.trf.xlu0
        %v1266 = vpop.trf.xlu0
        %v1267 = vpop.trf.xlu0
        %v1268 = vpop.trf.xlu0
        %v1269 = vcombine.low %v1149, %v1213
        %v1271 = vunpack.c.l.s4 1983009808
        %v1272 = vunpack.c.0.s8 %v1271
        %v1273 = vlaneseq
        %v1274 = vshrl.u32 %v1273, 7
        %v1275 = vsub.s32 %v1272, %v1274
        %v1276 = vrot.slane %v1269, %v1275
        %v1277 = vcombine.low %v1181, %v1245
        %v1279 = vunpack.c.l.s4 1983009808
        %v1280 = vunpack.c.0.s8 %v1279
        %v1281 = vlaneseq
        %v1282 = vshrl.u32 %v1281, 7
        %v1283 = vsub.s32 %v1280, %v1282
        %v1284 = vrot.slane %v1277, %v1283
        %v1285 = vcombine.low %v1276, %v1284
        %v1287 = vunpack.c.l.s4 1934713408
        %v1288 = vunpack.c.0.s8 %v1287
        %v1289 = vlaneseq
        %v1290 = vshrl.u32 %v1289, 7
        %v1291 = vsub.s32 %v1288, %v1290
        %v1292 = vrot.slane %v1285, %v1291
        %v1293 = vcombine.high %v1292, 0
        %v1294 = vcombine.low %v1165, %v1229
        %v1296 = vunpack.c.l.s4 1983009808
        %v1297 = vunpack.c.0.s8 %v1296
        %v1298 = vlaneseq
        %v1299 = vshrl.u32 %v1298, 7
        %v1300 = vsub.s32 %v1297, %v1299
        %v1301 = vrot.slane %v1294, %v1300
        %v1302 = vcombine.low %v1197, %v1261
        %v1304 = vunpack.c.l.s4 1983009808
        %v1305 = vunpack.c.0.s8 %v1304
        %v1306 = vlaneseq
        %v1307 = vshrl.u32 %v1306, 7
        %v1308 = vsub.s32 %v1305, %v1307
        %v1309 = vrot.slane %v1302, %v1308
        %v1310 = vcombine.low %v1301, %v1309
        %v1312 = vunpack.c.l.s4 1934713408
        %v1313 = vunpack.c.0.s8 %v1312
        %v1314 = vlaneseq
        %v1315 = vshrl.u32 %v1314, 7
        %v1316 = vsub.s32 %v1313, %v1315
        %v1317 = vrot.slane %v1310, %v1316
        %v1318 = vcombine.high %v1317, 0
        %v1321 = vpack.i.b16 %v1317, %v1292
        %v1322 = vshrl.u32 %v1292, 16
        %v1323 = vshrl.u32 %v1317, 16
        %v1324 = vpack.i.b16 %v1323, %v1322
        %v1327 = vpack.i.b16 %v1318, %v1293
        %v1328 = vshrl.u32 %v1293, 16
        %v1329 = vshrl.u32 %v1318, 16
        %v1330 = vpack.i.b16 %v1329, %v1328
        %vm1331 = vcmask 64512
        %v1333 = vsel %vm1331, %v903, 0
        %vm1335 = vcmask 1043456
        %v1337 = vsel %vm1335, %v1321, 0
        %1339 = vmatprep.subr.bf16.mxu0 0
        %1340 = vmatpush1.bf16.msra.mxu0 0
        %1341 = vmatprep.subr.bf16.mxu0 0
        %1342 = vmatpush1.bf16.msra.mxu0 0
        %1343 = vmatprep.subr.bf16.mxu0 0
        %1344 = vmatpush1.bf16.msra.mxu0 0
        %1345 = vmatprep.subr.bf16.mxu0 0
        %1346 = vmatpush1.bf16.msra.mxu0 0
        %1347 = vmatprep.subr.bf16.mxu0 0
        %1348 = vmatpush1.bf16.msra.mxu0 0
        %1349 = vmatprep.subr.bf16.mxu0 0
        %1350 = vmatpush1.bf16.msra.mxu0 0
        %1351 = vmatprep.subr.bf16.mxu0 0
        %1352 = vmatpush1.bf16.msra.mxu0 0
        %1353 = vmatprep.subr.bf16.mxu0 0
        %1354 = vmatpush1.bf16.msra.mxu0 %v1337
        %1355 = vmatprep.subr.bf16.mxu0 0
        %1356 = vmatpush2.bf16.msra.mxu0 0
        %1357 = vmatprep.subr.bf16.mxu0 0
        %1358 = vmatpush2.bf16.msra.mxu0 0
        %1359 = vmatprep.subr.bf16.mxu0 0
        %1360 = vmatpush2.bf16.msra.mxu0 0
        %1361 = vmatprep.subr.bf16.mxu0 0
        %1362 = vmatpush2.bf16.msra.mxu0 0
        %1363 = vmatprep.subr.bf16.mxu0 0
        %1364 = vmatpush2.bf16.msra.mxu0 0
        %1365 = vmatprep.subr.bf16.mxu0 0
        %1366 = vmatpush2.bf16.msra.mxu0 0
        %1367 = vmatprep.subr.bf16.mxu0 0
        %1368 = vmatpush2.bf16.msra.mxu0 0
        %1369 = vmatprep.subr.bf16.mxu0 0
        %1370 = vmatpush2.bf16.msra.mxu0 0
        %1371 = vmatprep.mubr.bf16.mxu0 0
        %1372 = vmatmul.mubr.bf16.gmra.mxu0 %v1333
        %v1373 = vpop.f32.mrf.mxu0
        %v1374 = vadd.f32 %v849, %v1373
        %v1375 = vpop.f32.mrf.mxu0
        %v1376 = vpop.f32.mrf.mxu0
        %v1377 = vpop.f32.mrf.mxu0
        %1378 = vdwg.mxu0
        %v1380 = vsel %vm1331, %v906, 0
        %v1383 = vsel %vm1335, %v1324, 0
        %1385 = vmatprep.subr.bf16.mxu0 0
        %1386 = vmatpush1.bf16.msra.mxu0 0
        %1387 = vmatprep.subr.bf16.mxu0 0
        %1388 = vmatpush1.bf16.msra.mxu0 0
        %1389 = vmatprep.subr.bf16.mxu0 0
        %1390 = vmatpush1.bf16.msra.mxu0 0
        %1391 = vmatprep.subr.bf16.mxu0 0
        %1392 = vmatpush1.bf16.msra.mxu0 0
        %1393 = vmatprep.subr.bf16.mxu0 0
        %1394 = vmatpush1.bf16.msra.mxu0 0
        %1395 = vmatprep.subr.bf16.mxu0 0
        %1396 = vmatpush1.bf16.msra.mxu0 0
        %1397 = vmatprep.subr.bf16.mxu0 0
        %1398 = vmatpush1.bf16.msra.mxu0 0
        %1399 = vmatprep.subr.bf16.mxu0 0
        %1400 = vmatpush1.bf16.msra.mxu0 %v1383
        %1401 = vmatprep.subr.bf16.mxu0 0
        %1402 = vmatpush2.bf16.msra.mxu0 0
        %1403 = vmatprep.subr.bf16.mxu0 0
        %1404 = vmatpush2.bf16.msra.mxu0 0
        %1405 = vmatprep.subr.bf16.mxu0 0
        %1406 = vmatpush2.bf16.msra.mxu0 0
        %1407 = vmatprep.subr.bf16.mxu0 0
        %1408 = vmatpush2.bf16.msra.mxu0 0
        %1409 = vmatprep.subr.bf16.mxu0 0
        %1410 = vmatpush2.bf16.msra.mxu0 0
        %1411 = vmatprep.subr.bf16.mxu0 0
        %1412 = vmatpush2.bf16.msra.mxu0 0
        %1413 = vmatprep.subr.bf16.mxu0 0
        %1414 = vmatpush2.bf16.msra.mxu0 0
        %1415 = vmatprep.subr.bf16.mxu0 0
        %1416 = vmatpush2.bf16.msra.mxu0 0
        %1417 = vmatprep.mubr.bf16.mxu0 0
        %1418 = vmatmul.mubr.bf16.gmra.mxu0 %v1380
        %v1419 = vpop.f32.mrf.mxu0
        %v1420 = vadd.f32 %v849, %v1419
        %v1421 = vpop.f32.mrf.mxu0
        %v1422 = vpop.f32.mrf.mxu0
        %v1423 = vpop.f32.mrf.mxu0
        %1424 = vdwg.mxu0
        %v1426 = vsel %vm1331, %v909, 0
        %v1429 = vsel %vm1335, %v1327, 0
        %1431 = vmatprep.subr.bf16.mxu0 0
        %1432 = vmatpush1.bf16.msra.mxu0 0
        %1433 = vmatprep.subr.bf16.mxu0 0
        %1434 = vmatpush1.bf16.msra.mxu0 0
        %1435 = vmatprep.subr.bf16.mxu0 0
        %1436 = vmatpush1.bf16.msra.mxu0 0
        %1437 = vmatprep.subr.bf16.mxu0 0
        %1438 = vmatpush1.bf16.msra.mxu0 0
        %1439 = vmatprep.subr.bf16.mxu0 0
        %1440 = vmatpush1.bf16.msra.mxu0 0
        %1441 = vmatprep.subr.bf16.mxu0 0
        %1442 = vmatpush1.bf16.msra.mxu0 0
        %1443 = vmatprep.subr.bf16.mxu0 0
        %1444 = vmatpush1.bf16.msra.mxu0 0
        %1445 = vmatprep.subr.bf16.mxu0 0
        %1446 = vmatpush1.bf16.msra.mxu0 %v1429
        %1447 = vmatprep.subr.bf16.mxu0 0
        %1448 = vmatpush2.bf16.msra.mxu0 0
        %1449 = vmatprep.subr.bf16.mxu0 0
        %1450 = vmatpush2.bf16.msra.mxu0 0
        %1451 = vmatprep.subr.bf16.mxu0 0
        %1452 = vmatpush2.bf16.msra.mxu0 0
        %1453 = vmatprep.subr.bf16.mxu0 0
        %1454 = vmatpush2.bf16.msra.mxu0 0
        %1455 = vmatprep.subr.bf16.mxu0 0
        %1456 = vmatpush2.bf16.msra.mxu0 0
        %1457 = vmatprep.subr.bf16.mxu0 0
        %1458 = vmatpush2.bf16.msra.mxu0 0
        %1459 = vmatprep.subr.bf16.mxu0 0
        %1460 = vmatpush2.bf16.msra.mxu0 0
        %1461 = vmatprep.subr.bf16.mxu0 0
        %1462 = vmatpush2.bf16.msra.mxu0 0
        %1463 = vmatprep.mubr.bf16.mxu0 0
        %1464 = vmatmul.mubr.bf16.gmra.mxu0 %v1426
        %v1465 = vpop.f32.mrf.mxu0
        %v1466 = vadd.f32 %v849, %v1465
        %v1467 = vpop.f32.mrf.mxu0
        %v1468 = vpop.f32.mrf.mxu0
        %v1469 = vpop.f32.mrf.mxu0
        %1470 = vdwg.mxu0
        %v1472 = vsel %vm1331, %v912, 0
        %v1475 = vsel %vm1335, %v1330, 0
        %1477 = vmatprep.subr.bf16.mxu0 0
        %1478 = vmatpush1.bf16.msra.mxu0 0
        %1479 = vmatprep.subr.bf16.mxu0 0
        %1480 = vmatpush1.bf16.msra.mxu0 0
        %1481 = vmatprep.subr.bf16.mxu0 0
        %1482 = vmatpush1.bf16.msra.mxu0 0
        %1483 = vmatprep.subr.bf16.mxu0 0
        %1484 = vmatpush1.bf16.msra.mxu0 0
        %1485 = vmatprep.subr.bf16.mxu0 0
        %1486 = vmatpush1.bf16.msra.mxu0 0
        %1487 = vmatprep.subr.bf16.mxu0 0
        %1488 = vmatpush1.bf16.msra.mxu0 0
        %1489 = vmatprep.subr.bf16.mxu0 0
        %1490 = vmatpush1.bf16.msra.mxu0 0
        %1491 = vmatprep.subr.bf16.mxu0 0
        %1492 = vmatpush1.bf16.msra.mxu0 %v1475
        %1493 = vmatprep.subr.bf16.mxu0 0
        %1494 = vmatpush2.bf16.msra.mxu0 0
        %1495 = vmatprep.subr.bf16.mxu0 0
        %1496 = vmatpush2.bf16.msra.mxu0 0
        %1497 = vmatprep.subr.bf16.mxu0 0
        %1498 = vmatpush2.bf16.msra.mxu0 0
        %1499 = vmatprep.subr.bf16.mxu0 0
        %1500 = vmatpush2.bf16.msra.mxu0 0
        %1501 = vmatprep.subr.bf16.mxu0 0
        %1502 = vmatpush2.bf16.msra.mxu0 0
        %1503 = vmatprep.subr.bf16.mxu0 0
        %1504 = vmatpush2.bf16.msra.mxu0 0
        %1505 = vmatprep.subr.bf16.mxu0 0
        %1506 = vmatpush2.bf16.msra.mxu0 0
        %1507 = vmatprep.subr.bf16.mxu0 0
        %1508 = vmatpush2.bf16.msra.mxu0 0
        %1509 = vmatprep.mubr.bf16.mxu0 0
        %1510 = vmatmul.mubr.bf16.gmra.mxu0 %v1472
        %v1511 = vpop.f32.mrf.mxu0
        %v1512 = vadd.f32 %v849, %v1511
        %v1513 = vpop.f32.mrf.mxu0
        %v1514 = vpop.f32.mrf.mxu0
        %v1515 = vpop.f32.mrf.mxu0
        %1516 = vdwg.mxu0
        %v1517 = vsel %vm1331, %v1374, -inf
        %1518 = vmax.xlane.f32.xlu0 %v1517
        %v1519 = vpop.xlane.xlu0 %1518
        %v1520 = vsel %vm1331, %v1420, -inf
        %1521 = vmax.xlane.f32.xlu0 %v1520
        %v1522 = vpop.xlane.xlu0 %1521
        %v1523 = vsel %vm1331, %v1466, -inf
        %1524 = vmax.xlane.f32.xlu0 %v1523
        %v1525 = vpop.xlane.xlu0 %1524
        %v1526 = vsel %vm1331, %v1512, -inf
        %1527 = vmax.xlane.f32.xlu0 %v1526
        %v1528 = vpop.xlane.xlu0 %1527
        %v1529 = vsub.f32 %v1374, %v1519
        %v1530 = vsub.f32 %v1420, %v1522
        %v1531 = vsub.f32 %v1466, %v1525
        %v1532 = vsub.f32 %v1512, %v1528
        %v1533 = vmul.f32 %v1529, 1.442695
        %v1534 = vpow.pop %v1533
        %v1535 = vmul.f32 %v1530, 1.442695
        %v1536 = vpow.pop %v1535
        %v1537 = vmul.f32 %v1531, 1.442695
        %v1538 = vpow.pop %v1537
        %v1539 = vmul.f32 %v1532, 1.442695
        %v1540 = vpow.pop %v1539
        %v1541 = vsel %vm1331, %v1534, 0.0
        %1542 = vadd.xlane.f32.xlu0 %v1541
        %v1543 = vpop.xlane.xlu0 %1542
        %v1544 = vsel %vm1331, %v1536, 0.0
        %1545 = vadd.xlane.f32.xlu0 %v1544
        %v1546 = vpop.xlane.xlu0 %1545
        %v1547 = vsel %vm1331, %v1538, 0.0
        %1548 = vadd.xlane.f32.xlu0 %v1547
        %v1549 = vpop.xlane.xlu0 %1548
        %v1550 = vsel %vm1331, %v1540, 0.0
        %1551 = vadd.xlane.f32.xlu0 %v1550
        %v1552 = vpop.xlane.xlu0 %1551
        %v1553 = vrcp.pop %v1543
        %v1554 = vrcp.pop %v1546
        %v1555 = vrcp.pop %v1549
        %v1556 = vrcp.pop %v1552
        %v1557 = vmul.f32 %v1534, %v1553
        %v1558 = vmul.f32 %v1536, %v1554
        %v1559 = vmul.f32 %v1538, %v1555
        %v1560 = vmul.f32 %v1540, %v1556
        %v1561 = vpack.c.bf16 %v1557, %v1557
        %v1562 = vpack.c.bf16 %v1558, %v1558
        %v1563 = vpack.c.bf16 %v1559, %v1559
        %v1564 = vpack.c.bf16 %v1560, %v1560
        %1565 = vxpose.xlu0.c.b16.start [1/8] %v837, 128
        %1566 = vxpose.xlu0.c.b16.cont [2/8] 0, 128
        %1567 = vxpose.xlu0.c.b16.cont [3/8] 0, 128
        %1568 = vxpose.xlu0.c.b16.cont [4/8] 0, 128
        %1569 = vxpose.xlu0.c.b16.cont [5/8] 0, 128
        %1570 = vxpose.xlu0.c.b16.cont [6/8] 0, 128
        %1571 = vxpose.xlu0.c.b16.cont [7/8] 0, 128
        %1572 = vxpose.xlu0.c.b16.end [8/8] 0, 128
        %v1573 = vpop.trf.xlu0
        %v1574 = vpop.trf.xlu0
        %v1575 = vpop.trf.xlu0
        %v1576 = vpop.trf.xlu0
        %v1577 = vpop.trf.xlu0
        %v1578 = vpop.trf.xlu0
        %v1579 = vpop.trf.xlu0
        %v1580 = vpop.trf.xlu0
        %1581 = vxpose.xlu0.c.b16.start [1/8] %v838, 128
        %1582 = vxpose.xlu0.c.b16.cont [2/8] 0, 128
        %1583 = vxpose.xlu0.c.b16.cont [3/8] 0, 128
        %1584 = vxpose.xlu0.c.b16.cont [4/8] 0, 128
        %1585 = vxpose.xlu0.c.b16.cont [5/8] 0, 128
        %1586 = vxpose.xlu0.c.b16.cont [6/8] 0, 128
        %1587 = vxpose.xlu0.c.b16.cont [7/8] 0, 128
        %1588 = vxpose.xlu0.c.b16.end [8/8] 0, 128
        %v1589 = vpop.trf.xlu0
        %v1590 = vpop.trf.xlu0
        %v1591 = vpop.trf.xlu0
        %v1592 = vpop.trf.xlu0
        %v1593 = vpop.trf.xlu0
        %v1594 = vpop.trf.xlu0
        %v1595 = vpop.trf.xlu0
        %v1596 = vpop.trf.xlu0
        %1597 = vxpose.xlu0.c.b16.start [1/8] %v839, 128
        %1598 = vxpose.xlu0.c.b16.cont [2/8] 0, 128
        %1599 = vxpose.xlu0.c.b16.cont [3/8] 0, 128
        %1600 = vxpose.xlu0.c.b16.cont [4/8] 0, 128
        %1601 = vxpose.xlu0.c.b16.cont [5/8] 0, 128
        %1602 = vxpose.xlu0.c.b16.cont [6/8] 0, 128
        %1603 = vxpose.xlu0.c.b16.cont [7/8] 0, 128
        %1604 = vxpose.xlu0.c.b16.end [8/8] 0, 128
        %v1605 = vpop.trf.xlu0
        %v1606 = vpop.trf.xlu0
        %v1607 = vpop.trf.xlu0
        %v1608 = vpop.trf.xlu0
        %v1609 = vpop.trf.xlu0
        %v1610 = vpop.trf.xlu0
        %v1611 = vpop.trf.xlu0
        %v1612 = vpop.trf.xlu0
        %1613 = vxpose.xlu0.c.b16.start [1/8] %v840, 128
        %1614 = vxpose.xlu0.c.b16.cont [2/8] 0, 128
        %1615 = vxpose.xlu0.c.b16.cont [3/8] 0, 128
        %1616 = vxpose.xlu0.c.b16.cont [4/8] 0, 128
        %1617 = vxpose.xlu0.c.b16.cont [5/8] 0, 128
        %1618 = vxpose.xlu0.c.b16.cont [6/8] 0, 128
        %1619 = vxpose.xlu0.c.b16.cont [7/8] 0, 128
        %1620 = vxpose.xlu0.c.b16.end [8/8] 0, 128
        %v1621 = vpop.trf.xlu0
        %v1622 = vpop.trf.xlu0
        %v1623 = vpop.trf.xlu0
        %v1624 = vpop.trf.xlu0
        %v1625 = vpop.trf.xlu0
        %v1626 = vpop.trf.xlu0
        %v1627 = vpop.trf.xlu0
        %v1628 = vpop.trf.xlu0
        %1629 = vxpose.xlu0.c.b16.start [1/8] %v841, 128
        %1630 = vxpose.xlu0.c.b16.cont [2/8] 0, 128
        %1631 = vxpose.xlu0.c.b16.cont [3/8] 0, 128
        %1632 = vxpose.xlu0.c.b16.cont [4/8] 0, 128
        %1633 = vxpose.xlu0.c.b16.cont [5/8] 0, 128
        %1634 = vxpose.xlu0.c.b16.cont [6/8] 0, 128
        %1635 = vxpose.xlu0.c.b16.cont [7/8] 0, 128
        %1636 = vxpose.xlu0.c.b16.end [8/8] 0, 128
        %v1637 = vpop.trf.xlu0
        %v1638 = vpop.trf.xlu0
        %v1639 = vpop.trf.xlu0
        %v1640 = vpop.trf.xlu0
        %v1641 = vpop.trf.xlu0
        %v1642 = vpop.trf.xlu0
        %v1643 = vpop.trf.xlu0
        %v1644 = vpop.trf.xlu0
        %1645 = vxpose.xlu0.c.b16.start [1/8] %v842, 128
        %1646 = vxpose.xlu0.c.b16.cont [2/8] 0, 128
        %1647 = vxpose.xlu0.c.b16.cont [3/8] 0, 128
        %1648 = vxpose.xlu0.c.b16.cont [4/8] 0, 128
        %1649 = vxpose.xlu0.c.b16.cont [5/8] 0, 128
        %1650 = vxpose.xlu0.c.b16.cont [6/8] 0, 128
        %1651 = vxpose.xlu0.c.b16.cont [7/8] 0, 128
        %1652 = vxpose.xlu0.c.b16.end [8/8] 0, 128
        %v1653 = vpop.trf.xlu0
        %v1654 = vpop.trf.xlu0
        %v1655 = vpop.trf.xlu0
        %v1656 = vpop.trf.xlu0
        %v1657 = vpop.trf.xlu0
        %v1658 = vpop.trf.xlu0
        %v1659 = vpop.trf.xlu0
        %v1660 = vpop.trf.xlu0
        %1661 = vxpose.xlu0.c.b16.start [1/8] %v843, 128
        %1662 = vxpose.xlu0.c.b16.cont [2/8] 0, 128
        %1663 = vxpose.xlu0.c.b16.cont [3/8] 0, 128
        %1664 = vxpose.xlu0.c.b16.cont [4/8] 0, 128
        %1665 = vxpose.xlu0.c.b16.cont [5/8] 0, 128
        %1666 = vxpose.xlu0.c.b16.cont [6/8] 0, 128
        %1667 = vxpose.xlu0.c.b16.cont [7/8] 0, 128
        %1668 = vxpose.xlu0.c.b16.end [8/8] 0, 128
        %v1669 = vpop.trf.xlu0
        %v1670 = vpop.trf.xlu0
        %v1671 = vpop.trf.xlu0
        %v1672 = vpop.trf.xlu0
        %v1673 = vpop.trf.xlu0
        %v1674 = vpop.trf.xlu0
        %v1675 = vpop.trf.xlu0
        %v1676 = vpop.trf.xlu0
        %1677 = vxpose.xlu0.c.b16.start [1/8] %v844, 128
        %1678 = vxpose.xlu0.c.b16.cont [2/8] 0, 128
        %1679 = vxpose.xlu0.c.b16.cont [3/8] 0, 128
        %1680 = vxpose.xlu0.c.b16.cont [4/8] 0, 128
        %1681 = vxpose.xlu0.c.b16.cont [5/8] 0, 128
        %1682 = vxpose.xlu0.c.b16.cont [6/8] 0, 128
        %1683 = vxpose.xlu0.c.b16.cont [7/8] 0, 128
        %1684 = vxpose.xlu0.c.b16.end [8/8] 0, 128
        %v1685 = vpop.trf.xlu0
        %v1686 = vpop.trf.xlu0
        %v1687 = vpop.trf.xlu0
        %v1688 = vpop.trf.xlu0
        %v1689 = vpop.trf.xlu0
        %v1690 = vpop.trf.xlu0
        %v1691 = vpop.trf.xlu0
        %v1692 = vpop.trf.xlu0
        %v1693 = vcombine.low %v1573, %v1637
        %v1695 = vunpack.c.l.s4 1983009808
        %v1696 = vunpack.c.0.s8 %v1695
        %v1697 = vlaneseq
        %v1698 = vshrl.u32 %v1697, 7
        %v1699 = vsub.s32 %v1696, %v1698
        %v1700 = vrot.slane %v1693, %v1699
        %v1701 = vcombine.low %v1605, %v1669
        %v1703 = vunpack.c.l.s4 1983009808
        %v1704 = vunpack.c.0.s8 %v1703
        %v1705 = vlaneseq
        %v1706 = vshrl.u32 %v1705, 7
        %v1707 = vsub.s32 %v1704, %v1706
        %v1708 = vrot.slane %v1701, %v1707
        %v1709 = vcombine.low %v1700, %v1708
        %v1710 = vcombine.high %v1700, %v1708
        %v1712 = vunpack.c.l.s4 1934713408
        %v1713 = vunpack.c.0.s8 %v1712
        %v1714 = vlaneseq
        %v1715 = vshrl.u32 %v1714, 7
        %v1716 = vsub.s32 %v1713, %v1715
        %v1717 = vrot.slane %v1709, %v1716
        %v1719 = vunpack.c.l.s4 1934713408
        %v1720 = vunpack.c.0.s8 %v1719
        %v1721 = vlaneseq
        %v1722 = vshrl.u32 %v1721, 7
        %v1723 = vsub.s32 %v1720, %v1722
        %v1724 = vrot.slane %v1710, %v1723
        %v1725 = vcombine.high %v1717, 0
        %v1726 = vcombine.high %v1724, 0
        %v1727 = vcombine.low %v1589, %v1653
        %v1729 = vunpack.c.l.s4 1983009808
        %v1730 = vunpack.c.0.s8 %v1729
        %v1731 = vlaneseq
        %v1732 = vshrl.u32 %v1731, 7
        %v1733 = vsub.s32 %v1730, %v1732
        %v1734 = vrot.slane %v1727, %v1733
        %v1735 = vcombine.low %v1621, %v1685
        %v1737 = vunpack.c.l.s4 1983009808
        %v1738 = vunpack.c.0.s8 %v1737
        %v1739 = vlaneseq
        %v1740 = vshrl.u32 %v1739, 7
        %v1741 = vsub.s32 %v1738, %v1740
        %v1742 = vrot.slane %v1735, %v1741
        %v1743 = vcombine.low %v1734, %v1742
        %v1744 = vcombine.high %v1734, %v1742
        %v1746 = vunpack.c.l.s4 1934713408
        %v1747 = vunpack.c.0.s8 %v1746
        %v1748 = vlaneseq
        %v1749 = vshrl.u32 %v1748, 7
        %v1750 = vsub.s32 %v1747, %v1749
        %v1751 = vrot.slane %v1743, %v1750
        %v1753 = vunpack.c.l.s4 1934713408
        %v1754 = vunpack.c.0.s8 %v1753
        %v1755 = vlaneseq
        %v1756 = vshrl.u32 %v1755, 7
        %v1757 = vsub.s32 %v1754, %v1756
        %v1758 = vrot.slane %v1744, %v1757
        %v1759 = vcombine.high %v1751, 0
        %v1760 = vcombine.high %v1758, 0
        %v1763 = vpack.i.b16 %v1751, %v1717
        %v1765 = vshrl.u32 %v1717, 16
        %v1766 = vshrl.u32 %v1751, 16
        %v1767 = vpack.i.b16 %v1766, %v1765
        %v1771 = vpack.i.b16 %v1759, %v1725
        %v1773 = vshrl.u32 %v1725, 16
        %v1774 = vshrl.u32 %v1759, 16
        %v1775 = vpack.i.b16 %v1774, %v1773
        %v1779 = vpack.i.b16 %v1758, %v1724
        %v1781 = vshrl.u32 %v1724, 16
        %v1782 = vshrl.u32 %v1758, 16
        %v1783 = vpack.i.b16 %v1782, %v1781
        %v1787 = vpack.i.b16 %v1760, %v1726
        %v1789 = vshrl.u32 %v1726, 16
        %v1790 = vshrl.u32 %v1760, 16
        %v1791 = vpack.i.b16 %v1790, %v1789
        %1793 = vxpose.xlu0.c.b16.start [1/8] %v1763, 128
        %1794 = vxpose.xlu0.c.b16.cont [2/8] 0, 128
        %1795 = vxpose.xlu0.c.b16.cont [3/8] 0, 128
        %1796 = vxpose.xlu0.c.b16.cont [4/8] 0, 128
        %1797 = vxpose.xlu0.c.b16.cont [5/8] 0, 128
        %1798 = vxpose.xlu0.c.b16.cont [6/8] 0, 128
        %1799 = vxpose.xlu0.c.b16.cont [7/8] 0, 128
        %1800 = vxpose.xlu0.c.b16.end [8/8] 0, 128
        %v1801 = vpop.trf.xlu0
        %v1802 = vpop.trf.xlu0
        %v1803 = vpop.trf.xlu0
        %v1804 = vpop.trf.xlu0
        %v1805 = vpop.trf.xlu0
        %v1806 = vpop.trf.xlu0
        %v1807 = vpop.trf.xlu0
        %v1808 = vpop.trf.xlu0
        %1809 = vxpose.xlu0.c.b16.start [1/8] %v1767, 128
        %1810 = vxpose.xlu0.c.b16.cont [2/8] 0, 128
        %1811 = vxpose.xlu0.c.b16.cont [3/8] 0, 128
        %1812 = vxpose.xlu0.c.b16.cont [4/8] 0, 128
        %1813 = vxpose.xlu0.c.b16.cont [5/8] 0, 128
        %1814 = vxpose.xlu0.c.b16.cont [6/8] 0, 128
        %1815 = vxpose.xlu0.c.b16.cont [7/8] 0, 128
        %1816 = vxpose.xlu0.c.b16.end [8/8] 0, 128
        %v1817 = vpop.trf.xlu0
        %v1818 = vpop.trf.xlu0
        %v1819 = vpop.trf.xlu0
        %v1820 = vpop.trf.xlu0
        %v1821 = vpop.trf.xlu0
        %v1822 = vpop.trf.xlu0
        %v1823 = vpop.trf.xlu0
        %v1824 = vpop.trf.xlu0
        %1825 = vxpose.xlu0.c.b16.start [1/8] %v1771, 128
        %1826 = vxpose.xlu0.c.b16.cont [2/8] 0, 128
        %1827 = vxpose.xlu0.c.b16.cont [3/8] 0, 128
        %1828 = vxpose.xlu0.c.b16.cont [4/8] 0, 128
        %1829 = vxpose.xlu0.c.b16.cont [5/8] 0, 128
        %1830 = vxpose.xlu0.c.b16.cont [6/8] 0, 128
        %1831 = vxpose.xlu0.c.b16.cont [7/8] 0, 128
        %1832 = vxpose.xlu0.c.b16.end [8/8] 0, 128
        %v1833 = vpop.trf.xlu0
        %v1834 = vpop.trf.xlu0
        %v1835 = vpop.trf.xlu0
        %v1836 = vpop.trf.xlu0
        %v1837 = vpop.trf.xlu0
        %v1838 = vpop.trf.xlu0
        %v1839 = vpop.trf.xlu0
        %v1840 = vpop.trf.xlu0
        %1841 = vxpose.xlu0.c.b16.start [1/8] %v1775, 128
        %1842 = vxpose.xlu0.c.b16.cont [2/8] 0, 128
        %1843 = vxpose.xlu0.c.b16.cont [3/8] 0, 128
        %1844 = vxpose.xlu0.c.b16.cont [4/8] 0, 128
        %1845 = vxpose.xlu0.c.b16.cont [5/8] 0, 128
        %1846 = vxpose.xlu0.c.b16.cont [6/8] 0, 128
        %1847 = vxpose.xlu0.c.b16.cont [7/8] 0, 128
        %1848 = vxpose.xlu0.c.b16.end [8/8] 0, 128
        %v1849 = vpop.trf.xlu0
        %v1850 = vpop.trf.xlu0
        %v1851 = vpop.trf.xlu0
        %v1852 = vpop.trf.xlu0
        %v1853 = vpop.trf.xlu0
        %v1854 = vpop.trf.xlu0
        %v1855 = vpop.trf.xlu0
        %v1856 = vpop.trf.xlu0
        %1857 = vxpose.xlu0.c.b16.start [1/8] %v1779, 128
        %1858 = vxpose.xlu0.c.b16.cont [2/8] 0, 128
        %1859 = vxpose.xlu0.c.b16.cont [3/8] 0, 128
        %1860 = vxpose.xlu0.c.b16.cont [4/8] 0, 128
        %1861 = vxpose.xlu0.c.b16.cont [5/8] 0, 128
        %1862 = vxpose.xlu0.c.b16.cont [6/8] 0, 128
        %1863 = vxpose.xlu0.c.b16.cont [7/8] 0, 128
        %1864 = vxpose.xlu0.c.b16.end [8/8] 0, 128
        %v1865 = vpop.trf.xlu0
        %v1866 = vpop.trf.xlu0
        %v1867 = vpop.trf.xlu0
        %v1868 = vpop.trf.xlu0
        %v1869 = vpop.trf.xlu0
        %v1870 = vpop.trf.xlu0
        %v1871 = vpop.trf.xlu0
        %v1872 = vpop.trf.xlu0
        %1873 = vxpose.xlu0.c.b16.start [1/8] %v1783, 128
        %1874 = vxpose.xlu0.c.b16.cont [2/8] 0, 128
        %1875 = vxpose.xlu0.c.b16.cont [3/8] 0, 128
        %1876 = vxpose.xlu0.c.b16.cont [4/8] 0, 128
        %1877 = vxpose.xlu0.c.b16.cont [5/8] 0, 128
        %1878 = vxpose.xlu0.c.b16.cont [6/8] 0, 128
        %1879 = vxpose.xlu0.c.b16.cont [7/8] 0, 128
        %1880 = vxpose.xlu0.c.b16.end [8/8] 0, 128
        %v1881 = vpop.trf.xlu0
        %v1882 = vpop.trf.xlu0
        %v1883 = vpop.trf.xlu0
        %v1884 = vpop.trf.xlu0
        %v1885 = vpop.trf.xlu0
        %v1886 = vpop.trf.xlu0
        %v1887 = vpop.trf.xlu0
        %v1888 = vpop.trf.xlu0
        %1889 = vxpose.xlu0.c.b16.start [1/8] %v1787, 128
        %1890 = vxpose.xlu0.c.b16.cont [2/8] 0, 128
        %1891 = vxpose.xlu0.c.b16.cont [3/8] 0, 128
        %1892 = vxpose.xlu0.c.b16.cont [4/8] 0, 128
        %1893 = vxpose.xlu0.c.b16.cont [5/8] 0, 128
        %1894 = vxpose.xlu0.c.b16.cont [6/8] 0, 128
        %1895 = vxpose.xlu0.c.b16.cont [7/8] 0, 128
        %1896 = vxpose.xlu0.c.b16.end [8/8] 0, 128
        %v1897 = vpop.trf.xlu0
        %v1898 = vpop.trf.xlu0
        %v1899 = vpop.trf.xlu0
        %v1900 = vpop.trf.xlu0
        %v1901 = vpop.trf.xlu0
        %v1902 = vpop.trf.xlu0
        %v1903 = vpop.trf.xlu0
        %v1904 = vpop.trf.xlu0
        %1905 = vxpose.xlu0.c.b16.start [1/8] %v1791, 128
        %1906 = vxpose.xlu0.c.b16.cont [2/8] 0, 128
        %1907 = vxpose.xlu0.c.b16.cont [3/8] 0, 128
        %1908 = vxpose.xlu0.c.b16.cont [4/8] 0, 128
        %1909 = vxpose.xlu0.c.b16.cont [5/8] 0, 128
        %1910 = vxpose.xlu0.c.b16.cont [6/8] 0, 128
        %1911 = vxpose.xlu0.c.b16.cont [7/8] 0, 128
        %1912 = vxpose.xlu0.c.b16.end [8/8] 0, 128
        %v1913 = vpop.trf.xlu0
        %v1914 = vpop.trf.xlu0
        %v1915 = vpop.trf.xlu0
        %v1916 = vpop.trf.xlu0
        %v1917 = vpop.trf.xlu0
        %v1918 = vpop.trf.xlu0
        %v1919 = vpop.trf.xlu0
        %v1920 = vpop.trf.xlu0
        %v1921 = vcombine.low %v1801, %v1865
        %v1923 = vunpack.c.l.s4 1983009808
        %v1924 = vunpack.c.0.s8 %v1923
        %v1925 = vlaneseq
        %v1926 = vshrl.u32 %v1925, 7
        %v1927 = vsub.s32 %v1924, %v1926
        %v1928 = vrot.slane %v1921, %v1927
        %v1929 = vcombine.low %v1833, %v1897
        %v1931 = vunpack.c.l.s4 1983009808
        %v1932 = vunpack.c.0.s8 %v1931
        %v1933 = vlaneseq
        %v1934 = vshrl.u32 %v1933, 7
        %v1935 = vsub.s32 %v1932, %v1934
        %v1936 = vrot.slane %v1929, %v1935
        %v1937 = vcombine.low %v1928, %v1936
        %v1939 = vunpack.c.l.s4 1934713408
        %v1940 = vunpack.c.0.s8 %v1939
        %v1941 = vlaneseq
        %v1942 = vshrl.u32 %v1941, 7
        %v1943 = vsub.s32 %v1940, %v1942
        %v1944 = vrot.slane %v1937, %v1943
        %v1945 = vcombine.high %v1944, 0
        %v1946 = vcombine.low %v1817, %v1881
        %v1948 = vunpack.c.l.s4 1983009808
        %v1949 = vunpack.c.0.s8 %v1948
        %v1950 = vlaneseq
        %v1951 = vshrl.u32 %v1950, 7
        %v1952 = vsub.s32 %v1949, %v1951
        %v1953 = vrot.slane %v1946, %v1952
        %v1954 = vcombine.low %v1849, %v1913
        %v1956 = vunpack.c.l.s4 1983009808
        %v1957 = vunpack.c.0.s8 %v1956
        %v1958 = vlaneseq
        %v1959 = vshrl.u32 %v1958, 7
        %v1960 = vsub.s32 %v1957, %v1959
        %v1961 = vrot.slane %v1954, %v1960
        %v1962 = vcombine.low %v1953, %v1961
        %v1964 = vunpack.c.l.s4 1934713408
        %v1965 = vunpack.c.0.s8 %v1964
        %v1966 = vlaneseq
        %v1967 = vshrl.u32 %v1966, 7
        %v1968 = vsub.s32 %v1965, %v1967
        %v1969 = vrot.slane %v1962, %v1968
        %v1970 = vcombine.high %v1969, 0
        %v1973 = vpack.i.b16 %v1969, %v1944
        %v1974 = vshrl.u32 %v1944, 16
        %v1975 = vshrl.u32 %v1969, 16
        %v1976 = vpack.i.b16 %v1975, %v1974
        %v1979 = vpack.i.b16 %v1970, %v1945
        %v1980 = vshrl.u32 %v1945, 16
        %v1981 = vshrl.u32 %v1970, 16
        %v1982 = vpack.i.b16 %v1981, %v1980
        %v1984 = vsel %vm1331, %v1973, 0
        %v1987 = vsel %vm1331, %v1561, 0
        %1989 = vmatprep.subr.bf16.mxu0 0
        %1990 = vmatpush1.bf16.xpose.msra.mxu0 0
        %1991 = vmatprep.subr.bf16.mxu0 0
        %1992 = vmatpush1.bf16.xpose.msra.mxu0 0
        %1993 = vmatprep.subr.bf16.mxu0 0
        %1994 = vmatpush1.bf16.xpose.msra.mxu0 0
        %1995 = vmatprep.subr.bf16.mxu0 0
        %1996 = vmatpush1.bf16.xpose.msra.mxu0 0
        %1997 = vmatprep.subr.bf16.mxu0 0
        %1998 = vmatpush1.bf16.xpose.msra.mxu0 0
        %1999 = vmatprep.subr.bf16.mxu0 0
        %2000 = vmatpush1.bf16.xpose.msra.mxu0 0
        %2001 = vmatprep.subr.bf16.mxu0 0
        %2002 = vmatpush1.bf16.xpose.msra.mxu0 0
        %2003 = vmatprep.subr.bf16.mxu0 0
        %2004 = vmatpush1.bf16.xpose.msra.mxu0 %v1987
        %2005 = vmatprep.subr.bf16.mxu0 0
        %2006 = vmatpush2.bf16.xpose.msra.mxu0 0
        %2007 = vmatprep.subr.bf16.mxu0 0
        %2008 = vmatpush2.bf16.xpose.msra.mxu0 0
        %2009 = vmatprep.subr.bf16.mxu0 0
        %2010 = vmatpush2.bf16.xpose.msra.mxu0 0
        %2011 = vmatprep.subr.bf16.mxu0 0
        %2012 = vmatpush2.bf16.xpose.msra.mxu0 0
        %2013 = vmatprep.subr.bf16.mxu0 0
        %2014 = vmatpush2.bf16.xpose.msra.mxu0 0
        %2015 = vmatprep.subr.bf16.mxu0 0
        %2016 = vmatpush2.bf16.xpose.msra.mxu0 0
        %2017 = vmatprep.subr.bf16.mxu0 0
        %2018 = vmatpush2.bf16.xpose.msra.mxu0 0
        %2019 = vmatprep.subr.bf16.mxu0 0
        %2020 = vmatpush2.bf16.xpose.msra.mxu0 0
        %2021 = vmatprep.mubr.bf16.mxu0 0
        %2022 = vmatmul.mubr.bf16.gmra.mxu0 %v1984
        %v2023 = vpop.f32.mrf.mxu0
        %v2024 = vadd.f32 0.0, %v2023
        %v2025 = vpop.f32.mrf.mxu0
        %v2026 = vpop.f32.mrf.mxu0
        %v2027 = vpop.f32.mrf.mxu0
        %2028 = vdwg.mxu0
        %v2030 = vsel %vm1331, %v1976, 0
        %v2033 = vsel %vm1331, %v1562, 0
        %2035 = vmatprep.subr.bf16.mxu0 0
        %2036 = vmatpush1.bf16.xpose.msra.mxu0 0
        %2037 = vmatprep.subr.bf16.mxu0 0
        %2038 = vmatpush1.bf16.xpose.msra.mxu0 0
        %2039 = vmatprep.subr.bf16.mxu0 0
        %2040 = vmatpush1.bf16.xpose.msra.mxu0 0
        %2041 = vmatprep.subr.bf16.mxu0 0
        %2042 = vmatpush1.bf16.xpose.msra.mxu0 0
        %2043 = vmatprep.subr.bf16.mxu0 0
        %2044 = vmatpush1.bf16.xpose.msra.mxu0 0
        %2045 = vmatprep.subr.bf16.mxu0 0
        %2046 = vmatpush1.bf16.xpose.msra.mxu0 0
        %2047 = vmatprep.subr.bf16.mxu0 0
        %2048 = vmatpush1.bf16.xpose.msra.mxu0 0
        %2049 = vmatprep.subr.bf16.mxu0 0
        %2050 = vmatpush1.bf16.xpose.msra.mxu0 %v2033
        %2051 = vmatprep.subr.bf16.mxu0 0
        %2052 = vmatpush2.bf16.xpose.msra.mxu0 0
        %2053 = vmatprep.subr.bf16.mxu0 0
        %2054 = vmatpush2.bf16.xpose.msra.mxu0 0
        %2055 = vmatprep.subr.bf16.mxu0 0
        %2056 = vmatpush2.bf16.xpose.msra.mxu0 0
        %2057 = vmatprep.subr.bf16.mxu0 0
        %2058 = vmatpush2.bf16.xpose.msra.mxu0 0
        %2059 = vmatprep.subr.bf16.mxu0 0
        %2060 = vmatpush2.bf16.xpose.msra.mxu0 0
        %2061 = vmatprep.subr.bf16.mxu0 0
        %2062 = vmatpush2.bf16.xpose.msra.mxu0 0
        %2063 = vmatprep.subr.bf16.mxu0 0
        %2064 = vmatpush2.bf16.xpose.msra.mxu0 0
        %2065 = vmatprep.subr.bf16.mxu0 0
        %2066 = vmatpush2.bf16.xpose.msra.mxu0 0
        %2067 = vmatprep.mubr.bf16.mxu0 0
        %2068 = vmatmul.mubr.bf16.gmra.mxu0 %v2030
        %v2069 = vpop.f32.mrf.mxu0
        %v2070 = vadd.f32 0.0, %v2069
        %v2071 = vpop.f32.mrf.mxu0
        %v2072 = vpop.f32.mrf.mxu0
        %v2073 = vpop.f32.mrf.mxu0
        %2074 = vdwg.mxu0
        %v2076 = vsel %vm1331, %v1979, 0
        %v2079 = vsel %vm1331, %v1563, 0
        %2081 = vmatprep.subr.bf16.mxu0 0
        %2082 = vmatpush1.bf16.xpose.msra.mxu0 0
        %2083 = vmatprep.subr.bf16.mxu0 0
        %2084 = vmatpush1.bf16.xpose.msra.mxu0 0
        %2085 = vmatprep.subr.bf16.mxu0 0
        %2086 = vmatpush1.bf16.xpose.msra.mxu0 0
        %2087 = vmatprep.subr.bf16.mxu0 0
        %2088 = vmatpush1.bf16.xpose.msra.mxu0 0
        %2089 = vmatprep.subr.bf16.mxu0 0
        %2090 = vmatpush1.bf16.xpose.msra.mxu0 0
        %2091 = vmatprep.subr.bf16.mxu0 0
        %2092 = vmatpush1.bf16.xpose.msra.mxu0 0
        %2093 = vmatprep.subr.bf16.mxu0 0
        %2094 = vmatpush1.bf16.xpose.msra.mxu0 0
        %2095 = vmatprep.subr.bf16.mxu0 0
        %2096 = vmatpush1.bf16.xpose.msra.mxu0 %v2079
        %2097 = vmatprep.subr.bf16.mxu0 0
        %2098 = vmatpush2.bf16.xpose.msra.mxu0 0
        %2099 = vmatprep.subr.bf16.mxu0 0
        %2100 = vmatpush2.bf16.xpose.msra.mxu0 0
        %2101 = vmatprep.subr.bf16.mxu0 0
        %2102 = vmatpush2.bf16.xpose.msra.mxu0 0
        %2103 = vmatprep.subr.bf16.mxu0 0
        %2104 = vmatpush2.bf16.xpose.msra.mxu0 0
        %2105 = vmatprep.subr.bf16.mxu0 0
        %2106 = vmatpush2.bf16.xpose.msra.mxu0 0
        %2107 = vmatprep.subr.bf16.mxu0 0
        %2108 = vmatpush2.bf16.xpose.msra.mxu0 0
        %2109 = vmatprep.subr.bf16.mxu0 0
        %2110 = vmatpush2.bf16.xpose.msra.mxu0 0
        %2111 = vmatprep.subr.bf16.mxu0 0
        %2112 = vmatpush2.bf16.xpose.msra.mxu0 0
        %2113 = vmatprep.mubr.bf16.mxu0 0
        %2114 = vmatmul.mubr.bf16.gmra.mxu0 %v2076
        %v2115 = vpop.f32.mrf.mxu0
        %v2116 = vadd.f32 0.0, %v2115
        %v2117 = vpop.f32.mrf.mxu0
        %v2118 = vpop.f32.mrf.mxu0
        %v2119 = vpop.f32.mrf.mxu0
        %2120 = vdwg.mxu0
        %v2122 = vsel %vm1331, %v1982, 0
        %v2125 = vsel %vm1331, %v1564, 0
        %2127 = vmatprep.subr.bf16.mxu0 0
        %2128 = vmatpush1.bf16.xpose.msra.mxu0 0
        %2129 = vmatprep.subr.bf16.mxu0 0
        %2130 = vmatpush1.bf16.xpose.msra.mxu0 0
        %2131 = vmatprep.subr.bf16.mxu0 0
        %2132 = vmatpush1.bf16.xpose.msra.mxu0 0
        %2133 = vmatprep.subr.bf16.mxu0 0
        %2134 = vmatpush1.bf16.xpose.msra.mxu0 0
        %2135 = vmatprep.subr.bf16.mxu0 0
        %2136 = vmatpush1.bf16.xpose.msra.mxu0 0
        %2137 = vmatprep.subr.bf16.mxu0 0
        %2138 = vmatpush1.bf16.xpose.msra.mxu0 0
        %2139 = vmatprep.subr.bf16.mxu0 0
        %2140 = vmatpush1.bf16.xpose.msra.mxu0 0
        %2141 = vmatprep.subr.bf16.mxu0 0
        %2142 = vmatpush1.bf16.xpose.msra.mxu0 %v2125
        %2143 = vmatprep.subr.bf16.mxu0 0
        %2144 = vmatpush2.bf16.xpose.msra.mxu0 0
        %2145 = vmatprep.subr.bf16.mxu0 0
        %2146 = vmatpush2.bf16.xpose.msra.mxu0 0
        %2147 = vmatprep.subr.bf16.mxu0 0
        %2148 = vmatpush2.bf16.xpose.msra.mxu0 0
        %2149 = vmatprep.subr.bf16.mxu0 0
        %2150 = vmatpush2.bf16.xpose.msra.mxu0 0
        %2151 = vmatprep.subr.bf16.mxu0 0
        %2152 = vmatpush2.bf16.xpose.msra.mxu0 0
        %2153 = vmatprep.subr.bf16.mxu0 0
        %2154 = vmatpush2.bf16.xpose.msra.mxu0 0
        %2155 = vmatprep.subr.bf16.mxu0 0
        %2156 = vmatpush2.bf16.xpose.msra.mxu0 0
        %2157 = vmatprep.subr.bf16.mxu0 0
        %2158 = vmatpush2.bf16.xpose.msra.mxu0 0
        %2159 = vmatprep.mubr.bf16.mxu0 0
        %2160 = vmatmul.mubr.bf16.gmra.mxu0 %v2122
        %v2161 = vpop.f32.mrf.mxu0
        %v2162 = vadd.f32 0.0, %v2161
        %v2163 = vpop.f32.mrf.mxu0
        %v2164 = vpop.f32.mrf.mxu0
        %v2165 = vpop.f32.mrf.mxu0
        %2166 = vdwg.mxu0
        %2167 = vxpose.xlu0.b32.start [1/16] %v2024, 128
        %2168 = vxpose.xlu0.b32.cont [2/16] 0.0, 128
        %2169 = vxpose.xlu0.b32.cont [3/16] 0.0, 128
        %2170 = vxpose.xlu0.b32.cont [4/16] 0.0, 128
        %2171 = vxpose.xlu0.b32.cont [5/16] 0.0, 128
        %2172 = vxpose.xlu0.b32.cont [6/16] 0.0, 128
        %2173 = vxpose.xlu0.b32.cont [7/16] 0.0, 128
        %2174 = vxpose.xlu0.b32.cont [8/16] 0.0, 128
        %2175 = vxpose.xlu0.b32.cont [9/16] 0.0, 128
        %2176 = vxpose.xlu0.b32.cont [10/16] 0.0, 128
        %2177 = vxpose.xlu0.b32.cont [11/16] 0.0, 128
        %2178 = vxpose.xlu0.b32.cont [12/16] 0.0, 128
        %2179 = vxpose.xlu0.b32.cont [13/16] 0.0, 128
        %2180 = vxpose.xlu0.b32.cont [14/16] 0.0, 128
        %2181 = vxpose.xlu0.b32.cont [15/16] 0.0, 128
        %2182 = vxpose.xlu0.b32.end [16/16] 0.0, 128
        %v2183 = vpop.trf.xlu0
        %v2184 = vpop.trf.xlu0
        %v2185 = vpop.trf.xlu0
        %v2186 = vpop.trf.xlu0
        %v2187 = vpop.trf.xlu0
        %v2188 = vpop.trf.xlu0
        %v2189 = vpop.trf.xlu0
        %v2190 = vpop.trf.xlu0
        %v2191 = vpop.trf.xlu0
        %v2192 = vpop.trf.xlu0
        %v2193 = vpop.trf.xlu0
        %v2194 = vpop.trf.xlu0
        %v2195 = vpop.trf.xlu0
        %v2196 = vpop.trf.xlu0
        %v2197 = vpop.trf.xlu0
        %v2198 = vpop.trf.xlu0
        %2199 = vxpose.xlu0.b32.start [1/16] %v2070, 128
        %2200 = vxpose.xlu0.b32.cont [2/16] 0.0, 128
        %2201 = vxpose.xlu0.b32.cont [3/16] 0.0, 128
        %2202 = vxpose.xlu0.b32.cont [4/16] 0.0, 128
        %2203 = vxpose.xlu0.b32.cont [5/16] 0.0, 128
        %2204 = vxpose.xlu0.b32.cont [6/16] 0.0, 128
        %2205 = vxpose.xlu0.b32.cont [7/16] 0.0, 128
        %2206 = vxpose.xlu0.b32.cont [8/16] 0.0, 128
        %2207 = vxpose.xlu0.b32.cont [9/16] 0.0, 128
        %2208 = vxpose.xlu0.b32.cont [10/16] 0.0, 128
        %2209 = vxpose.xlu0.b32.cont [11/16] 0.0, 128
        %2210 = vxpose.xlu0.b32.cont [12/16] 0.0, 128
        %2211 = vxpose.xlu0.b32.cont [13/16] 0.0, 128
        %2212 = vxpose.xlu0.b32.cont [14/16] 0.0, 128
        %2213 = vxpose.xlu0.b32.cont [15/16] 0.0, 128
        %2214 = vxpose.xlu0.b32.end [16/16] 0.0, 128
        %v2215 = vpop.trf.xlu0
        %v2216 = vpop.trf.xlu0
        %v2217 = vpop.trf.xlu0
        %v2218 = vpop.trf.xlu0
        %v2219 = vpop.trf.xlu0
        %v2220 = vpop.trf.xlu0
        %v2221 = vpop.trf.xlu0
        %v2222 = vpop.trf.xlu0
        %v2223 = vpop.trf.xlu0
        %v2224 = vpop.trf.xlu0
        %v2225 = vpop.trf.xlu0
        %v2226 = vpop.trf.xlu0
        %v2227 = vpop.trf.xlu0
        %v2228 = vpop.trf.xlu0
        %v2229 = vpop.trf.xlu0
        %v2230 = vpop.trf.xlu0
        %2231 = vxpose.xlu0.b32.start [1/16] %v2116, 128
        %2232 = vxpose.xlu0.b32.cont [2/16] 0.0, 128
        %2233 = vxpose.xlu0.b32.cont [3/16] 0.0, 128
        %2234 = vxpose.xlu0.b32.cont [4/16] 0.0, 128
        %2235 = vxpose.xlu0.b32.cont [5/16] 0.0, 128
        %2236 = vxpose.xlu0.b32.cont [6/16] 0.0, 128
        %2237 = vxpose.xlu0.b32.cont [7/16] 0.0, 128
        %2238 = vxpose.xlu0.b32.cont [8/16] 0.0, 128
        %2239 = vxpose.xlu0.b32.cont [9/16] 0.0, 128
        %2240 = vxpose.xlu0.b32.cont [10/16] 0.0, 128
        %2241 = vxpose.xlu0.b32.cont [11/16] 0.0, 128
        %2242 = vxpose.xlu0.b32.cont [12/16] 0.0, 128
        %2243 = vxpose.xlu0.b32.cont [13/16] 0.0, 128
        %2244 = vxpose.xlu0.b32.cont [14/16] 0.0, 128
        %2245 = vxpose.xlu0.b32.cont [15/16] 0.0, 128
        %2246 = vxpose.xlu0.b32.end [16/16] 0.0, 128
        %v2247 = vpop.trf.xlu0
        %v2248 = vpop.trf.xlu0
        %v2249 = vpop.trf.xlu0
        %v2250 = vpop.trf.xlu0
        %v2251 = vpop.trf.xlu0
        %v2252 = vpop.trf.xlu0
        %v2253 = vpop.trf.xlu0
        %v2254 = vpop.trf.xlu0
        %v2255 = vpop.trf.xlu0
        %v2256 = vpop.trf.xlu0
        %v2257 = vpop.trf.xlu0
        %v2258 = vpop.trf.xlu0
        %v2259 = vpop.trf.xlu0
        %v2260 = vpop.trf.xlu0
        %v2261 = vpop.trf.xlu0
        %v2262 = vpop.trf.xlu0
        %2263 = vxpose.xlu0.b32.start [1/16] %v2162, 128
        %2264 = vxpose.xlu0.b32.cont [2/16] 0.0, 128
        %2265 = vxpose.xlu0.b32.cont [3/16] 0.0, 128
        %2266 = vxpose.xlu0.b32.cont [4/16] 0.0, 128
        %2267 = vxpose.xlu0.b32.cont [5/16] 0.0, 128
        %2268 = vxpose.xlu0.b32.cont [6/16] 0.0, 128
        %2269 = vxpose.xlu0.b32.cont [7/16] 0.0, 128
        %2270 = vxpose.xlu0.b32.cont [8/16] 0.0, 128
        %2271 = vxpose.xlu0.b32.cont [9/16] 0.0, 128
        %2272 = vxpose.xlu0.b32.cont [10/16] 0.0, 128
        %2273 = vxpose.xlu0.b32.cont [11/16] 0.0, 128
        %2274 = vxpose.xlu0.b32.cont [12/16] 0.0, 128
        %2275 = vxpose.xlu0.b32.cont [13/16] 0.0, 128
        %2276 = vxpose.xlu0.b32.cont [14/16] 0.0, 128
        %2277 = vxpose.xlu0.b32.cont [15/16] 0.0, 128
        %2278 = vxpose.xlu0.b32.end [16/16] 0.0, 128
        %v2279 = vpop.trf.xlu0
        %v2280 = vpop.trf.xlu0
        %v2281 = vpop.trf.xlu0
        %v2282 = vpop.trf.xlu0
        %v2283 = vpop.trf.xlu0
        %v2284 = vpop.trf.xlu0
        %v2285 = vpop.trf.xlu0
        %v2286 = vpop.trf.xlu0
        %v2287 = vpop.trf.xlu0
        %v2288 = vpop.trf.xlu0
        %v2289 = vpop.trf.xlu0
        %v2290 = vpop.trf.xlu0
        %v2291 = vpop.trf.xlu0
        %v2292 = vpop.trf.xlu0
        %v2293 = vpop.trf.xlu0
        %v2294 = vpop.trf.xlu0
        %v2295 = vcombine.low %v2183, %v2247
        %v2296 = vcombine.high %v2183, %v2247
        %v2298 = vunpack.c.l.s4 1983009808
        %v2299 = vunpack.c.0.s8 %v2298
        %v2300 = vlaneseq
        %v2301 = vshrl.u32 %v2300, 7
        %v2302 = vsub.s32 %v2299, %v2301
        %v2303 = vrot.slane %v2295, %v2302
        %v2305 = vunpack.c.l.s4 1983009808
        %v2306 = vunpack.c.0.s8 %v2305
        %v2307 = vlaneseq
        %v2308 = vshrl.u32 %v2307, 7
        %v2309 = vsub.s32 %v2306, %v2308
        %v2310 = vrot.slane %v2296, %v2309
        %v2311 = vcombine.low %v2215, %v2279
        %v2312 = vcombine.high %v2215, %v2279
        %v2314 = vunpack.c.l.s4 1983009808
        %v2315 = vunpack.c.0.s8 %v2314
        %v2316 = vlaneseq
        %v2317 = vshrl.u32 %v2316, 7
        %v2318 = vsub.s32 %v2315, %v2317
        %v2319 = vrot.slane %v2311, %v2318
        %v2321 = vunpack.c.l.s4 1983009808
        %v2322 = vunpack.c.0.s8 %v2321
        %v2323 = vlaneseq
        %v2324 = vshrl.u32 %v2323, 7
        %v2325 = vsub.s32 %v2322, %v2324
        %v2326 = vrot.slane %v2312, %v2325
        %v2327 = vcombine.low %v2303, %v2319
        %v2328 = vcombine.high %v2303, %v2319
        %v2330 = vunpack.c.l.s4 1934713408
        %v2331 = vunpack.c.0.s8 %v2330
        %v2332 = vlaneseq
        %v2333 = vshrl.u32 %v2332, 7
        %v2334 = vsub.s32 %v2331, %v2333
        %v2335 = vrot.slane %v2327, %v2334
        %v2337 = vunpack.c.l.s4 1934713408
        %v2338 = vunpack.c.0.s8 %v2337
        %v2339 = vlaneseq
        %v2340 = vshrl.u32 %v2339, 7
        %v2341 = vsub.s32 %v2338, %v2340
        %v2342 = vrot.slane %v2328, %v2341
        %v2343 = vcombine.low %v2310, %v2326
        %v2344 = vcombine.high %v2310, %v2326
        %v2346 = vunpack.c.l.s4 1934713408
        %v2347 = vunpack.c.0.s8 %v2346
        %v2348 = vlaneseq
        %v2349 = vshrl.u32 %v2348, 7
        %v2350 = vsub.s32 %v2347, %v2349
        %v2351 = vrot.slane %v2343, %v2350
        %v2353 = vunpack.c.l.s4 1934713408
        %v2354 = vunpack.c.0.s8 %v2353
        %v2355 = vlaneseq
        %v2356 = vshrl.u32 %v2355, 7
        %v2357 = vsub.s32 %v2354, %v2356
        %v2358 = vrot.slane %v2344, %v2357
        %v2359 = vcombine.high %v2335, 0.0
        %v2360 = vcombine.high %v2342, 0.0
        %v2361 = vcombine.high %v2351, 0.0
        %v2362 = vcombine.high %v2358, 0.0
        %v2363 = vcombine.low %v2335, %v2342
        %v2365 = vunpack.c.l.s4 1983009808
        %v2366 = vunpack.c.0.s8 %v2365
        %v2367 = vlaneseq
        %v2368 = vshrl.u32 %v2367, 7
        %v2369 = vsub.s32 %v2366, %v2368
        %v2370 = vrot.slane %v2363, %v2369
        %v2371 = vcombine.low %v2359, %v2360
        %v2373 = vunpack.c.l.s4 1983009808
        %v2374 = vunpack.c.0.s8 %v2373
        %v2375 = vlaneseq
        %v2376 = vshrl.u32 %v2375, 7
        %v2377 = vsub.s32 %v2374, %v2376
        %v2378 = vrot.slane %v2371, %v2377
        %v2379 = vcombine.low %v2351, %v2358
        %v2381 = vunpack.c.l.s4 1983009808
        %v2382 = vunpack.c.0.s8 %v2381
        %v2383 = vlaneseq
        %v2384 = vshrl.u32 %v2383, 7
        %v2385 = vsub.s32 %v2382, %v2384
        %v2386 = vrot.slane %v2379, %v2385
        %v2387 = vcombine.low %v2361, %v2362
        %v2389 = vunpack.c.l.s4 1983009808
        %v2390 = vunpack.c.0.s8 %v2389
        %v2391 = vlaneseq
        %v2392 = vshrl.u32 %v2391, 7
        %v2393 = vsub.s32 %v2390, %v2392
        %v2394 = vrot.slane %v2387, %v2393
        %v2395 = vcombine.low %v2370, %v2378
        %v2396 = vcombine.high %v2370, %v2378
        %v2398 = vunpack.c.l.s4 1934713408
        %v2399 = vunpack.c.0.s8 %v2398
        %v2400 = vlaneseq
        %v2401 = vshrl.u32 %v2400, 7
        %v2402 = vsub.s32 %v2399, %v2401
        %v2403 = vrot.slane %v2395, %v2402
        %v2405 = vunpack.c.l.s4 1934713408
        %v2406 = vunpack.c.0.s8 %v2405
        %v2407 = vlaneseq
        %v2408 = vshrl.u32 %v2407, 7
        %v2409 = vsub.s32 %v2406, %v2408
        %v2410 = vrot.slane %v2396, %v2409
        %v2411 = vcombine.low %v2386, %v2394
        %v2412 = vcombine.high %v2386, %v2394
        %v2414 = vunpack.c.l.s4 1934713408
        %v2415 = vunpack.c.0.s8 %v2414
        %v2416 = vlaneseq
        %v2417 = vshrl.u32 %v2416, 7
        %v2418 = vsub.s32 %v2415, %v2417
        %v2419 = vrot.slane %v2411, %v2418
        %v2421 = vunpack.c.l.s4 1934713408
        %v2422 = vunpack.c.0.s8 %v2421
        %v2423 = vlaneseq
        %v2424 = vshrl.u32 %v2423, 7
        %v2425 = vsub.s32 %v2422, %v2424
        %v2426 = vrot.slane %v2412, %v2425
        %v2427 = vcombine.low %v2403, %v2419
        %v2428 = vcombine.high %v2403, %v2419
        %v2429 = vcombine.low %v2410, %v2426
        %v2430 = vcombine.high %v2410, %v2426
        %2432 = vrot.lane.b32.xlu0 %v2428, 8
        %v2433 = vpop.permute.xlu0 %2432
        %2436 = vrot.lane.b32.xlu0 %v2429, 16
        %v2437 = vpop.permute.xlu0 %2436
        %2440 = vrot.lane.b32.xlu0 %v2430, 24
        %v2441 = vpop.permute.xlu0 %2440
        %v2443 = vsel %vm1331, %v2427, %v2433
        %vm2444 = vcmask 130048
        %v2445 = vsel %vm2444, %v2443, %v2437
        %vm2446 = vcmask 195584
        %v2447 = vsel %vm2446, %v2445, %v2441
        %v2448 = vpack.c.bf16 %v2447, %v2447
        %v2449 = vld [vmem:[%s7] sm:$0xf]
        %v2450 = vld [vmem:[%s7 + $0x4] sm:$0xf]
        %v2451 = vld [vmem:[%s7 + $0x8] sm:$0xf]
        %v2452 = vld [vmem:[%s7 + $0xc] sm:$0xf]
        %v2453 = vlaneseq
        %v2454 = vshrl.u32 %v2453, 7
        %v2455 = vsub.s32 1, %v2454
        %v2456 = vrot.slane %v518, %v2455
        %v2461 = vunpack.c.l.b16 %v2449
        %v2462 = vunpack.c.l.b16 %v2450
        %v2463 = vunpack.c.l.b16 %v2451
        %v2464 = vunpack.c.l.b16 %v2452
        %v2465 = vpack.c.b16 %v2462, %v2461
        %v2466 = vpack.c.b16 %v2464, %v2463
        %v2470 = vsel %vm490, %v2448, 0
        %2472 = vmatprep.subr.bf16.mxu0 0
        %2473 = vmatpush1.bf16.msra.mxu0 0
        %2474 = vmatprep.subr.bf16.mxu0 0
        %2475 = vmatpush1.bf16.msra.mxu0 0
        %2476 = vmatprep.subr.bf16.mxu0 0
        %2477 = vmatpush1.bf16.msra.mxu0 0
        %2478 = vmatprep.subr.bf16.mxu0 0
        %2479 = vmatpush1.bf16.msra.mxu0 0
        %2480 = vmatprep.subr.bf16.mxu0 0
        %2481 = vmatpush1.bf16.msra.mxu0 0
        %2482 = vmatprep.subr.bf16.mxu0 0
        %2483 = vmatpush1.bf16.msra.mxu0 0
        %2484 = vmatprep.subr.bf16.mxu0 0
        %2485 = vmatpush1.bf16.msra.mxu0 %v2466
        %2486 = vmatprep.subr.bf16.mxu0 0
        %2487 = vmatpush1.bf16.msra.mxu0 %v2465
        %2488 = vmatprep.subr.bf16.mxu0 0
        %2489 = vmatpush2.bf16.msra.mxu0 0
        %2490 = vmatprep.subr.bf16.mxu0 0
        %2491 = vmatpush2.bf16.msra.mxu0 0
        %2492 = vmatprep.subr.bf16.mxu0 0
        %2493 = vmatpush2.bf16.msra.mxu0 0
        %2494 = vmatprep.subr.bf16.mxu0 0
        %2495 = vmatpush2.bf16.msra.mxu0 0
        %2496 = vmatprep.subr.bf16.mxu0 0
        %2497 = vmatpush2.bf16.msra.mxu0 0
        %2498 = vmatprep.subr.bf16.mxu0 0
        %2499 = vmatpush2.bf16.msra.mxu0 0
        %2500 = vmatprep.subr.bf16.mxu0 0
        %2501 = vmatpush2.bf16.msra.mxu0 0
        %2502 = vmatprep.subr.bf16.mxu0 0
        %2503 = vmatpush2.bf16.msra.mxu0 0
        %2504 = vmatprep.mubr.bf16.mxu0 0
        %2505 = vmatmul.mubr.bf16.gmra.mxu0 %v2470
        %v2506 = vpop.f32.mrf.mxu0
        %v2507 = vadd.f32 %v2456, %v2506
        %v2508 = vpop.f32.mrf.mxu0
        %v2509 = vpop.f32.mrf.mxu0
        %v2510 = vpop.f32.mrf.mxu0
        %2511 = vdwg.mxu0
        %v2512 = vadd.f32 %v2507, %v514
        %v2513 = vsel %vm490, %v2512, 0.0
        %2514 = vadd.xlane.f32.xlu0 %v2513
        %v2515 = vpop.xlane.xlu0 %2514
        %v2516 = vmul.f32 %v2515, %v494
        %v2517 = vsub.f32 %v2512, %v2516
        %v2518 = vmul.f32 %v2517, %v2517
        %v2519 = vsel %vm490, %v2518, 0.0
        %2520 = vadd.xlane.f32.xlu0 %v2519
        %v2521 = vpop.xlane.xlu0 %2520
        %v2522 = vmul.f32 %v2521, %v494
        %v2523 = vadd.f32 %v2522, 1e-12
        %v2524 = vrsqrt.pop %v2523
        %v2525 = vmul.f32 %v2517, %v2524
        %v2526 = vlaneseq
        %v2527 = vshrl.u32 %v2526, 7
        %v2528 = vsub.s32 2, %v2527
        %v2529 = vrot.slane %v518, %v2528
        %v2530 = vmul.f32 %v2525, %v2529
        %v2531 = vlaneseq
        %v2532 = vshrl.u32 %v2531, 7
        %v2533 = vsub.s32 3, %v2532
        %v2534 = vrot.slane %v518, %v2533
        %v2535 = vadd.f32 %v2530, %v2534
        %v2536 = vpack.c.bf16 %v2535, %v2535
        %v2537 = vld [vmem:[%s8] sm:$0xf]
        %v2538 = vld [vmem:[%s8 + $0x4] sm:$0xf]
        %v2539 = vld [vmem:[%s8 + $0x8] sm:$0xf]
        %v2540 = vld [vmem:[%s8 + $0xc] sm:$0xf]
        %v2541 = vlaneseq
        %v2542 = vshrl.u32 %v2541, 7
        %v2543 = vsub.s32 4, %v2542
        %v2544 = vrot.slane %v518, %v2543
        %v2549 = vunpack.c.l.b16 %v2537
        %v2550 = vunpack.c.l.b16 %v2538
        %v2551 = vunpack.c.l.b16 %v2539
        %v2552 = vunpack.c.l.b16 %v2540
        %v2553 = vpack.c.b16 %v2550, %v2549
        %v2554 = vpack.c.b16 %v2552, %v2551
        %v2558 = vsel %vm490, %v2536, 0
        %2560 = vmatprep.subr.bf16.mxu0 0
        %2561 = vmatpush1.bf16.msra.mxu0 0
        %2562 = vmatprep.subr.bf16.mxu0 0
        %2563 = vmatpush1.bf16.msra.mxu0 0
        %2564 = vmatprep.subr.bf16.mxu0 0
        %2565 = vmatpush1.bf16.msra.mxu0 0
        %2566 = vmatprep.subr.bf16.mxu0 0
        %2567 = vmatpush1.bf16.msra.mxu0 0
        %2568 = vmatprep.subr.bf16.mxu0 0
        %2569 = vmatpush1.bf16.msra.mxu0 0
        %2570 = vmatprep.subr.bf16.mxu0 0
        %2571 = vmatpush1.bf16.msra.mxu0 0
        %2572 = vmatprep.subr.bf16.mxu0 0
        %2573 = vmatpush1.bf16.msra.mxu0 %v2554
        %2574 = vmatprep.subr.bf16.mxu0 0
        %2575 = vmatpush1.bf16.msra.mxu0 %v2553
        %2576 = vmatprep.subr.bf16.mxu0 0
        %2577 = vmatpush2.bf16.msra.mxu0 0
        %2578 = vmatprep.subr.bf16.mxu0 0
        %2579 = vmatpush2.bf16.msra.mxu0 0
        %2580 = vmatprep.subr.bf16.mxu0 0
        %2581 = vmatpush2.bf16.msra.mxu0 0
        %2582 = vmatprep.subr.bf16.mxu0 0
        %2583 = vmatpush2.bf16.msra.mxu0 0
        %2584 = vmatprep.subr.bf16.mxu0 0
        %2585 = vmatpush2.bf16.msra.mxu0 0
        %2586 = vmatprep.subr.bf16.mxu0 0
        %2587 = vmatpush2.bf16.msra.mxu0 0
        %2588 = vmatprep.subr.bf16.mxu0 0
        %2589 = vmatpush2.bf16.msra.mxu0 0
        %2590 = vmatprep.subr.bf16.mxu0 0
        %2591 = vmatpush2.bf16.msra.mxu0 0
        %2592 = vmatprep.mubr.bf16.mxu0 0
        %2593 = vmatmul.mubr.bf16.gmra.mxu0 %v2558
        %v2594 = vpop.f32.mrf.mxu0
        %v2595 = vadd.f32 %v2544, %v2594
        %v2596 = vpop.f32.mrf.mxu0
        %v2597 = vpop.f32.mrf.mxu0
        %v2598 = vpop.f32.mrf.mxu0
        %2599 = vdwg.mxu0
        %v2600 = vmul.f32 %v2595, 0.5
        %v2601 = vmul.f32 %v2595, 0.044715
        %v2602 = vmul.f32 %v2601, %v2595
        %v2603 = vmul.f32 %v2602, %v2595
        %v2604 = vadd.f32 %v2595, %v2603
        %v2605 = vmul.f32 %v2604, 0.7978846
        %v2606 = vtanh.pop %v2605
        %v2607 = vadd.f32 %v2606, 1.0
        %v2608 = vmul.f32 %v2600, %v2607
        %v2609 = vpack.c.bf16 %v2608, %v2608
        %v2610 = vld [vmem:[%s9] sm:$0xf]
        %v2611 = vld [vmem:[%s9 + $0x4] sm:$0xf]
        %v2612 = vld [vmem:[%s9 + $0x8] sm:$0xf]
        %v2613 = vld [vmem:[%s9 + $0xc] sm:$0xf]
        %v2614 = vld [vmem:[%s9 + $0x10] sm:$0xf]
        %v2615 = vld [vmem:[%s9 + $0x14] sm:$0xf]
        %v2616 = vld [vmem:[%s9 + $0x18] sm:$0xf]
        %v2617 = vld [vmem:[%s9 + $0x1c] sm:$0xf]
        %v2618 = vld [vmem:[%s9 + $0x20] sm:$0xf]
        %v2619 = vld [vmem:[%s9 + $0x24] sm:$0xf]
        %v2620 = vld [vmem:[%s9 + $0x28] sm:$0xf]
        %v2621 = vld [vmem:[%s9 + $0x2c] sm:$0xf]
        %v2622 = vld [vmem:[%s9 + $0x30] sm:$0xf]
        %v2623 = vld [vmem:[%s9 + $0x34] sm:$0xf]
        %v2624 = vld [vmem:[%s9 + $0x38] sm:$0xf]
        %v2625 = vld [vmem:[%s9 + $0x3c] sm:$0xf]
        %v2626 = vlaneseq
        %v2627 = vshrl.u32 %v2626, 7
        %v2628 = vsub.s32 5, %v2627
        %v2629 = vrot.slane %v518, %v2628
        %v2646 = vunpack.c.l.b16 %v2610
        %v2647 = vunpack.c.l.b16 %v2611
        %v2648 = vunpack.c.l.b16 %v2612
        %v2649 = vunpack.c.l.b16 %v2613
        %v2650 = vunpack.c.l.b16 %v2614
        %v2651 = vunpack.c.l.b16 %v2615
        %v2652 = vunpack.c.l.b16 %v2616
        %v2653 = vunpack.c.l.b16 %v2617
        %v2654 = vunpack.c.l.b16 %v2618
        %v2655 = vunpack.c.l.b16 %v2619
        %v2656 = vunpack.c.l.b16 %v2620
        %v2657 = vunpack.c.l.b16 %v2621
        %v2658 = vunpack.c.l.b16 %v2622
        %v2659 = vunpack.c.l.b16 %v2623
        %v2660 = vunpack.c.l.b16 %v2624
        %v2661 = vunpack.c.l.b16 %v2625
        %v2662 = vpack.c.b16 %v2647, %v2646
        %v2663 = vpack.c.b16 %v2649, %v2648
        %v2664 = vpack.c.b16 %v2651, %v2650
        %v2665 = vpack.c.b16 %v2653, %v2652
        %v2666 = vpack.c.b16 %v2655, %v2654
        %v2667 = vpack.c.b16 %v2657, %v2656
        %v2668 = vpack.c.b16 %v2659, %v2658
        %v2669 = vpack.c.b16 %v2661, %v2660
        %2678 = vmatprep.subr.bf16.mxu0 0
        %2679 = vmatpush1.bf16.msra.mxu0 %v2669
        %2680 = vmatprep.subr.bf16.mxu0 0
        %2681 = vmatpush1.bf16.msra.mxu0 %v2668
        %2682 = vmatprep.subr.bf16.mxu0 0
        %2683 = vmatpush1.bf16.msra.mxu0 %v2667
        %2684 = vmatprep.subr.bf16.mxu0 0
        %2685 = vmatpush1.bf16.msra.mxu0 %v2666
        %2686 = vmatprep.subr.bf16.mxu0 0
        %2687 = vmatpush1.bf16.msra.mxu0 %v2665
        %2688 = vmatprep.subr.bf16.mxu0 0
        %2689 = vmatpush1.bf16.msra.mxu0 %v2664
        %2690 = vmatprep.subr.bf16.mxu0 0
        %2691 = vmatpush1.bf16.msra.mxu0 %v2663
        %2692 = vmatprep.subr.bf16.mxu0 0
        %2693 = vmatpush1.bf16.msra.mxu0 %v2662
        %2694 = vmatprep.subr.bf16.mxu0 0
        %2695 = vmatpush2.bf16.msra.mxu0 0
        %2696 = vmatprep.subr.bf16.mxu0 0
        %2697 = vmatpush2.bf16.msra.mxu0 0
        %2698 = vmatprep.subr.bf16.mxu0 0
        %2699 = vmatpush2.bf16.msra.mxu0 0
        %2700 = vmatprep.subr.bf16.mxu0 0
        %2701 = vmatpush2.bf16.msra.mxu0 0
        %2702 = vmatprep.subr.bf16.mxu0 0
        %2703 = vmatpush2.bf16.msra.mxu0 0
        %2704 = vmatprep.subr.bf16.mxu0 0
        %2705 = vmatpush2.bf16.msra.mxu0 0
        %2706 = vmatprep.subr.bf16.mxu0 0
        %2707 = vmatpush2.bf16.msra.mxu0 0
        %2708 = vmatprep.subr.bf16.mxu0 0
        %2709 = vmatpush2.bf16.msra.mxu0 0
        %2710 = vmatprep.mubr.bf16.mxu0 0
        %2711 = vmatmul.mubr.bf16.gmra.mxu0 %v2609
        %v2712 = vpop.f32.mrf.mxu0
        %v2713 = vadd.f32 %v2629, %v2712
        %v2714 = vpop.f32.mrf.mxu0
        %v2715 = vpop.f32.mrf.mxu0
        %v2716 = vpop.f32.mrf.mxu0
        %2717 = vdwg.mxu0
        %v2718 = vadd.f32 %v2713, %v2535
        %v2719 = vsel %vm490, %v2718, 0.0
        %2720 = vadd.xlane.f32.xlu0 %v2719
        %v2721 = vpop.xlane.xlu0 %2720
        %v2722 = vmul.f32 %v2721, %v494
        %v2723 = vsub.f32 %v2718, %v2722
        %v2724 = vmul.f32 %v2723, %v2723
        %v2725 = vsel %vm490, %v2724, 0.0
        %2726 = vadd.xlane.f32.xlu0 %v2725
        %v2727 = vpop.xlane.xlu0 %2726
        %v2728 = vmul.f32 %v2727, %v494
        %v2729 = vadd.f32 %v2728, 1e-12
        %v2730 = vrsqrt.pop %v2729
        %v2731 = vmul.f32 %v2723, %v2730
        %v2732 = vlaneseq
        %v2733 = vshrl.u32 %v2732, 7
        %v2734 = vsub.s32 6, %v2733
        %v2735 = vrot.slane %v518, %v2734
        %v2736 = vmul.f32 %v2731, %v2735
        %v2737 = vlaneseq
        %v2738 = vshrl.u32 %v2737, 7
        %v2739 = vsub.s32 7, %v2738
        %v2740 = vrot.slane %v518, %v2739
        %v2741 = vadd.f32 %v2736, %v2740
        %s2742 = scalar_lea.vmem %s5, 8
        %v2743 = vld [vmem:[%s2742] sm:$0xff]
        %v2744 = vpack.c.bf16 %v2741, %v2741
        %s2745 = scalar_lea.vmem %s6, 16
        %v2746 = vld [vmem:[%s2745] sm:$0xf]
        %v2747 = vld [vmem:[%s2745 + $0x4] sm:$0xf]
        %v2748 = vld [vmem:[%s2745 + $0x8] sm:$0xf]
        %v2749 = vld [vmem:[%s2745 + $0xc] sm:$0xf]
        %v2750 = vlaneseq
        %v2751 = vshrl.u32 %v2750, 7
        %v2752 = vsub.s32 0, %v2751
        %v2753 = vrot.slane %v2743, %v2752
        %v2758 = vunpack.c.l.b16 %v2746
        %v2759 = vunpack.c.l.b16 %v2747
        %v2760 = vunpack.c.l.b16 %v2748
        %v2761 = vunpack.c.l.b16 %v2749
        %v2762 = vpack.c.b16 %v2759, %v2758
        %v2763 = vpack.c.b16 %v2761, %v2760
        %v2767 = vsel %vm490, %v2744, 0
        %2769 = vmatprep.subr.bf16.mxu0 0
        %2770 = vmatpush1.bf16.msra.mxu0 0
        %2771 = vmatprep.subr.bf16.mxu0 0
        %2772 = vmatpush1.bf16.msra.mxu0 0
        %2773 = vmatprep.subr.bf16.mxu0 0
        %2774 = vmatpush1.bf16.msra.mxu0 0
        %2775 = vmatprep.subr.bf16.mxu0 0
        %2776 = vmatpush1.bf16.msra.mxu0 0
        %2777 = vmatprep.subr.bf16.mxu0 0
        %2778 = vmatpush1.bf16.msra.mxu0 0
        %2779 = vmatprep.subr.bf16.mxu0 0
        %2780 = vmatpush1.bf16.msra.mxu0 0
        %2781 = vmatprep.subr.bf16.mxu0 0
        %2782 = vmatpush1.bf16.msra.mxu0 %v2763
        %2783 = vmatprep.subr.bf16.mxu0 0
        %2784 = vmatpush1.bf16.msra.mxu0 %v2762
        %2785 = vmatprep.subr.bf16.mxu0 0
        %2786 = vmatpush2.bf16.msra.mxu0 0
        %2787 = vmatprep.subr.bf16.mxu0 0
        %2788 = vmatpush2.bf16.msra.mxu0 0
        %2789 = vmatprep.subr.bf16.mxu0 0
        %2790 = vmatpush2.bf16.msra.mxu0 0
        %2791 = vmatprep.subr.bf16.mxu0 0
        %2792 = vmatpush2.bf16.msra.mxu0 0
        %2793 = vmatprep.subr.bf16.mxu0 0
        %2794 = vmatpush2.bf16.msra.mxu0 0
        %2795 = vmatprep.subr.bf16.mxu0 0
        %2796 = vmatpush2.bf16.msra.mxu0 0
        %2797 = vmatprep.subr.bf16.mxu0 0
        %2798 = vmatpush2.bf16.msra.mxu0 0
        %2799 = vmatprep.subr.bf16.mxu0 0
        %2800 = vmatpush2.bf16.msra.mxu0 0
        %2801 = vmatprep.mubr.bf16.mxu0 0
        %2802 = vmatmul.mubr.bf16.gmra.mxu0 %v2767
        %v2803 = vpop.f32.mrf.mxu0
        %v2804 = vadd.f32 %v2753, %v2803
        %v2805 = vpop.f32.mrf.mxu0
        %v2806 = vpop.f32.mrf.mxu0
        %v2807 = vpop.f32.mrf.mxu0
        %2808 = vdwg.mxu0
        %2810 = vrot.lane.b32.xlu0 %v2804, 120
        %v2811 = vpop.permute.xlu0 %2810
        %2813 = vrot.lane.b32.xlu0 %v2804, 112
        %v2814 = vpop.permute.xlu0 %2813
        %2816 = vrot.lane.b32.xlu0 %v2804, 104
        %v2817 = vpop.permute.xlu0 %2816
        %v2819 = vcombine.low %v2804, %v2814
        %v2820 = vcombine.high %v2804, %v2814
        %v2822 = vunpack.c.l.s4 1983009808
        %v2823 = vunpack.c.0.s8 %v2822
        %v2824 = vlaneseq
        %v2825 = vshrl.u32 %v2824, 7
        %v2826 = vsub.s32 %v2823, %v2825
        %v2827 = vrot.slane %v2819, %v2826
        %v2829 = vunpack.c.l.s4 1983009808
        %v2830 = vunpack.c.0.s8 %v2829
        %v2831 = vlaneseq
        %v2832 = vshrl.u32 %v2831, 7
        %v2833 = vsub.s32 %v2830, %v2832
        %v2834 = vrot.slane %v2820, %v2833
        %v2835 = vcombine.low %v2811, %v2817
        %v2836 = vcombine.high %v2811, %v2817
        %v2838 = vunpack.c.l.s4 1983009808
        %v2839 = vunpack.c.0.s8 %v2838
        %v2840 = vlaneseq
        %v2841 = vshrl.u32 %v2840, 7
        %v2842 = vsub.s32 %v2839, %v2841
        %v2843 = vrot.slane %v2835, %v2842
        %v2845 = vunpack.c.l.s4 1983009808
        %v2846 = vunpack.c.0.s8 %v2845
        %v2847 = vlaneseq
        %v2848 = vshrl.u32 %v2847, 7
        %v2849 = vsub.s32 %v2846, %v2848
        %v2850 = vrot.slane %v2836, %v2849
        %v2851 = vcombine.low %v2827, %v2843
        %v2852 = vcombine.high %v2827, %v2843
        %v2854 = vunpack.c.l.s4 1934713408
        %v2855 = vunpack.c.0.s8 %v2854
        %v2856 = vlaneseq
        %v2857 = vshrl.u32 %v2856, 7
        %v2858 = vsub.s32 %v2855, %v2857
        %v2859 = vrot.slane %v2851, %v2858
        %v2861 = vunpack.c.l.s4 1934713408
        %v2862 = vunpack.c.0.s8 %v2861
        %v2863 = vlaneseq
        %v2864 = vshrl.u32 %v2863, 7
        %v2865 = vsub.s32 %v2862, %v2864
        %v2866 = vrot.slane %v2852, %v2865
        %v2867 = vcombine.low %v2834, %v2850
        %v2868 = vcombine.high %v2834, %v2850
        %v2870 = vunpack.c.l.s4 1934713408
        %v2871 = vunpack.c.0.s8 %v2870
        %v2872 = vlaneseq
        %v2873 = vshrl.u32 %v2872, 7
        %v2874 = vsub.s32 %v2871, %v2873
        %v2875 = vrot.slane %v2867, %v2874
        %v2877 = vunpack.c.l.s4 1934713408
        %v2878 = vunpack.c.0.s8 %v2877
        %v2879 = vlaneseq
        %v2880 = vshrl.u32 %v2879, 7
        %v2881 = vsub.s32 %v2878, %v2880
        %v2882 = vrot.slane %v2868, %v2881
        %v2883 = vcombine.high %v2859, 0.0
        %v2884 = vcombine.high %v2866, 0.0
        %v2885 = vcombine.high %v2875, 0.0
        %v2886 = vcombine.high %v2882, 0.0
        %v2887 = vpack.c.bf16 %v2859, %v2859
        %v2888 = vpack.c.bf16 %v2883, %v2883
        %v2889 = vpack.c.bf16 %v2866, %v2866
        %v2890 = vpack.c.bf16 %v2884, %v2884
        %v2891 = vpack.c.bf16 %v2875, %v2875
        %v2892 = vpack.c.bf16 %v2885, %v2885
        %v2893 = vpack.c.bf16 %v2882, %v2882
        %v2894 = vpack.c.bf16 %v2886, %v2886
        %2895 = vrot.lane.b32.xlu0 %v2804, 96
        %v2896 = vpop.permute.xlu0 %2895
        %2897 = vrot.lane.b32.xlu0 %v2811, 96
        %v2898 = vpop.permute.xlu0 %2897
        %2899 = vrot.lane.b32.xlu0 %v2814, 96
        %v2900 = vpop.permute.xlu0 %2899
        %2901 = vrot.lane.b32.xlu0 %v2817, 96
        %v2902 = vpop.permute.xlu0 %2901
        %v2907 = vcombine.low %v2896, %v2900
        %v2908 = vcombine.high %v2896, %v2900
        %v2910 = vunpack.c.l.s4 1983009808
        %v2911 = vunpack.c.0.s8 %v2910
        %v2912 = vlaneseq
        %v2913 = vshrl.u32 %v2912, 7
        %v2914 = vsub.s32 %v2911, %v2913
        %v2915 = vrot.slane %v2907, %v2914
        %v2917 = vunpack.c.l.s4 1983009808
        %v2918 = vunpack.c.0.s8 %v2917
        %v2919 = vlaneseq
        %v2920 = vshrl.u32 %v2919, 7
        %v2921 = vsub.s32 %v2918, %v2920
        %v2922 = vrot.slane %v2908, %v2921
        %v2923 = vcombine.low %v2898, %v2902
        %v2924 = vcombine.high %v2898, %v2902
        %v2926 = vunpack.c.l.s4 1983009808
        %v2927 = vunpack.c.0.s8 %v2926
        %v2928 = vlaneseq
        %v2929 = vshrl.u32 %v2928, 7
        %v2930 = vsub.s32 %v2927, %v2929
        %v2931 = vrot.slane %v2923, %v2930
        %v2933 = vunpack.c.l.s4 1983009808
        %v2934 = vunpack.c.0.s8 %v2933
        %v2935 = vlaneseq
        %v2936 = vshrl.u32 %v2935, 7
        %v2937 = vsub.s32 %v2934, %v2936
        %v2938 = vrot.slane %v2924, %v2937
        %v2939 = vcombine.low %v2915, %v2931
        %v2940 = vcombine.high %v2915, %v2931
        %v2942 = vunpack.c.l.s4 1934713408
        %v2943 = vunpack.c.0.s8 %v2942
        %v2944 = vlaneseq
        %v2945 = vshrl.u32 %v2944, 7
        %v2946 = vsub.s32 %v2943, %v2945
        %v2947 = vrot.slane %v2939, %v2946
        %v2949 = vunpack.c.l.s4 1934713408
        %v2950 = vunpack.c.0.s8 %v2949
        %v2951 = vlaneseq
        %v2952 = vshrl.u32 %v2951, 7
        %v2953 = vsub.s32 %v2950, %v2952
        %v2954 = vrot.slane %v2940, %v2953
        %v2955 = vcombine.low %v2922, %v2938
        %v2956 = vcombine.high %v2922, %v2938
        %v2958 = vunpack.c.l.s4 1934713408
        %v2959 = vunpack.c.0.s8 %v2958
        %v2960 = vlaneseq
        %v2961 = vshrl.u32 %v2960, 7
        %v2962 = vsub.s32 %v2959, %v2961
        %v2963 = vrot.slane %v2955, %v2962
        %v2965 = vunpack.c.l.s4 1934713408
        %v2966 = vunpack.c.0.s8 %v2965
        %v2967 = vlaneseq
        %v2968 = vshrl.u32 %v2967, 7
        %v2969 = vsub.s32 %v2966, %v2968
        %v2970 = vrot.slane %v2956, %v2969
        %v2971 = vcombine.high %v2947, 0.0
        %v2972 = vcombine.high %v2954, 0.0
        %v2973 = vcombine.high %v2963, 0.0
        %v2974 = vcombine.high %v2970, 0.0
        %v2975 = vpack.c.bf16 %v2947, %v2947
        %v2976 = vpack.c.bf16 %v2971, %v2971
        %v2977 = vpack.c.bf16 %v2954, %v2954
        %v2978 = vpack.c.bf16 %v2972, %v2972
        %v2979 = vpack.c.bf16 %v2963, %v2963
        %v2980 = vpack.c.bf16 %v2973, %v2973
        %v2981 = vpack.c.bf16 %v2970, %v2970
        %v2982 = vpack.c.bf16 %v2974, %v2974
        %2983 = vrot.lane.b32.xlu0 %v2804, 64
        %v2984 = vpop.permute.xlu0 %2983
        %2985 = vrot.lane.b32.xlu0 %v2811, 64
        %v2986 = vpop.permute.xlu0 %2985
        %2987 = vrot.lane.b32.xlu0 %v2814, 64
        %v2988 = vpop.permute.xlu0 %2987
        %2989 = vrot.lane.b32.xlu0 %v2817, 64
        %v2990 = vpop.permute.xlu0 %2989
        %v2995 = vcombine.low %v2984, %v2988
        %v2996 = vcombine.high %v2984, %v2988
        %v2998 = vunpack.c.l.s4 1983009808
        %v2999 = vunpack.c.0.s8 %v2998
        %v3000 = vlaneseq
        %v3001 = vshrl.u32 %v3000, 7
        %v3002 = vsub.s32 %v2999, %v3001
        %v3003 = vrot.slane %v2995, %v3002
        %v3005 = vunpack.c.l.s4 1983009808
        %v3006 = vunpack.c.0.s8 %v3005
        %v3007 = vlaneseq
        %v3008 = vshrl.u32 %v3007, 7
        %v3009 = vsub.s32 %v3006, %v3008
        %v3010 = vrot.slane %v2996, %v3009
        %v3011 = vcombine.low %v2986, %v2990
        %v3012 = vcombine.high %v2986, %v2990
        %v3014 = vunpack.c.l.s4 1983009808
        %v3015 = vunpack.c.0.s8 %v3014
        %v3016 = vlaneseq
        %v3017 = vshrl.u32 %v3016, 7
        %v3018 = vsub.s32 %v3015, %v3017
        %v3019 = vrot.slane %v3011, %v3018
        %v3021 = vunpack.c.l.s4 1983009808
        %v3022 = vunpack.c.0.s8 %v3021
        %v3023 = vlaneseq
        %v3024 = vshrl.u32 %v3023, 7
        %v3025 = vsub.s32 %v3022, %v3024
        %v3026 = vrot.slane %v3012, %v3025
        %v3027 = vcombine.low %v3003, %v3019
        %v3028 = vcombine.high %v3003, %v3019
        %v3030 = vunpack.c.l.s4 1934713408
        %v3031 = vunpack.c.0.s8 %v3030
        %v3032 = vlaneseq
        %v3033 = vshrl.u32 %v3032, 7
        %v3034 = vsub.s32 %v3031, %v3033
        %v3035 = vrot.slane %v3027, %v3034
        %v3037 = vunpack.c.l.s4 1934713408
        %v3038 = vunpack.c.0.s8 %v3037
        %v3039 = vlaneseq
        %v3040 = vshrl.u32 %v3039, 7
        %v3041 = vsub.s32 %v3038, %v3040
        %v3042 = vrot.slane %v3028, %v3041
        %v3043 = vcombine.low %v3010, %v3026
        %v3044 = vcombine.high %v3010, %v3026
        %v3046 = vunpack.c.l.s4 1934713408
        %v3047 = vunpack.c.0.s8 %v3046
        %v3048 = vlaneseq
        %v3049 = vshrl.u32 %v3048, 7
        %v3050 = vsub.s32 %v3047, %v3049
        %v3051 = vrot.slane %v3043, %v3050
        %v3053 = vunpack.c.l.s4 1934713408
        %v3054 = vunpack.c.0.s8 %v3053
        %v3055 = vlaneseq
        %v3056 = vshrl.u32 %v3055, 7
        %v3057 = vsub.s32 %v3054, %v3056
        %v3058 = vrot.slane %v3044, %v3057
        %v3059 = vcombine.high %v3035, 0.0
        %v3060 = vcombine.high %v3042, 0.0
        %v3061 = vcombine.high %v3051, 0.0
        %v3062 = vcombine.high %v3058, 0.0
        %v3063 = vpack.c.bf16 %v3035, %v3035
        %v3064 = vpack.c.bf16 %v3059, %v3059
        %v3065 = vpack.c.bf16 %v3042, %v3042
        %v3066 = vpack.c.bf16 %v3060, %v3060
        %v3067 = vpack.c.bf16 %v3051, %v3051
        %v3068 = vpack.c.bf16 %v3061, %v3061
        %v3069 = vpack.c.bf16 %v3058, %v3058
        %v3070 = vpack.c.bf16 %v3062, %v3062
        %v3071 = vcombine.low %v2887, %v2891
        %v3073 = vunpack.c.l.s4 1983009808
        %v3074 = vunpack.c.0.s8 %v3073
        %v3075 = vlaneseq
        %v3076 = vshrl.u32 %v3075, 7
        %v3077 = vsub.s32 %v3074, %v3076
        %v3078 = vrot.slane %v3071, %v3077
        %v3079 = vcombine.low %v2889, %v2893
        %v3081 = vunpack.c.l.s4 1983009808
        %v3082 = vunpack.c.0.s8 %v3081
        %v3083 = vlaneseq
        %v3084 = vshrl.u32 %v3083, 7
        %v3085 = vsub.s32 %v3082, %v3084
        %v3086 = vrot.slane %v3079, %v3085
        %v3087 = vcombine.low %v3078, %v3086
        %v3089 = vunpack.c.l.s4 1934713408
        %v3090 = vunpack.c.0.s8 %v3089
        %v3091 = vlaneseq
        %v3092 = vshrl.u32 %v3091, 7
        %v3093 = vsub.s32 %v3090, %v3092
        %v3094 = vrot.slane %v3087, %v3093
        %v3095 = vcombine.high %v3094, 0
        %v3096 = vcombine.low %v2888, %v2892
        %v3098 = vunpack.c.l.s4 1983009808
        %v3099 = vunpack.c.0.s8 %v3098
        %v3100 = vlaneseq
        %v3101 = vshrl.u32 %v3100, 7
        %v3102 = vsub.s32 %v3099, %v3101
        %v3103 = vrot.slane %v3096, %v3102
        %v3104 = vcombine.low %v2890, %v2894
        %v3106 = vunpack.c.l.s4 1983009808
        %v3107 = vunpack.c.0.s8 %v3106
        %v3108 = vlaneseq
        %v3109 = vshrl.u32 %v3108, 7
        %v3110 = vsub.s32 %v3107, %v3109
        %v3111 = vrot.slane %v3104, %v3110
        %v3112 = vcombine.low %v3103, %v3111
        %v3114 = vunpack.c.l.s4 1934713408
        %v3115 = vunpack.c.0.s8 %v3114
        %v3116 = vlaneseq
        %v3117 = vshrl.u32 %v3116, 7
        %v3118 = vsub.s32 %v3115, %v3117
        %v3119 = vrot.slane %v3112, %v3118
        %v3120 = vcombine.high %v3119, 0
        %v3123 = vpack.i.b16 %v3119, %v3094
        %v3124 = vshrl.u32 %v3094, 16
        %v3125 = vshrl.u32 %v3119, 16
        %v3126 = vpack.i.b16 %v3125, %v3124
        %v3129 = vpack.i.b16 %v3120, %v3095
        %v3130 = vshrl.u32 %v3095, 16
        %v3131 = vshrl.u32 %v3120, 16
        %v3132 = vpack.i.b16 %v3131, %v3130
        %3133 = vxpose.xlu0.c.b16.start [1/8] %v2975, 128
        %3134 = vxpose.xlu0.c.b16.cont [2/8] 0, 128
        %3135 = vxpose.xlu0.c.b16.cont [3/8] 0, 128
        %3136 = vxpose.xlu0.c.b16.cont [4/8] 0, 128
        %3137 = vxpose.xlu0.c.b16.cont [5/8] 0, 128
        %3138 = vxpose.xlu0.c.b16.cont [6/8] 0, 128
        %3139 = vxpose.xlu0.c.b16.cont [7/8] 0, 128
        %3140 = vxpose.xlu0.c.b16.end [8/8] 0, 128
        %v3141 = vpop.trf.xlu0
        %v3142 = vpop.trf.xlu0
        %v3143 = vpop.trf.xlu0
        %v3144 = vpop.trf.xlu0
        %v3145 = vpop.trf.xlu0
        %v3146 = vpop.trf.xlu0
        %v3147 = vpop.trf.xlu0
        %v3148 = vpop.trf.xlu0
        %3149 = vxpose.xlu0.c.b16.start [1/8] %v2976, 128
        %3150 = vxpose.xlu0.c.b16.cont [2/8] 0, 128
        %3151 = vxpose.xlu0.c.b16.cont [3/8] 0, 128
        %3152 = vxpose.xlu0.c.b16.cont [4/8] 0, 128
        %3153 = vxpose.xlu0.c.b16.cont [5/8] 0, 128
        %3154 = vxpose.xlu0.c.b16.cont [6/8] 0, 128
        %3155 = vxpose.xlu0.c.b16.cont [7/8] 0, 128
        %3156 = vxpose.xlu0.c.b16.end [8/8] 0, 128
        %v3157 = vpop.trf.xlu0
        %v3158 = vpop.trf.xlu0
        %v3159 = vpop.trf.xlu0
        %v3160 = vpop.trf.xlu0
        %v3161 = vpop.trf.xlu0
        %v3162 = vpop.trf.xlu0
        %v3163 = vpop.trf.xlu0
        %v3164 = vpop.trf.xlu0
        %3165 = vxpose.xlu0.c.b16.start [1/8] %v2977, 128
        %3166 = vxpose.xlu0.c.b16.cont [2/8] 0, 128
        %3167 = vxpose.xlu0.c.b16.cont [3/8] 0, 128
        %3168 = vxpose.xlu0.c.b16.cont [4/8] 0, 128
        %3169 = vxpose.xlu0.c.b16.cont [5/8] 0, 128
        %3170 = vxpose.xlu0.c.b16.cont [6/8] 0, 128
        %3171 = vxpose.xlu0.c.b16.cont [7/8] 0, 128
        %3172 = vxpose.xlu0.c.b16.end [8/8] 0, 128
        %v3173 = vpop.trf.xlu0
        %v3174 = vpop.trf.xlu0
        %v3175 = vpop.trf.xlu0
        %v3176 = vpop.trf.xlu0
        %v3177 = vpop.trf.xlu0
        %v3178 = vpop.trf.xlu0
        %v3179 = vpop.trf.xlu0
        %v3180 = vpop.trf.xlu0
        %3181 = vxpose.xlu0.c.b16.start [1/8] %v2978, 128
        %3182 = vxpose.xlu0.c.b16.cont [2/8] 0, 128
        %3183 = vxpose.xlu0.c.b16.cont [3/8] 0, 128
        %3184 = vxpose.xlu0.c.b16.cont [4/8] 0, 128
        %3185 = vxpose.xlu0.c.b16.cont [5/8] 0, 128
        %3186 = vxpose.xlu0.c.b16.cont [6/8] 0, 128
        %3187 = vxpose.xlu0.c.b16.cont [7/8] 0, 128
        %3188 = vxpose.xlu0.c.b16.end [8/8] 0, 128
        %v3189 = vpop.trf.xlu0
        %v3190 = vpop.trf.xlu0
        %v3191 = vpop.trf.xlu0
        %v3192 = vpop.trf.xlu0
        %v3193 = vpop.trf.xlu0
        %v3194 = vpop.trf.xlu0
        %v3195 = vpop.trf.xlu0
        %v3196 = vpop.trf.xlu0
        %3197 = vxpose.xlu0.c.b16.start [1/8] %v2979, 128
        %3198 = vxpose.xlu0.c.b16.cont [2/8] 0, 128
        %3199 = vxpose.xlu0.c.b16.cont [3/8] 0, 128
        %3200 = vxpose.xlu0.c.b16.cont [4/8] 0, 128
        %3201 = vxpose.xlu0.c.b16.cont [5/8] 0, 128
        %3202 = vxpose.xlu0.c.b16.cont [6/8] 0, 128
        %3203 = vxpose.xlu0.c.b16.cont [7/8] 0, 128
        %3204 = vxpose.xlu0.c.b16.end [8/8] 0, 128
        %v3205 = vpop.trf.xlu0
        %v3206 = vpop.trf.xlu0
        %v3207 = vpop.trf.xlu0
        %v3208 = vpop.trf.xlu0
        %v3209 = vpop.trf.xlu0
        %v3210 = vpop.trf.xlu0
        %v3211 = vpop.trf.xlu0
        %v3212 = vpop.trf.xlu0
        %3213 = vxpose.xlu0.c.b16.start [1/8] %v2980, 128
        %3214 = vxpose.xlu0.c.b16.cont [2/8] 0, 128
        %3215 = vxpose.xlu0.c.b16.cont [3/8] 0, 128
        %3216 = vxpose.xlu0.c.b16.cont [4/8] 0, 128
        %3217 = vxpose.xlu0.c.b16.cont [5/8] 0, 128
        %3218 = vxpose.xlu0.c.b16.cont [6/8] 0, 128
        %3219 = vxpose.xlu0.c.b16.cont [7/8] 0, 128
        %3220 = vxpose.xlu0.c.b16.end [8/8] 0, 128
        %v3221 = vpop.trf.xlu0
        %v3222 = vpop.trf.xlu0
        %v3223 = vpop.trf.xlu0
        %v3224 = vpop.trf.xlu0
        %v3225 = vpop.trf.xlu0
        %v3226 = vpop.trf.xlu0
        %v3227 = vpop.trf.xlu0
        %v3228 = vpop.trf.xlu0
        %3229 = vxpose.xlu0.c.b16.start [1/8] %v2981, 128
        %3230 = vxpose.xlu0.c.b16.cont [2/8] 0, 128
        %3231 = vxpose.xlu0.c.b16.cont [3/8] 0, 128
        %3232 = vxpose.xlu0.c.b16.cont [4/8] 0, 128
        %3233 = vxpose.xlu0.c.b16.cont [5/8] 0, 128
        %3234 = vxpose.xlu0.c.b16.cont [6/8] 0, 128
        %3235 = vxpose.xlu0.c.b16.cont [7/8] 0, 128
        %3236 = vxpose.xlu0.c.b16.end [8/8] 0, 128
        %v3237 = vpop.trf.xlu0
        %v3238 = vpop.trf.xlu0
        %v3239 = vpop.trf.xlu0
        %v3240 = vpop.trf.xlu0
        %v3241 = vpop.trf.xlu0
        %v3242 = vpop.trf.xlu0
        %v3243 = vpop.trf.xlu0
        %v3244 = vpop.trf.xlu0
        %3245 = vxpose.xlu0.c.b16.start [1/8] %v2982, 128
        %3246 = vxpose.xlu0.c.b16.cont [2/8] 0, 128
        %3247 = vxpose.xlu0.c.b16.cont [3/8] 0, 128
        %3248 = vxpose.xlu0.c.b16.cont [4/8] 0, 128
        %3249 = vxpose.xlu0.c.b16.cont [5/8] 0, 128
        %3250 = vxpose.xlu0.c.b16.cont [6/8] 0, 128
        %3251 = vxpose.xlu0.c.b16.cont [7/8] 0, 128
        %3252 = vxpose.xlu0.c.b16.end [8/8] 0, 128
        %v3253 = vpop.trf.xlu0
        %v3254 = vpop.trf.xlu0
        %v3255 = vpop.trf.xlu0
        %v3256 = vpop.trf.xlu0
        %v3257 = vpop.trf.xlu0
        %v3258 = vpop.trf.xlu0
        %v3259 = vpop.trf.xlu0
        %v3260 = vpop.trf.xlu0
        %v3261 = vcombine.low %v3141, %v3205
        %v3263 = vunpack.c.l.s4 1983009808
        %v3264 = vunpack.c.0.s8 %v3263
        %v3265 = vlaneseq
        %v3266 = vshrl.u32 %v3265, 7
        %v3267 = vsub.s32 %v3264, %v3266
        %v3268 = vrot.slane %v3261, %v3267
        %v3269 = vcombine.low %v3173, %v3237
        %v3271 = vunpack.c.l.s4 1983009808
        %v3272 = vunpack.c.0.s8 %v3271
        %v3273 = vlaneseq
        %v3274 = vshrl.u32 %v3273, 7
        %v3275 = vsub.s32 %v3272, %v3274
        %v3276 = vrot.slane %v3269, %v3275
        %v3277 = vcombine.low %v3268, %v3276
        %v3278 = vcombine.high %v3268, %v3276
        %v3280 = vunpack.c.l.s4 1934713408
        %v3281 = vunpack.c.0.s8 %v3280
        %v3282 = vlaneseq
        %v3283 = vshrl.u32 %v3282, 7
        %v3284 = vsub.s32 %v3281, %v3283
        %v3285 = vrot.slane %v3277, %v3284
        %v3287 = vunpack.c.l.s4 1934713408
        %v3288 = vunpack.c.0.s8 %v3287
        %v3289 = vlaneseq
        %v3290 = vshrl.u32 %v3289, 7
        %v3291 = vsub.s32 %v3288, %v3290
        %v3292 = vrot.slane %v3278, %v3291
        %v3293 = vcombine.high %v3285, 0
        %v3294 = vcombine.high %v3292, 0
        %v3295 = vcombine.low %v3157, %v3221
        %v3297 = vunpack.c.l.s4 1983009808
        %v3298 = vunpack.c.0.s8 %v3297
        %v3299 = vlaneseq
        %v3300 = vshrl.u32 %v3299, 7
        %v3301 = vsub.s32 %v3298, %v3300
        %v3302 = vrot.slane %v3295, %v3301
        %v3303 = vcombine.low %v3189, %v3253
        %v3305 = vunpack.c.l.s4 1983009808
        %v3306 = vunpack.c.0.s8 %v3305
        %v3307 = vlaneseq
        %v3308 = vshrl.u32 %v3307, 7
        %v3309 = vsub.s32 %v3306, %v3308
        %v3310 = vrot.slane %v3303, %v3309
        %v3311 = vcombine.low %v3302, %v3310
        %v3312 = vcombine.high %v3302, %v3310
        %v3314 = vunpack.c.l.s4 1934713408
        %v3315 = vunpack.c.0.s8 %v3314
        %v3316 = vlaneseq
        %v3317 = vshrl.u32 %v3316, 7
        %v3318 = vsub.s32 %v3315, %v3317
        %v3319 = vrot.slane %v3311, %v3318
        %v3321 = vunpack.c.l.s4 1934713408
        %v3322 = vunpack.c.0.s8 %v3321
        %v3323 = vlaneseq
        %v3324 = vshrl.u32 %v3323, 7
        %v3325 = vsub.s32 %v3322, %v3324
        %v3326 = vrot.slane %v3312, %v3325
        %v3327 = vcombine.high %v3319, 0
        %v3328 = vcombine.high %v3326, 0
        %v3331 = vpack.i.b16 %v3319, %v3285
        %v3333 = vshrl.u32 %v3285, 16
        %v3334 = vshrl.u32 %v3319, 16
        %v3335 = vpack.i.b16 %v3334, %v3333
        %v3339 = vpack.i.b16 %v3327, %v3293
        %v3341 = vshrl.u32 %v3293, 16
        %v3342 = vshrl.u32 %v3327, 16
        %v3343 = vpack.i.b16 %v3342, %v3341
        %v3347 = vpack.i.b16 %v3326, %v3292
        %v3349 = vshrl.u32 %v3292, 16
        %v3350 = vshrl.u32 %v3326, 16
        %v3351 = vpack.i.b16 %v3350, %v3349
        %v3355 = vpack.i.b16 %v3328, %v3294
        %v3357 = vshrl.u32 %v3294, 16
        %v3358 = vshrl.u32 %v3328, 16
        %v3359 = vpack.i.b16 %v3358, %v3357
        %3361 = vxpose.xlu0.c.b16.start [1/8] %v3331, 128
        %3362 = vxpose.xlu0.c.b16.cont [2/8] 0, 128
        %3363 = vxpose.xlu0.c.b16.cont [3/8] 0, 128
        %3364 = vxpose.xlu0.c.b16.cont [4/8] 0, 128
        %3365 = vxpose.xlu0.c.b16.cont [5/8] 0, 128
        %3366 = vxpose.xlu0.c.b16.cont [6/8] 0, 128
        %3367 = vxpose.xlu0.c.b16.cont [7/8] 0, 128
        %3368 = vxpose.xlu0.c.b16.end [8/8] 0, 128
        %v3369 = vpop.trf.xlu0
        %v3370 = vpop.trf.xlu0
        %v3371 = vpop.trf.xlu0
        %v3372 = vpop.trf.xlu0
        %v3373 = vpop.trf.xlu0
        %v3374 = vpop.trf.xlu0
        %v3375 = vpop.trf.xlu0
        %v3376 = vpop.trf.xlu0
        %3377 = vxpose.xlu0.c.b16.start [1/8] %v3335, 128
        %3378 = vxpose.xlu0.c.b16.cont [2/8] 0, 128
        %3379 = vxpose.xlu0.c.b16.cont [3/8] 0, 128
        %3380 = vxpose.xlu0.c.b16.cont [4/8] 0, 128
        %3381 = vxpose.xlu0.c.b16.cont [5/8] 0, 128
        %3382 = vxpose.xlu0.c.b16.cont [6/8] 0, 128
        %3383 = vxpose.xlu0.c.b16.cont [7/8] 0, 128
        %3384 = vxpose.xlu0.c.b16.end [8/8] 0, 128
        %v3385 = vpop.trf.xlu0
        %v3386 = vpop.trf.xlu0
        %v3387 = vpop.trf.xlu0
        %v3388 = vpop.trf.xlu0
        %v3389 = vpop.trf.xlu0
        %v3390 = vpop.trf.xlu0
        %v3391 = vpop.trf.xlu0
        %v3392 = vpop.trf.xlu0
        %3393 = vxpose.xlu0.c.b16.start [1/8] %v3339, 128
        %3394 = vxpose.xlu0.c.b16.cont [2/8] 0, 128
        %3395 = vxpose.xlu0.c.b16.cont [3/8] 0, 128
        %3396 = vxpose.xlu0.c.b16.cont [4/8] 0, 128
        %3397 = vxpose.xlu0.c.b16.cont [5/8] 0, 128
        %3398 = vxpose.xlu0.c.b16.cont [6/8] 0, 128
        %3399 = vxpose.xlu0.c.b16.cont [7/8] 0, 128
        %3400 = vxpose.xlu0.c.b16.end [8/8] 0, 128
        %v3401 = vpop.trf.xlu0
        %v3402 = vpop.trf.xlu0
        %v3403 = vpop.trf.xlu0
        %v3404 = vpop.trf.xlu0
        %v3405 = vpop.trf.xlu0
        %v3406 = vpop.trf.xlu0
        %v3407 = vpop.trf.xlu0
        %v3408 = vpop.trf.xlu0
        %3409 = vxpose.xlu0.c.b16.start [1/8] %v3343, 128
        %3410 = vxpose.xlu0.c.b16.cont [2/8] 0, 128
        %3411 = vxpose.xlu0.c.b16.cont [3/8] 0, 128
        %3412 = vxpose.xlu0.c.b16.cont [4/8] 0, 128
        %3413 = vxpose.xlu0.c.b16.cont [5/8] 0, 128
        %3414 = vxpose.xlu0.c.b16.cont [6/8] 0, 128
        %3415 = vxpose.xlu0.c.b16.cont [7/8] 0, 128
        %3416 = vxpose.xlu0.c.b16.end [8/8] 0, 128
        %v3417 = vpop.trf.xlu0
        %v3418 = vpop.trf.xlu0
        %v3419 = vpop.trf.xlu0
        %v3420 = vpop.trf.xlu0
        %v3421 = vpop.trf.xlu0
        %v3422 = vpop.trf.xlu0
        %v3423 = vpop.trf.xlu0
        %v3424 = vpop.trf.xlu0
        %3425 = vxpose.xlu0.c.b16.start [1/8] %v3347, 128
        %3426 = vxpose.xlu0.c.b16.cont [2/8] 0, 128
        %3427 = vxpose.xlu0.c.b16.cont [3/8] 0, 128
        %3428 = vxpose.xlu0.c.b16.cont [4/8] 0, 128
        %3429 = vxpose.xlu0.c.b16.cont [5/8] 0, 128
        %3430 = vxpose.xlu0.c.b16.cont [6/8] 0, 128
        %3431 = vxpose.xlu0.c.b16.cont [7/8] 0, 128
        %3432 = vxpose.xlu0.c.b16.end [8/8] 0, 128
        %v3433 = vpop.trf.xlu0
        %v3434 = vpop.trf.xlu0
        %v3435 = vpop.trf.xlu0
        %v3436 = vpop.trf.xlu0
        %v3437 = vpop.trf.xlu0
        %v3438 = vpop.trf.xlu0
        %v3439 = vpop.trf.xlu0
        %v3440 = vpop.trf.xlu0
        %3441 = vxpose.xlu0.c.b16.start [1/8] %v3351, 128
        %3442 = vxpose.xlu0.c.b16.cont [2/8] 0, 128
        %3443 = vxpose.xlu0.c.b16.cont [3/8] 0, 128
        %3444 = vxpose.xlu0.c.b16.cont [4/8] 0, 128
        %3445 = vxpose.xlu0.c.b16.cont [5/8] 0, 128
        %3446 = vxpose.xlu0.c.b16.cont [6/8] 0, 128
        %3447 = vxpose.xlu0.c.b16.cont [7/8] 0, 128
        %3448 = vxpose.xlu0.c.b16.end [8/8] 0, 128
        %v3449 = vpop.trf.xlu0
        %v3450 = vpop.trf.xlu0
        %v3451 = vpop.trf.xlu0
        %v3452 = vpop.trf.xlu0
        %v3453 = vpop.trf.xlu0
        %v3454 = vpop.trf.xlu0
        %v3455 = vpop.trf.xlu0
        %v3456 = vpop.trf.xlu0
        %3457 = vxpose.xlu0.c.b16.start [1/8] %v3355, 128
        %3458 = vxpose.xlu0.c.b16.cont [2/8] 0, 128
        %3459 = vxpose.xlu0.c.b16.cont [3/8] 0, 128
        %3460 = vxpose.xlu0.c.b16.cont [4/8] 0, 128
        %3461 = vxpose.xlu0.c.b16.cont [5/8] 0, 128
        %3462 = vxpose.xlu0.c.b16.cont [6/8] 0, 128
        %3463 = vxpose.xlu0.c.b16.cont [7/8] 0, 128
        %3464 = vxpose.xlu0.c.b16.end [8/8] 0, 128
        %v3465 = vpop.trf.xlu0
        %v3466 = vpop.trf.xlu0
        %v3467 = vpop.trf.xlu0
        %v3468 = vpop.trf.xlu0
        %v3469 = vpop.trf.xlu0
        %v3470 = vpop.trf.xlu0
        %v3471 = vpop.trf.xlu0
        %v3472 = vpop.trf.xlu0
        %3473 = vxpose.xlu0.c.b16.start [1/8] %v3359, 128
        %3474 = vxpose.xlu0.c.b16.cont [2/8] 0, 128
        %3475 = vxpose.xlu0.c.b16.cont [3/8] 0, 128
        %3476 = vxpose.xlu0.c.b16.cont [4/8] 0, 128
        %3477 = vxpose.xlu0.c.b16.cont [5/8] 0, 128
        %3478 = vxpose.xlu0.c.b16.cont [6/8] 0, 128
        %3479 = vxpose.xlu0.c.b16.cont [7/8] 0, 128
        %3480 = vxpose.xlu0.c.b16.end [8/8] 0, 128
        %v3481 = vpop.trf.xlu0
        %v3482 = vpop.trf.xlu0
        %v3483 = vpop.trf.xlu0
        %v3484 = vpop.trf.xlu0
        %v3485 = vpop.trf.xlu0
        %v3486 = vpop.trf.xlu0
        %v3487 = vpop.trf.xlu0
        %v3488 = vpop.trf.xlu0
        %v3489 = vcombine.low %v3369, %v3433
        %v3491 = vunpack.c.l.s4 1983009808
        %v3492 = vunpack.c.0.s8 %v3491
        %v3493 = vlaneseq
        %v3494 = vshrl.u32 %v3493, 7
        %v3495 = vsub.s32 %v3492, %v3494
        %v3496 = vrot.slane %v3489, %v3495
        %v3497 = vcombine.low %v3401, %v3465
        %v3499 = vunpack.c.l.s4 1983009808
        %v3500 = vunpack.c.0.s8 %v3499
        %v3501 = vlaneseq
        %v3502 = vshrl.u32 %v3501, 7
        %v3503 = vsub.s32 %v3500, %v3502
        %v3504 = vrot.slane %v3497, %v3503
        %v3505 = vcombine.low %v3496, %v3504
        %v3507 = vunpack.c.l.s4 1934713408
        %v3508 = vunpack.c.0.s8 %v3507
        %v3509 = vlaneseq
        %v3510 = vshrl.u32 %v3509, 7
        %v3511 = vsub.s32 %v3508, %v3510
        %v3512 = vrot.slane %v3505, %v3511
        %v3513 = vcombine.high %v3512, 0
        %v3514 = vcombine.low %v3385, %v3449
        %v3516 = vunpack.c.l.s4 1983009808
        %v3517 = vunpack.c.0.s8 %v3516
        %v3518 = vlaneseq
        %v3519 = vshrl.u32 %v3518, 7
        %v3520 = vsub.s32 %v3517, %v3519
        %v3521 = vrot.slane %v3514, %v3520
        %v3522 = vcombine.low %v3417, %v3481
        %v3524 = vunpack.c.l.s4 1983009808
        %v3525 = vunpack.c.0.s8 %v3524
        %v3526 = vlaneseq
        %v3527 = vshrl.u32 %v3526, 7
        %v3528 = vsub.s32 %v3525, %v3527
        %v3529 = vrot.slane %v3522, %v3528
        %v3530 = vcombine.low %v3521, %v3529
        %v3532 = vunpack.c.l.s4 1934713408
        %v3533 = vunpack.c.0.s8 %v3532
        %v3534 = vlaneseq
        %v3535 = vshrl.u32 %v3534, 7
        %v3536 = vsub.s32 %v3533, %v3535
        %v3537 = vrot.slane %v3530, %v3536
        %v3538 = vcombine.high %v3537, 0
        %v3541 = vpack.i.b16 %v3537, %v3512
        %v3542 = vshrl.u32 %v3512, 16
        %v3543 = vshrl.u32 %v3537, 16
        %v3544 = vpack.i.b16 %v3543, %v3542
        %v3547 = vpack.i.b16 %v3538, %v3513
        %v3548 = vshrl.u32 %v3513, 16
        %v3549 = vshrl.u32 %v3538, 16
        %v3550 = vpack.i.b16 %v3549, %v3548
        %v3552 = vsel %vm1331, %v3123, 0
        %v3555 = vsel %vm1335, %v3541, 0
        %3557 = vmatprep.subr.bf16.mxu0 0
        %3558 = vmatpush1.bf16.msra.mxu0 0
        %3559 = vmatprep.subr.bf16.mxu0 0
        %3560 = vmatpush1.bf16.msra.mxu0 0
        %3561 = vmatprep.subr.bf16.mxu0 0
        %3562 = vmatpush1.bf16.msra.mxu0 0
        %3563 = vmatprep.subr.bf16.mxu0 0
        %3564 = vmatpush1.bf16.msra.mxu0 0
        %3565 = vmatprep.subr.bf16.mxu0 0
        %3566 = vmatpush1.bf16.msra.mxu0 0
        %3567 = vmatprep.subr.bf16.mxu0 0
        %3568 = vmatpush1.bf16.msra.mxu0 0
        %3569 = vmatprep.subr.bf16.mxu0 0
        %3570 = vmatpush1.bf16.msra.mxu0 0
        %3571 = vmatprep.subr.bf16.mxu0 0
        %3572 = vmatpush1.bf16.msra.mxu0 %v3555
        %3573 = vmatprep.subr.bf16.mxu0 0
        %3574 = vmatpush2.bf16.msra.mxu0 0
        %3575 = vmatprep.subr.bf16.mxu0 0
        %3576 = vmatpush2.bf16.msra.mxu0 0
        %3577 = vmatprep.subr.bf16.mxu0 0
        %3578 = vmatpush2.bf16.msra.mxu0 0
        %3579 = vmatprep.subr.bf16.mxu0 0
        %3580 = vmatpush2.bf16.msra.mxu0 0
        %3581 = vmatprep.subr.bf16.mxu0 0
        %3582 = vmatpush2.bf16.msra.mxu0 0
        %3583 = vmatprep.subr.bf16.mxu0 0
        %3584 = vmatpush2.bf16.msra.mxu0 0
        %3585 = vmatprep.subr.bf16.mxu0 0
        %3586 = vmatpush2.bf16.msra.mxu0 0
        %3587 = vmatprep.subr.bf16.mxu0 0
        %3588 = vmatpush2.bf16.msra.mxu0 0
        %3589 = vmatprep.mubr.bf16.mxu0 0
        %3590 = vmatmul.mubr.bf16.gmra.mxu0 %v3552
        %v3591 = vpop.f32.mrf.mxu0
        %v3592 = vadd.f32 %v849, %v3591
        %v3593 = vpop.f32.mrf.mxu0
        %v3594 = vpop.f32.mrf.mxu0
        %v3595 = vpop.f32.mrf.mxu0
        %3596 = vdwg.mxu0
        %v3598 = vsel %vm1331, %v3126, 0
        %v3601 = vsel %vm1335, %v3544, 0
        %3603 = vmatprep.subr.bf16.mxu0 0
        %3604 = vmatpush1.bf16.msra.mxu0 0
        %3605 = vmatprep.subr.bf16.mxu0 0
        %3606 = vmatpush1.bf16.msra.mxu0 0
        %3607 = vmatprep.subr.bf16.mxu0 0
        %3608 = vmatpush1.bf16.msra.mxu0 0
        %3609 = vmatprep.subr.bf16.mxu0 0
        %3610 = vmatpush1.bf16.msra.mxu0 0
        %3611 = vmatprep.subr.bf16.mxu0 0
        %3612 = vmatpush1.bf16.msra.mxu0 0
        %3613 = vmatprep.subr.bf16.mxu0 0
        %3614 = vmatpush1.bf16.msra.mxu0 0
        %3615 = vmatprep.subr.bf16.mxu0 0
        %3616 = vmatpush1.bf16.msra.mxu0 0
        %3617 = vmatprep.subr.bf16.mxu0 0
        %3618 = vmatpush1.bf16.msra.mxu0 %v3601
        %3619 = vmatprep.subr.bf16.mxu0 0
        %3620 = vmatpush2.bf16.msra.mxu0 0
        %3621 = vmatprep.subr.bf16.mxu0 0
        %3622 = vmatpush2.bf16.msra.mxu0 0
        %3623 = vmatprep.subr.bf16.mxu0 0
        %3624 = vmatpush2.bf16.msra.mxu0 0
        %3625 = vmatprep.subr.bf16.mxu0 0
        %3626 = vmatpush2.bf16.msra.mxu0 0
        %3627 = vmatprep.subr.bf16.mxu0 0
        %3628 = vmatpush2.bf16.msra.mxu0 0
        %3629 = vmatprep.subr.bf16.mxu0 0
        %3630 = vmatpush2.bf16.msra.mxu0 0
        %3631 = vmatprep.subr.bf16.mxu0 0
        %3632 = vmatpush2.bf16.msra.mxu0 0
        %3633 = vmatprep.subr.bf16.mxu0 0
        %3634 = vmatpush2.bf16.msra.mxu0 0
        %3635 = vmatprep.mubr.bf16.mxu0 0
        %3636 = vmatmul.mubr.bf16.gmra.mxu0 %v3598
        %v3637 = vpop.f32.mrf.mxu0
        %v3638 = vadd.f32 %v849, %v3637
        %v3639 = vpop.f32.mrf.mxu0
        %v3640 = vpop.f32.mrf.mxu0
        %v3641 = vpop.f32.mrf.mxu0
        %3642 = vdwg.mxu0
        %v3644 = vsel %vm1331, %v3129, 0
        %v3647 = vsel %vm1335, %v3547, 0
        %3649 = vmatprep.subr.bf16.mxu0 0
        %3650 = vmatpush1.bf16.msra.mxu0 0
        %3651 = vmatprep.subr.bf16.mxu0 0
        %3652 = vmatpush1.bf16.msra.mxu0 0
        %3653 = vmatprep.subr.bf16.mxu0 0
        %3654 = vmatpush1.bf16.msra.mxu0 0
        %3655 = vmatprep.subr.bf16.mxu0 0
        %3656 = vmatpush1.bf16.msra.mxu0 0
        %3657 = vmatprep.subr.bf16.mxu0 0
        %3658 = vmatpush1.bf16.msra.mxu0 0
        %3659 = vmatprep.subr.bf16.mxu0 0
        %3660 = vmatpush1.bf16.msra.mxu0 0
        %3661 = vmatprep.subr.bf16.mxu0 0
        %3662 = vmatpush1.bf16.msra.mxu0 0
        %3663 = vmatprep.subr.bf16.mxu0 0
        %3664 = vmatpush1.bf16.msra.mxu0 %v3647
        %3665 = vmatprep.subr.bf16.mxu0 0
        %3666 = vmatpush2.bf16.msra.mxu0 0
        %3667 = vmatprep.subr.bf16.mxu0 0
        %3668 = vmatpush2.bf16.msra.mxu0 0
        %3669 = vmatprep.subr.bf16.mxu0 0
        %3670 = vmatpush2.bf16.msra.mxu0 0
        %3671 = vmatprep.subr.bf16.mxu0 0
        %3672 = vmatpush2.bf16.msra.mxu0 0
        %3673 = vmatprep.subr.bf16.mxu0 0
        %3674 = vmatpush2.bf16.msra.mxu0 0
        %3675 = vmatprep.subr.bf16.mxu0 0
        %3676 = vmatpush2.bf16.msra.mxu0 0
        %3677 = vmatprep.subr.bf16.mxu0 0
        %3678 = vmatpush2.bf16.msra.mxu0 0
        %3679 = vmatprep.subr.bf16.mxu0 0
        %3680 = vmatpush2.bf16.msra.mxu0 0
        %3681 = vmatprep.mubr.bf16.mxu0 0
        %3682 = vmatmul.mubr.bf16.gmra.mxu0 %v3644
        %v3683 = vpop.f32.mrf.mxu0
        %v3684 = vadd.f32 %v849, %v3683
        %v3685 = vpop.f32.mrf.mxu0
        %v3686 = vpop.f32.mrf.mxu0
        %v3687 = vpop.f32.mrf.mxu0
        %3688 = vdwg.mxu0
        %v3690 = vsel %vm1331, %v3132, 0
        %v3693 = vsel %vm1335, %v3550, 0
        %3695 = vmatprep.subr.bf16.mxu0 0
        %3696 = vmatpush1.bf16.msra.mxu0 0
        %3697 = vmatprep.subr.bf16.mxu0 0
        %3698 = vmatpush1.bf16.msra.mxu0 0
        %3699 = vmatprep.subr.bf16.mxu0 0
        %3700 = vmatpush1.bf16.msra.mxu0 0
        %3701 = vmatprep.subr.bf16.mxu0 0
        %3702 = vmatpush1.bf16.msra.mxu0 0
        %3703 = vmatprep.subr.bf16.mxu0 0
        %3704 = vmatpush1.bf16.msra.mxu0 0
        %3705 = vmatprep.subr.bf16.mxu0 0
        %3706 = vmatpush1.bf16.msra.mxu0 0
        %3707 = vmatprep.subr.bf16.mxu0 0
        %3708 = vmatpush1.bf16.msra.mxu0 0
        %3709 = vmatprep.subr.bf16.mxu0 0
        %3710 = vmatpush1.bf16.msra.mxu0 %v3693
        %3711 = vmatprep.subr.bf16.mxu0 0
        %3712 = vmatpush2.bf16.msra.mxu0 0
        %3713 = vmatprep.subr.bf16.mxu0 0
        %3714 = vmatpush2.bf16.msra.mxu0 0
        %3715 = vmatprep.subr.bf16.mxu0 0
        %3716 = vmatpush2.bf16.msra.mxu0 0
        %3717 = vmatprep.subr.bf16.mxu0 0
        %3718 = vmatpush2.bf16.msra.mxu0 0
        %3719 = vmatprep.subr.bf16.mxu0 0
        %3720 = vmatpush2.bf16.msra.mxu0 0
        %3721 = vmatprep.subr.bf16.mxu0 0
        %3722 = vmatpush2.bf16.msra.mxu0 0
        %3723 = vmatprep.subr.bf16.mxu0 0
        %3724 = vmatpush2.bf16.msra.mxu0 0
        %3725 = vmatprep.subr.bf16.mxu0 0
        %3726 = vmatpush2.bf16.msra.mxu0 0
        %3727 = vmatprep.mubr.bf16.mxu0 0
        %3728 = vmatmul.mubr.bf16.gmra.mxu0 %v3690
        %v3729 = vpop.f32.mrf.mxu0
        %v3730 = vadd.f32 %v849, %v3729
        %v3731 = vpop.f32.mrf.mxu0
        %v3732 = vpop.f32.mrf.mxu0
        %v3733 = vpop.f32.mrf.mxu0
        %3734 = vdwg.mxu0
        %v3735 = vsel %vm1331, %v3592, -inf
        %3736 = vmax.xlane.f32.xlu0 %v3735
        %v3737 = vpop.xlane.xlu0 %3736
        %v3738 = vsel %vm1331, %v3638, -inf
        %3739 = vmax.xlane.f32.xlu0 %v3738
        %v3740 = vpop.xlane.xlu0 %3739
        %v3741 = vsel %vm1331, %v3684, -inf
        %3742 = vmax.xlane.f32.xlu0 %v3741
        %v3743 = vpop.xlane.xlu0 %3742
        %v3744 = vsel %vm1331, %v3730, -inf
        %3745 = vmax.xlane.f32.xlu0 %v3744
        %v3746 = vpop.xlane.xlu0 %3745
        %v3747 = vsub.f32 %v3592, %v3737
        %v3748 = vsub.f32 %v3638, %v3740
        %v3749 = vsub.f32 %v3684, %v3743
        %v3750 = vsub.f32 %v3730, %v3746
        %v3751 = vmul.f32 %v3747, 1.442695
        %v3752 = vpow.pop %v3751
        %v3753 = vmul.f32 %v3748, 1.442695
        %v3754 = vpow.pop %v3753
        %v3755 = vmul.f32 %v3749, 1.442695
        %v3756 = vpow.pop %v3755
        %v3757 = vmul.f32 %v3750, 1.442695
        %v3758 = vpow.pop %v3757
        %v3759 = vsel %vm1331, %v3752, 0.0
        %3760 = vadd.xlane.f32.xlu0 %v3759
        %v3761 = vpop.xlane.xlu0 %3760
        %v3762 = vsel %vm1331, %v3754, 0.0
        %3763 = vadd.xlane.f32.xlu0 %v3762
        %v3764 = vpop.xlane.xlu0 %3763
        %v3765 = vsel %vm1331, %v3756, 0.0
        %3766 = vadd.xlane.f32.xlu0 %v3765
        %v3767 = vpop.xlane.xlu0 %3766
        %v3768 = vsel %vm1331, %v3758, 0.0
        %3769 = vadd.xlane.f32.xlu0 %v3768
        %v3770 = vpop.xlane.xlu0 %3769
        %v3771 = vrcp.pop %v3761
        %v3772 = vrcp.pop %v3764
        %v3773 = vrcp.pop %v3767
        %v3774 = vrcp.pop %v3770
        %v3775 = vmul.f32 %v3752, %v3771
        %v3776 = vmul.f32 %v3754, %v3772
        %v3777 = vmul.f32 %v3756, %v3773
        %v3778 = vmul.f32 %v3758, %v3774
        %v3779 = vpack.c.bf16 %v3775, %v3775
        %v3780 = vpack.c.bf16 %v3776, %v3776
        %v3781 = vpack.c.bf16 %v3777, %v3777
        %v3782 = vpack.c.bf16 %v3778, %v3778
        %3783 = vxpose.xlu0.c.b16.start [1/8] %v3063, 128
        %3784 = vxpose.xlu0.c.b16.cont [2/8] 0, 128
        %3785 = vxpose.xlu0.c.b16.cont [3/8] 0, 128
        %3786 = vxpose.xlu0.c.b16.cont [4/8] 0, 128
        %3787 = vxpose.xlu0.c.b16.cont [5/8] 0, 128
        %3788 = vxpose.xlu0.c.b16.cont [6/8] 0, 128
        %3789 = vxpose.xlu0.c.b16.cont [7/8] 0, 128
        %3790 = vxpose.xlu0.c.b16.end [8/8] 0, 128
        %v3791 = vpop.trf.xlu0
        %v3792 = vpop.trf.xlu0
        %v3793 = vpop.trf.xlu0
        %v3794 = vpop.trf.xlu0
        %v3795 = vpop.trf.xlu0
        %v3796 = vpop.trf.xlu0
        %v3797 = vpop.trf.xlu0
        %v3798 = vpop.trf.xlu0
        %3799 = vxpose.xlu0.c.b16.start [1/8] %v3064, 128
        %3800 = vxpose.xlu0.c.b16.cont [2/8] 0, 128
        %3801 = vxpose.xlu0.c.b16.cont [3/8] 0, 128
        %3802 = vxpose.xlu0.c.b16.cont [4/8] 0, 128
        %3803 = vxpose.xlu0.c.b16.cont [5/8] 0, 128
        %3804 = vxpose.xlu0.c.b16.cont [6/8] 0, 128
        %3805 = vxpose.xlu0.c.b16.cont [7/8] 0, 128
        %3806 = vxpose.xlu0.c.b16.end [8/8] 0, 128
        %v3807 = vpop.trf.xlu0
        %v3808 = vpop.trf.xlu0
        %v3809 = vpop.trf.xlu0
        %v3810 = vpop.trf.xlu0
        %v3811 = vpop.trf.xlu0
        %v3812 = vpop.trf.xlu0
        %v3813 = vpop.trf.xlu0
        %v3814 = vpop.trf.xlu0
        %3815 = vxpose.xlu0.c.b16.start [1/8] %v3065, 128
        %3816 = vxpose.xlu0.c.b16.cont [2/8] 0, 128
        %3817 = vxpose.xlu0.c.b16.cont [3/8] 0, 128
        %3818 = vxpose.xlu0.c.b16.cont [4/8] 0, 128
        %3819 = vxpose.xlu0.c.b16.cont [5/8] 0, 128
        %3820 = vxpose.xlu0.c.b16.cont [6/8] 0, 128
        %3821 = vxpose.xlu0.c.b16.cont [7/8] 0, 128
        %3822 = vxpose.xlu0.c.b16.end [8/8] 0, 128
        %v3823 = vpop.trf.xlu0
        %v3824 = vpop.trf.xlu0
        %v3825 = vpop.trf.xlu0
        %v3826 = vpop.trf.xlu0
        %v3827 = vpop.trf.xlu0
        %v3828 = vpop.trf.xlu0
        %v3829 = vpop.trf.xlu0
        %v3830 = vpop.trf.xlu0
        %3831 = vxpose.xlu0.c.b16.start [1/8] %v3066, 128
        %3832 = vxpose.xlu0.c.b16.cont [2/8] 0, 128
        %3833 = vxpose.xlu0.c.b16.cont [3/8] 0, 128
        %3834 = vxpose.xlu0.c.b16.cont [4/8] 0, 128
        %3835 = vxpose.xlu0.c.b16.cont [5/8] 0, 128
        %3836 = vxpose.xlu0.c.b16.cont [6/8] 0, 128
        %3837 = vxpose.xlu0.c.b16.cont [7/8] 0, 128
        %3838 = vxpose.xlu0.c.b16.end [8/8] 0, 128
        %v3839 = vpop.trf.xlu0
        %v3840 = vpop.trf.xlu0
        %v3841 = vpop.trf.xlu0
        %v3842 = vpop.trf.xlu0
        %v3843 = vpop.trf.xlu0
        %v3844 = vpop.trf.xlu0
        %v3845 = vpop.trf.xlu0
        %v3846 = vpop.trf.xlu0
        %3847 = vxpose.xlu0.c.b16.start [1/8] %v3067, 128
        %3848 = vxpose.xlu0.c.b16.cont [2/8] 0, 128
        %3849 = vxpose.xlu0.c.b16.cont [3/8] 0, 128
        %3850 = vxpose.xlu0.c.b16.cont [4/8] 0, 128
        %3851 = vxpose.xlu0.c.b16.cont [5/8] 0, 128
        %3852 = vxpose.xlu0.c.b16.cont [6/8] 0, 128
        %3853 = vxpose.xlu0.c.b16.cont [7/8] 0, 128
        %3854 = vxpose.xlu0.c.b16.end [8/8] 0, 128
        %v3855 = vpop.trf.xlu0
        %v3856 = vpop.trf.xlu0
        %v3857 = vpop.trf.xlu0
        %v3858 = vpop.trf.xlu0
        %v3859 = vpop.trf.xlu0
        %v3860 = vpop.trf.xlu0
        %v3861 = vpop.trf.xlu0
        %v3862 = vpop.trf.xlu0
        %3863 = vxpose.xlu0.c.b16.start [1/8] %v3068, 128
        %3864 = vxpose.xlu0.c.b16.cont [2/8] 0, 128
        %3865 = vxpose.xlu0.c.b16.cont [3/8] 0, 128
        %3866 = vxpose.xlu0.c.b16.cont [4/8] 0, 128
        %3867 = vxpose.xlu0.c.b16.cont [5/8] 0, 128
        %3868 = vxpose.xlu0.c.b16.cont [6/8] 0, 128
        %3869 = vxpose.xlu0.c.b16.cont [7/8] 0, 128
        %3870 = vxpose.xlu0.c.b16.end [8/8] 0, 128
        %v3871 = vpop.trf.xlu0
        %v3872 = vpop.trf.xlu0
        %v3873 = vpop.trf.xlu0
        %v3874 = vpop.trf.xlu0
        %v3875 = vpop.trf.xlu0
        %v3876 = vpop.trf.xlu0
        %v3877 = vpop.trf.xlu0
        %v3878 = vpop.trf.xlu0
        %3879 = vxpose.xlu0.c.b16.start [1/8] %v3069, 128
        %3880 = vxpose.xlu0.c.b16.cont [2/8] 0, 128
        %3881 = vxpose.xlu0.c.b16.cont [3/8] 0, 128
        %3882 = vxpose.xlu0.c.b16.cont [4/8] 0, 128
        %3883 = vxpose.xlu0.c.b16.cont [5/8] 0, 128
        %3884 = vxpose.xlu0.c.b16.cont [6/8] 0, 128
        %3885 = vxpose.xlu0.c.b16.cont [7/8] 0, 128
        %3886 = vxpose.xlu0.c.b16.end [8/8] 0, 128
        %v3887 = vpop.trf.xlu0
        %v3888 = vpop.trf.xlu0
        %v3889 = vpop.trf.xlu0
        %v3890 = vpop.trf.xlu0
        %v3891 = vpop.trf.xlu0
        %v3892 = vpop.trf.xlu0
        %v3893 = vpop.trf.xlu0
        %v3894 = vpop.trf.xlu0
        %3895 = vxpose.xlu0.c.b16.start [1/8] %v3070, 128
        %3896 = vxpose.xlu0.c.b16.cont [2/8] 0, 128
        %3897 = vxpose.xlu0.c.b16.cont [3/8] 0, 128
        %3898 = vxpose.xlu0.c.b16.cont [4/8] 0, 128
        %3899 = vxpose.xlu0.c.b16.cont [5/8] 0, 128
        %3900 = vxpose.xlu0.c.b16.cont [6/8] 0, 128
        %3901 = vxpose.xlu0.c.b16.cont [7/8] 0, 128
        %3902 = vxpose.xlu0.c.b16.end [8/8] 0, 128
        %v3903 = vpop.trf.xlu0
        %v3904 = vpop.trf.xlu0
        %v3905 = vpop.trf.xlu0
        %v3906 = vpop.trf.xlu0
        %v3907 = vpop.trf.xlu0
        %v3908 = vpop.trf.xlu0
        %v3909 = vpop.trf.xlu0
        %v3910 = vpop.trf.xlu0
        %v3911 = vcombine.low %v3791, %v3855
        %v3913 = vunpack.c.l.s4 1983009808
        %v3914 = vunpack.c.0.s8 %v3913
        %v3915 = vlaneseq
        %v3916 = vshrl.u32 %v3915, 7
        %v3917 = vsub.s32 %v3914, %v3916
        %v3918 = vrot.slane %v3911, %v3917
        %v3919 = vcombine.low %v3823, %v3887
        %v3921 = vunpack.c.l.s4 1983009808
        %v3922 = vunpack.c.0.s8 %v3921
        %v3923 = vlaneseq
        %v3924 = vshrl.u32 %v3923, 7
        %v3925 = vsub.s32 %v3922, %v3924
        %v3926 = vrot.slane %v3919, %v3925
        %v3927 = vcombine.low %v3918, %v3926
        %v3928 = vcombine.high %v3918, %v3926
        %v3930 = vunpack.c.l.s4 1934713408
        %v3931 = vunpack.c.0.s8 %v3930
        %v3932 = vlaneseq
        %v3933 = vshrl.u32 %v3932, 7
        %v3934 = vsub.s32 %v3931, %v3933
        %v3935 = vrot.slane %v3927, %v3934
        %v3937 = vunpack.c.l.s4 1934713408
        %v3938 = vunpack.c.0.s8 %v3937
        %v3939 = vlaneseq
        %v3940 = vshrl.u32 %v3939, 7
        %v3941 = vsub.s32 %v3938, %v3940
        %v3942 = vrot.slane %v3928, %v3941
        %v3943 = vcombine.high %v3935, 0
        %v3944 = vcombine.high %v3942, 0
        %v3945 = vcombine.low %v3807, %v3871
        %v3947 = vunpack.c.l.s4 1983009808
        %v3948 = vunpack.c.0.s8 %v3947
        %v3949 = vlaneseq
        %v3950 = vshrl.u32 %v3949, 7
        %v3951 = vsub.s32 %v3948, %v3950
        %v3952 = vrot.slane %v3945, %v3951
        %v3953 = vcombine.low %v3839, %v3903
        %v3955 = vunpack.c.l.s4 1983009808
        %v3956 = vunpack.c.0.s8 %v3955
        %v3957 = vlaneseq
        %v3958 = vshrl.u32 %v3957, 7
        %v3959 = vsub.s32 %v3956, %v3958
        %v3960 = vrot.slane %v3953, %v3959
        %v3961 = vcombine.low %v3952, %v3960
        %v3962 = vcombine.high %v3952, %v3960
        %v3964 = vunpack.c.l.s4 1934713408
        %v3965 = vunpack.c.0.s8 %v3964
        %v3966 = vlaneseq
        %v3967 = vshrl.u32 %v3966, 7
        %v3968 = vsub.s32 %v3965, %v3967
        %v3969 = vrot.slane %v3961, %v3968
        %v3971 = vunpack.c.l.s4 1934713408
        %v3972 = vunpack.c.0.s8 %v3971
        %v3973 = vlaneseq
        %v3974 = vshrl.u32 %v3973, 7
        %v3975 = vsub.s32 %v3972, %v3974
        %v3976 = vrot.slane %v3962, %v3975
        %v3977 = vcombine.high %v3969, 0
        %v3978 = vcombine.high %v3976, 0
        %v3981 = vpack.i.b16 %v3969, %v3935
        %v3983 = vshrl.u32 %v3935, 16
        %v3984 = vshrl.u32 %v3969, 16
        %v3985 = vpack.i.b16 %v3984, %v3983
        %v3989 = vpack.i.b16 %v3977, %v3943
        %v3991 = vshrl.u32 %v3943, 16
        %v3992 = vshrl.u32 %v3977, 16
        %v3993 = vpack.i.b16 %v3992, %v3991
        %v3997 = vpack.i.b16 %v3976, %v3942
        %v3999 = vshrl.u32 %v3942, 16
        %v4000 = vshrl.u32 %v3976, 16
        %v4001 = vpack.i.b16 %v4000, %v3999
        %v4005 = vpack.i.b16 %v3978, %v3944
        %v4007 = vshrl.u32 %v3944, 16
        %v4008 = vshrl.u32 %v3978, 16
        %v4009 = vpack.i.b16 %v4008, %v4007
        %4011 = vxpose.xlu0.c.b16.start [1/8] %v3981, 128
        %4012 = vxpose.xlu0.c.b16.cont [2/8] 0, 128
        %4013 = vxpose.xlu0.c.b16.cont [3/8] 0, 128
        %4014 = vxpose.xlu0.c.b16.cont [4/8] 0, 128
        %4015 = vxpose.xlu0.c.b16.cont [5/8] 0, 128
        %4016 = vxpose.xlu0.c.b16.cont [6/8] 0, 128
        %4017 = vxpose.xlu0.c.b16.cont [7/8] 0, 128
        %4018 = vxpose.xlu0.c.b16.end [8/8] 0, 128
        %v4019 = vpop.trf.xlu0
        %v4020 = vpop.trf.xlu0
        %v4021 = vpop.trf.xlu0
        %v4022 = vpop.trf.xlu0
        %v4023 = vpop.trf.xlu0
        %v4024 = vpop.trf.xlu0
        %v4025 = vpop.trf.xlu0
        %v4026 = vpop.trf.xlu0
        %4027 = vxpose.xlu0.c.b16.start [1/8] %v3985, 128
        %4028 = vxpose.xlu0.c.b16.cont [2/8] 0, 128
        %4029 = vxpose.xlu0.c.b16.cont [3/8] 0, 128
        %4030 = vxpose.xlu0.c.b16.cont [4/8] 0, 128
        %4031 = vxpose.xlu0.c.b16.cont [5/8] 0, 128
        %4032 = vxpose.xlu0.c.b16.cont [6/8] 0, 128
        %4033 = vxpose.xlu0.c.b16.cont [7/8] 0, 128
        %4034 = vxpose.xlu0.c.b16.end [8/8] 0, 128
        %v4035 = vpop.trf.xlu0
        %v4036 = vpop.trf.xlu0
        %v4037 = vpop.trf.xlu0
        %v4038 = vpop.trf.xlu0
        %v4039 = vpop.trf.xlu0
        %v4040 = vpop.trf.xlu0
        %v4041 = vpop.trf.xlu0
        %v4042 = vpop.trf.xlu0
        %4043 = vxpose.xlu0.c.b16.start [1/8] %v3989, 128
        %4044 = vxpose.xlu0.c.b16.cont [2/8] 0, 128
        %4045 = vxpose.xlu0.c.b16.cont [3/8] 0, 128
        %4046 = vxpose.xlu0.c.b16.cont [4/8] 0, 128
        %4047 = vxpose.xlu0.c.b16.cont [5/8] 0, 128
        %4048 = vxpose.xlu0.c.b16.cont [6/8] 0, 128
        %4049 = vxpose.xlu0.c.b16.cont [7/8] 0, 128
        %4050 = vxpose.xlu0.c.b16.end [8/8] 0, 128
        %v4051 = vpop.trf.xlu0
        %v4052 = vpop.trf.xlu0
        %v4053 = vpop.trf.xlu0
        %v4054 = vpop.trf.xlu0
        %v4055 = vpop.trf.xlu0
        %v4056 = vpop.trf.xlu0
        %v4057 = vpop.trf.xlu0
        %v4058 = vpop.trf.xlu0
        %4059 = vxpose.xlu0.c.b16.start [1/8] %v3993, 128
        %4060 = vxpose.xlu0.c.b16.cont [2/8] 0, 128
        %4061 = vxpose.xlu0.c.b16.cont [3/8] 0, 128
        %4062 = vxpose.xlu0.c.b16.cont [4/8] 0, 128
        %4063 = vxpose.xlu0.c.b16.cont [5/8] 0, 128
        %4064 = vxpose.xlu0.c.b16.cont [6/8] 0, 128
        %4065 = vxpose.xlu0.c.b16.cont [7/8] 0, 128
        %4066 = vxpose.xlu0.c.b16.end [8/8] 0, 128
        %v4067 = vpop.trf.xlu0
        %v4068 = vpop.trf.xlu0
        %v4069 = vpop.trf.xlu0
        %v4070 = vpop.trf.xlu0
        %v4071 = vpop.trf.xlu0
        %v4072 = vpop.trf.xlu0
        %v4073 = vpop.trf.xlu0
        %v4074 = vpop.trf.xlu0
        %4075 = vxpose.xlu0.c.b16.start [1/8] %v3997, 128
        %4076 = vxpose.xlu0.c.b16.cont [2/8] 0, 128
        %4077 = vxpose.xlu0.c.b16.cont [3/8] 0, 128
        %4078 = vxpose.xlu0.c.b16.cont [4/8] 0, 128
        %4079 = vxpose.xlu0.c.b16.cont [5/8] 0, 128
        %4080 = vxpose.xlu0.c.b16.cont [6/8] 0, 128
        %4081 = vxpose.xlu0.c.b16.cont [7/8] 0, 128
        %4082 = vxpose.xlu0.c.b16.end [8/8] 0, 128
        %v4083 = vpop.trf.xlu0
        %v4084 = vpop.trf.xlu0
        %v4085 = vpop.trf.xlu0
        %v4086 = vpop.trf.xlu0
        %v4087 = vpop.trf.xlu0
        %v4088 = vpop.trf.xlu0
        %v4089 = vpop.trf.xlu0
        %v4090 = vpop.trf.xlu0
        %4091 = vxpose.xlu0.c.b16.start [1/8] %v4001, 128
        %4092 = vxpose.xlu0.c.b16.cont [2/8] 0, 128
        %4093 = vxpose.xlu0.c.b16.cont [3/8] 0, 128
        %4094 = vxpose.xlu0.c.b16.cont [4/8] 0, 128
        %4095 = vxpose.xlu0.c.b16.cont [5/8] 0, 128
        %4096 = vxpose.xlu0.c.b16.cont [6/8] 0, 128
        %4097 = vxpose.xlu0.c.b16.cont [7/8] 0, 128
        %4098 = vxpose.xlu0.c.b16.end [8/8] 0, 128
        %v4099 = vpop.trf.xlu0
        %v4100 = vpop.trf.xlu0
        %v4101 = vpop.trf.xlu0
        %v4102 = vpop.trf.xlu0
        %v4103 = vpop.trf.xlu0
        %v4104 = vpop.trf.xlu0
        %v4105 = vpop.trf.xlu0
        %v4106 = vpop.trf.xlu0
        %4107 = vxpose.xlu0.c.b16.start [1/8] %v4005, 128
        %4108 = vxpose.xlu0.c.b16.cont [2/8] 0, 128
        %4109 = vxpose.xlu0.c.b16.cont [3/8] 0, 128
        %4110 = vxpose.xlu0.c.b16.cont [4/8] 0, 128
        %4111 = vxpose.xlu0.c.b16.cont [5/8] 0, 128
        %4112 = vxpose.xlu0.c.b16.cont [6/8] 0, 128
        %4113 = vxpose.xlu0.c.b16.cont [7/8] 0, 128
        %4114 = vxpose.xlu0.c.b16.end [8/8] 0, 128
        %v4115 = vpop.trf.xlu0
        %v4116 = vpop.trf.xlu0
        %v4117 = vpop.trf.xlu0
        %v4118 = vpop.trf.xlu0
        %v4119 = vpop.trf.xlu0
        %v4120 = vpop.trf.xlu0
        %v4121 = vpop.trf.xlu0
        %v4122 = vpop.trf.xlu0
        %4123 = vxpose.xlu0.c.b16.start [1/8] %v4009, 128
        %4124 = vxpose.xlu0.c.b16.cont [2/8] 0, 128
        %4125 = vxpose.xlu0.c.b16.cont [3/8] 0, 128
        %4126 = vxpose.xlu0.c.b16.cont [4/8] 0, 128
        %4127 = vxpose.xlu0.c.b16.cont [5/8] 0, 128
        %4128 = vxpose.xlu0.c.b16.cont [6/8] 0, 128
        %4129 = vxpose.xlu0.c.b16.cont [7/8] 0, 128
        %4130 = vxpose.xlu0.c.b16.end [8/8] 0, 128
        %v4131 = vpop.trf.xlu0
        %v4132 = vpop.trf.xlu0
        %v4133 = vpop.trf.xlu0
        %v4134 = vpop.trf.xlu0
        %v4135 = vpop.trf.xlu0
        %v4136 = vpop.trf.xlu0
        %v4137 = vpop.trf.xlu0
        %v4138 = vpop.trf.xlu0
        %v4139 = vcombine.low %v4019, %v4083
        %v4141 = vunpack.c.l.s4 1983009808
        %v4142 = vunpack.c.0.s8 %v4141
        %v4143 = vlaneseq
        %v4144 = vshrl.u32 %v4143, 7
        %v4145 = vsub.s32 %v4142, %v4144
        %v4146 = vrot.slane %v4139, %v4145
        %v4147 = vcombine.low %v4051, %v4115
        %v4149 = vunpack.c.l.s4 1983009808
        %v4150 = vunpack.c.0.s8 %v4149
        %v4151 = vlaneseq
        %v4152 = vshrl.u32 %v4151, 7
        %v4153 = vsub.s32 %v4150, %v4152
        %v4154 = vrot.slane %v4147, %v4153
        %v4155 = vcombine.low %v4146, %v4154
        %v4157 = vunpack.c.l.s4 1934713408
        %v4158 = vunpack.c.0.s8 %v4157
        %v4159 = vlaneseq
        %v4160 = vshrl.u32 %v4159, 7
        %v4161 = vsub.s32 %v4158, %v4160
        %v4162 = vrot.slane %v4155, %v4161
        %v4163 = vcombine.high %v4162, 0
        %v4164 = vcombine.low %v4035, %v4099
        %v4166 = vunpack.c.l.s4 1983009808
        %v4167 = vunpack.c.0.s8 %v4166
        %v4168 = vlaneseq
        %v4169 = vshrl.u32 %v4168, 7
        %v4170 = vsub.s32 %v4167, %v4169
        %v4171 = vrot.slane %v4164, %v4170
        %v4172 = vcombine.low %v4067, %v4131
        %v4174 = vunpack.c.l.s4 1983009808
        %v4175 = vunpack.c.0.s8 %v4174
        %v4176 = vlaneseq
        %v4177 = vshrl.u32 %v4176, 7
        %v4178 = vsub.s32 %v4175, %v4177
        %v4179 = vrot.slane %v4172, %v4178
        %v4180 = vcombine.low %v4171, %v4179
        %v4182 = vunpack.c.l.s4 1934713408
        %v4183 = vunpack.c.0.s8 %v4182
        %v4184 = vlaneseq
        %v4185 = vshrl.u32 %v4184, 7
        %v4186 = vsub.s32 %v4183, %v4185
        %v4187 = vrot.slane %v4180, %v4186
        %v4188 = vcombine.high %v4187, 0
        %v4191 = vpack.i.b16 %v4187, %v4162
        %v4192 = vshrl.u32 %v4162, 16
        %v4193 = vshrl.u32 %v4187, 16
        %v4194 = vpack.i.b16 %v4193, %v4192
        %v4197 = vpack.i.b16 %v4188, %v4163
        %v4198 = vshrl.u32 %v4163, 16
        %v4199 = vshrl.u32 %v4188, 16
        %v4200 = vpack.i.b16 %v4199, %v4198
        %v4202 = vsel %vm1331, %v4191, 0
        %v4205 = vsel %vm1331, %v3779, 0
        %4207 = vmatprep.subr.bf16.mxu0 0
        %4208 = vmatpush1.bf16.xpose.msra.mxu0 0
        %4209 = vmatprep.subr.bf16.mxu0 0
        %4210 = vmatpush1.bf16.xpose.msra.mxu0 0
        %4211 = vmatprep.subr.bf16.mxu0 0
        %4212 = vmatpush1.bf16.xpose.msra.mxu0 0
        %4213 = vmatprep.subr.bf16.mxu0 0
        %4214 = vmatpush1.bf16.xpose.msra.mxu0 0
        %4215 = vmatprep.subr.bf16.mxu0 0
        %4216 = vmatpush1.bf16.xpose.msra.mxu0 0
        %4217 = vmatprep.subr.bf16.mxu0 0
        %4218 = vmatpush1.bf16.xpose.msra.mxu0 0
        %4219 = vmatprep.subr.bf16.mxu0 0
        %4220 = vmatpush1.bf16.xpose.msra.mxu0 0
        %4221 = vmatprep.subr.bf16.mxu0 0
        %4222 = vmatpush1.bf16.xpose.msra.mxu0 %v4205
        %4223 = vmatprep.subr.bf16.mxu0 0
        %4224 = vmatpush2.bf16.xpose.msra.mxu0 0
        %4225 = vmatprep.subr.bf16.mxu0 0
        %4226 = vmatpush2.bf16.xpose.msra.mxu0 0
        %4227 = vmatprep.subr.bf16.mxu0 0
        %4228 = vmatpush2.bf16.xpose.msra.mxu0 0
        %4229 = vmatprep.subr.bf16.mxu0 0
        %4230 = vmatpush2.bf16.xpose.msra.mxu0 0
        %4231 = vmatprep.subr.bf16.mxu0 0
        %4232 = vmatpush2.bf16.xpose.msra.mxu0 0
        %4233 = vmatprep.subr.bf16.mxu0 0
        %4234 = vmatpush2.bf16.xpose.msra.mxu0 0
        %4235 = vmatprep.subr.bf16.mxu0 0
        %4236 = vmatpush2.bf16.xpose.msra.mxu0 0
        %4237 = vmatprep.subr.bf16.mxu0 0
        %4238 = vmatpush2.bf16.xpose.msra.mxu0 0
        %4239 = vmatprep.mubr.bf16.mxu0 0
        %4240 = vmatmul.mubr.bf16.gmra.mxu0 %v4202
        %v4241 = vpop.f32.mrf.mxu0
        %v4242 = vadd.f32 0.0, %v4241
        %v4243 = vpop.f32.mrf.mxu0
        %v4244 = vpop.f32.mrf.mxu0
        %v4245 = vpop.f32.mrf.mxu0
        %4246 = vdwg.mxu0
        %v4248 = vsel %vm1331, %v4194, 0
        %v4251 = vsel %vm1331, %v3780, 0
        %4253 = vmatprep.subr.bf16.mxu0 0
        %4254 = vmatpush1.bf16.xpose.msra.mxu0 0
        %4255 = vmatprep.subr.bf16.mxu0 0
        %4256 = vmatpush1.bf16.xpose.msra.mxu0 0
        %4257 = vmatprep.subr.bf16.mxu0 0
        %4258 = vmatpush1.bf16.xpose.msra.mxu0 0
        %4259 = vmatprep.subr.bf16.mxu0 0
        %4260 = vmatpush1.bf16.xpose.msra.mxu0 0
        %4261 = vmatprep.subr.bf16.mxu0 0
        %4262 = vmatpush1.bf16.xpose.msra.mxu0 0
        %4263 = vmatprep.subr.bf16.mxu0 0
        %4264 = vmatpush1.bf16.xpose.msra.mxu0 0
        %4265 = vmatprep.subr.bf16.mxu0 0
        %4266 = vmatpush1.bf16.xpose.msra.mxu0 0
        %4267 = vmatprep.subr.bf16.mxu0 0
        %4268 = vmatpush1.bf16.xpose.msra.mxu0 %v4251
        %4269 = vmatprep.subr.bf16.mxu0 0
        %4270 = vmatpush2.bf16.xpose.msra.mxu0 0
        %4271 = vmatprep.subr.bf16.mxu0 0
        %4272 = vmatpush2.bf16.xpose.msra.mxu0 0
        %4273 = vmatprep.subr.bf16.mxu0 0
        %4274 = vmatpush2.bf16.xpose.msra.mxu0 0
        %4275 = vmatprep.subr.bf16.mxu0 0
        %4276 = vmatpush2.bf16.xpose.msra.mxu0 0
        %4277 = vmatprep.subr.bf16.mxu0 0
        %4278 = vmatpush2.bf16.xpose.msra.mxu0 0
        %4279 = vmatprep.subr.bf16.mxu0 0
        %4280 = vmatpush2.bf16.xpose.msra.mxu0 0
        %4281 = vmatprep.subr.bf16.mxu0 0
        %4282 = vmatpush2.bf16.xpose.msra.mxu0 0
        %4283 = vmatprep.subr.bf16.mxu0 0
        %4284 = vmatpush2.bf16.xpose.msra.mxu0 0
        %4285 = vmatprep.mubr.bf16.mxu0 0
        %4286 = vmatmul.mubr.bf16.gmra.mxu0 %v4248
        %v4287 = vpop.f32.mrf.mxu0
        %v4288 = vadd.f32 0.0, %v4287
        %v4289 = vpop.f32.mrf.mxu0
        %v4290 = vpop.f32.mrf.mxu0
        %v4291 = vpop.f32.mrf.mxu0
        %4292 = vdwg.mxu0
        %v4294 = vsel %vm1331, %v4197, 0
        %v4297 = vsel %vm1331, %v3781, 0
        %4299 = vmatprep.subr.bf16.mxu0 0
        %4300 = vmatpush1.bf16.xpose.msra.mxu0 0
        %4301 = vmatprep.subr.bf16.mxu0 0
        %4302 = vmatpush1.bf16.xpose.msra.mxu0 0
        %4303 = vmatprep.subr.bf16.mxu0 0
        %4304 = vmatpush1.bf16.xpose.msra.mxu0 0
        %4305 = vmatprep.subr.bf16.mxu0 0
        %4306 = vmatpush1.bf16.xpose.msra.mxu0 0
        %4307 = vmatprep.subr.bf16.mxu0 0
        %4308 = vmatpush1.bf16.xpose.msra.mxu0 0
        %4309 = vmatprep.subr.bf16.mxu0 0
        %4310 = vmatpush1.bf16.xpose.msra.mxu0 0
        %4311 = vmatprep.subr.bf16.mxu0 0
        %4312 = vmatpush1.bf16.xpose.msra.mxu0 0
        %4313 = vmatprep.subr.bf16.mxu0 0
        %4314 = vmatpush1.bf16.xpose.msra.mxu0 %v4297
        %4315 = vmatprep.subr.bf16.mxu0 0
        %4316 = vmatpush2.bf16.xpose.msra.mxu0 0
        %4317 = vmatprep.subr.bf16.mxu0 0
        %4318 = vmatpush2.bf16.xpose.msra.mxu0 0
        %4319 = vmatprep.subr.bf16.mxu0 0
        %4320 = vmatpush2.bf16.xpose.msra.mxu0 0
        %4321 = vmatprep.subr.bf16.mxu0 0
        %4322 = vmatpush2.bf16.xpose.msra.mxu0 0
        %4323 = vmatprep.subr.bf16.mxu0 0
        %4324 = vmatpush2.bf16.xpose.msra.mxu0 0
        %4325 = vmatprep.subr.bf16.mxu0 0
        %4326 = vmatpush2.bf16.xpose.msra.mxu0 0
        %4327 = vmatprep.subr.bf16.mxu0 0
        %4328 = vmatpush2.bf16.xpose.msra.mxu0 0
        %4329 = vmatprep.subr.bf16.mxu0 0
        %4330 = vmatpush2.bf16.xpose.msra.mxu0 0
        %4331 = vmatprep.mubr.bf16.mxu0 0
        %4332 = vmatmul.mubr.bf16.gmra.mxu0 %v4294
        %v4333 = vpop.f32.mrf.mxu0
        %v4334 = vadd.f32 0.0, %v4333
        %v4335 = vpop.f32.mrf.mxu0
        %v4336 = vpop.f32.mrf.mxu0
        %v4337 = vpop.f32.mrf.mxu0
        %4338 = vdwg.mxu0
        %v4340 = vsel %vm1331, %v4200, 0
        %v4343 = vsel %vm1331, %v3782, 0
        %4345 = vmatprep.subr.bf16.mxu0 0
        %4346 = vmatpush1.bf16.xpose.msra.mxu0 0
        %4347 = vmatprep.subr.bf16.mxu0 0
        %4348 = vmatpush1.bf16.xpose.msra.mxu0 0
        %4349 = vmatprep.subr.bf16.mxu0 0
        %4350 = vmatpush1.bf16.xpose.msra.mxu0 0
        %4351 = vmatprep.subr.bf16.mxu0 0
        %4352 = vmatpush1.bf16.xpose.msra.mxu0 0
        %4353 = vmatprep.subr.bf16.mxu0 0
        %4354 = vmatpush1.bf16.xpose.msra.mxu0 0
        %4355 = vmatprep.subr.bf16.mxu0 0
        %4356 = vmatpush1.bf16.xpose.msra.mxu0 0
        %4357 = vmatprep.subr.bf16.mxu0 0
        %4358 = vmatpush1.bf16.xpose.msra.mxu0 0
        %4359 = vmatprep.subr.bf16.mxu0 0
        %4360 = vmatpush1.bf16.xpose.msra.mxu0 %v4343
        %4361 = vmatprep.subr.bf16.mxu0 0
        %4362 = vmatpush2.bf16.xpose.msra.mxu0 0
        %4363 = vmatprep.subr.bf16.mxu0 0
        %4364 = vmatpush2.bf16.xpose.msra.mxu0 0
        %4365 = vmatprep.subr.bf16.mxu0 0
        %4366 = vmatpush2.bf16.xpose.msra.mxu0 0
        %4367 = vmatprep.subr.bf16.mxu0 0
        %4368 = vmatpush2.bf16.xpose.msra.mxu0 0
        %4369 = vmatprep.subr.bf16.mxu0 0
        %4370 = vmatpush2.bf16.xpose.msra.mxu0 0
        %4371 = vmatprep.subr.bf16.mxu0 0
        %4372 = vmatpush2.bf16.xpose.msra.mxu0 0
        %4373 = vmatprep.subr.bf16.mxu0 0
        %4374 = vmatpush2.bf16.xpose.msra.mxu0 0
        %4375 = vmatprep.subr.bf16.mxu0 0
        %4376 = vmatpush2.bf16.xpose.msra.mxu0 0
        %4377 = vmatprep.mubr.bf16.mxu0 0
        %4378 = vmatmul.mubr.bf16.gmra.mxu0 %v4340
        %v4379 = vpop.f32.mrf.mxu0
        %v4380 = vadd.f32 0.0, %v4379
        %v4381 = vpop.f32.mrf.mxu0
        %v4382 = vpop.f32.mrf.mxu0
        %v4383 = vpop.f32.mrf.mxu0
        %4384 = vdwg.mxu0
        %4385 = vxpose.xlu0.b32.start [1/16] %v4242, 128
        %4386 = vxpose.xlu0.b32.cont [2/16] 0.0, 128
        %4387 = vxpose.xlu0.b32.cont [3/16] 0.0, 128
        %4388 = vxpose.xlu0.b32.cont [4/16] 0.0, 128
        %4389 = vxpose.xlu0.b32.cont [5/16] 0.0, 128
        %4390 = vxpose.xlu0.b32.cont [6/16] 0.0, 128
        %4391 = vxpose.xlu0.b32.cont [7/16] 0.0, 128
        %4392 = vxpose.xlu0.b32.cont [8/16] 0.0, 128
        %4393 = vxpose.xlu0.b32.cont [9/16] 0.0, 128
        %4394 = vxpose.xlu0.b32.cont [10/16] 0.0, 128
        %4395 = vxpose.xlu0.b32.cont [11/16] 0.0, 128
        %4396 = vxpose.xlu0.b32.cont [12/16] 0.0, 128
        %4397 = vxpose.xlu0.b32.cont [13/16] 0.0, 128
        %4398 = vxpose.xlu0.b32.cont [14/16] 0.0, 128
        %4399 = vxpose.xlu0.b32.cont [15/16] 0.0, 128
        %4400 = vxpose.xlu0.b32.end [16/16] 0.0, 128
        %v4401 = vpop.trf.xlu0
        %v4402 = vpop.trf.xlu0
        %v4403 = vpop.trf.xlu0
        %v4404 = vpop.trf.xlu0
        %v4405 = vpop.trf.xlu0
        %v4406 = vpop.trf.xlu0
        %v4407 = vpop.trf.xlu0
        %v4408 = vpop.trf.xlu0
        %v4409 = vpop.trf.xlu0
        %v4410 = vpop.trf.xlu0
        %v4411 = vpop.trf.xlu0
        %v4412 = vpop.trf.xlu0
        %v4413 = vpop.trf.xlu0
        %v4414 = vpop.trf.xlu0
        %v4415 = vpop.trf.xlu0
        %v4416 = vpop.trf.xlu0
        %4417 = vxpose.xlu0.b32.start [1/16] %v4288, 128
        %4418 = vxpose.xlu0.b32.cont [2/16] 0.0, 128
        %4419 = vxpose.xlu0.b32.cont [3/16] 0.0, 128
        %4420 = vxpose.xlu0.b32.cont [4/16] 0.0, 128
        %4421 = vxpose.xlu0.b32.cont [5/16] 0.0, 128
        %4422 = vxpose.xlu0.b32.cont [6/16] 0.0, 128
        %4423 = vxpose.xlu0.b32.cont [7/16] 0.0, 128
        %4424 = vxpose.xlu0.b32.cont [8/16] 0.0, 128
        %4425 = vxpose.xlu0.b32.cont [9/16] 0.0, 128
        %4426 = vxpose.xlu0.b32.cont [10/16] 0.0, 128
        %4427 = vxpose.xlu0.b32.cont [11/16] 0.0, 128
        %4428 = vxpose.xlu0.b32.cont [12/16] 0.0, 128
        %4429 = vxpose.xlu0.b32.cont [13/16] 0.0, 128
        %4430 = vxpose.xlu0.b32.cont [14/16] 0.0, 128
        %4431 = vxpose.xlu0.b32.cont [15/16] 0.0, 128
        %4432 = vxpose.xlu0.b32.end [16/16] 0.0, 128
        %v4433 = vpop.trf.xlu0
        %v4434 = vpop.trf.xlu0
        %v4435 = vpop.trf.xlu0
        %v4436 = vpop.trf.xlu0
        %v4437 = vpop.trf.xlu0
        %v4438 = vpop.trf.xlu0
        %v4439 = vpop.trf.xlu0
        %v4440 = vpop.trf.xlu0
        %v4441 = vpop.trf.xlu0
        %v4442 = vpop.trf.xlu0
        %v4443 = vpop.trf.xlu0
        %v4444 = vpop.trf.xlu0
        %v4445 = vpop.trf.xlu0
        %v4446 = vpop.trf.xlu0
        %v4447 = vpop.trf.xlu0
        %v4448 = vpop.trf.xlu0
        %4449 = vxpose.xlu0.b32.start [1/16] %v4334, 128
        %4450 = vxpose.xlu0.b32.cont [2/16] 0.0, 128
        %4451 = vxpose.xlu0.b32.cont [3/16] 0.0, 128
        %4452 = vxpose.xlu0.b32.cont [4/16] 0.0, 128
        %4453 = vxpose.xlu0.b32.cont [5/16] 0.0, 128
        %4454 = vxpose.xlu0.b32.cont [6/16] 0.0, 128
        %4455 = vxpose.xlu0.b32.cont [7/16] 0.0, 128
        %4456 = vxpose.xlu0.b32.cont [8/16] 0.0, 128
        %4457 = vxpose.xlu0.b32.cont [9/16] 0.0, 128
        %4458 = vxpose.xlu0.b32.cont [10/16] 0.0, 128
        %4459 = vxpose.xlu0.b32.cont [11/16] 0.0, 128
        %4460 = vxpose.xlu0.b32.cont [12/16] 0.0, 128
        %4461 = vxpose.xlu0.b32.cont [13/16] 0.0, 128
        %4462 = vxpose.xlu0.b32.cont [14/16] 0.0, 128
        %4463 = vxpose.xlu0.b32.cont [15/16] 0.0, 128
        %4464 = vxpose.xlu0.b32.end [16/16] 0.0, 128
        %v4465 = vpop.trf.xlu0
        %v4466 = vpop.trf.xlu0
        %v4467 = vpop.trf.xlu0
        %v4468 = vpop.trf.xlu0
        %v4469 = vpop.trf.xlu0
        %v4470 = vpop.trf.xlu0
        %v4471 = vpop.trf.xlu0
        %v4472 = vpop.trf.xlu0
        %v4473 = vpop.trf.xlu0
        %v4474 = vpop.trf.xlu0
        %v4475 = vpop.trf.xlu0
        %v4476 = vpop.trf.xlu0
        %v4477 = vpop.trf.xlu0
        %v4478 = vpop.trf.xlu0
        %v4479 = vpop.trf.xlu0
        %v4480 = vpop.trf.xlu0
        %4481 = vxpose.xlu0.b32.start [1/16] %v4380, 128
        %4482 = vxpose.xlu0.b32.cont [2/16] 0.0, 128
        %4483 = vxpose.xlu0.b32.cont [3/16] 0.0, 128
        %4484 = vxpose.xlu0.b32.cont [4/16] 0.0, 128
        %4485 = vxpose.xlu0.b32.cont [5/16] 0.0, 128
        %4486 = vxpose.xlu0.b32.cont [6/16] 0.0, 128
        %4487 = vxpose.xlu0.b32.cont [7/16] 0.0, 128
        %4488 = vxpose.xlu0.b32.cont [8/16] 0.0, 128
        %4489 = vxpose.xlu0.b32.cont [9/16] 0.0, 128
        %4490 = vxpose.xlu0.b32.cont [10/16] 0.0, 128
        %4491 = vxpose.xlu0.b32.cont [11/16] 0.0, 128
        %4492 = vxpose.xlu0.b32.cont [12/16] 0.0, 128
        %4493 = vxpose.xlu0.b32.cont [13/16] 0.0, 128
        %4494 = vxpose.xlu0.b32.cont [14/16] 0.0, 128
        %4495 = vxpose.xlu0.b32.cont [15/16] 0.0, 128
        %4496 = vxpose.xlu0.b32.end [16/16] 0.0, 128
        %v4497 = vpop.trf.xlu0
        %v4498 = vpop.trf.xlu0
        %v4499 = vpop.trf.xlu0
        %v4500 = vpop.trf.xlu0
        %v4501 = vpop.trf.xlu0
        %v4502 = vpop.trf.xlu0
        %v4503 = vpop.trf.xlu0
        %v4504 = vpop.trf.xlu0
        %v4505 = vpop.trf.xlu0
        %v4506 = vpop.trf.xlu0
        %v4507 = vpop.trf.xlu0
        %v4508 = vpop.trf.xlu0
        %v4509 = vpop.trf.xlu0
        %v4510 = vpop.trf.xlu0
        %v4511 = vpop.trf.xlu0
        %v4512 = vpop.trf.xlu0
        %v4513 = vcombine.low %v4401, %v4465
        %v4514 = vcombine.high %v4401, %v4465
        %v4516 = vunpack.c.l.s4 1983009808
        %v4517 = vunpack.c.0.s8 %v4516
        %v4518 = vlaneseq
        %v4519 = vshrl.u32 %v4518, 7
        %v4520 = vsub.s32 %v4517, %v4519
        %v4521 = vrot.slane %v4513, %v4520
        %v4523 = vunpack.c.l.s4 1983009808
        %v4524 = vunpack.c.0.s8 %v4523
        %v4525 = vlaneseq
        %v4526 = vshrl.u32 %v4525, 7
        %v4527 = vsub.s32 %v4524, %v4526
        %v4528 = vrot.slane %v4514, %v4527
        %v4529 = vcombine.low %v4433, %v4497
        %v4530 = vcombine.high %v4433, %v4497
        %v4532 = vunpack.c.l.s4 1983009808
        %v4533 = vunpack.c.0.s8 %v4532
        %v4534 = vlaneseq
        %v4535 = vshrl.u32 %v4534, 7
        %v4536 = vsub.s32 %v4533, %v4535
        %v4537 = vrot.slane %v4529, %v4536
        %v4539 = vunpack.c.l.s4 1983009808
        %v4540 = vunpack.c.0.s8 %v4539
        %v4541 = vlaneseq
        %v4542 = vshrl.u32 %v4541, 7
        %v4543 = vsub.s32 %v4540, %v4542
        %v4544 = vrot.slane %v4530, %v4543
        %v4545 = vcombine.low %v4521, %v4537
        %v4546 = vcombine.high %v4521, %v4537
        %v4548 = vunpack.c.l.s4 1934713408
        %v4549 = vunpack.c.0.s8 %v4548
        %v4550 = vlaneseq
        %v4551 = vshrl.u32 %v4550, 7
        %v4552 = vsub.s32 %v4549, %v4551
        %v4553 = vrot.slane %v4545, %v4552
        %v4555 = vunpack.c.l.s4 1934713408
        %v4556 = vunpack.c.0.s8 %v4555
        %v4557 = vlaneseq
        %v4558 = vshrl.u32 %v4557, 7
        %v4559 = vsub.s32 %v4556, %v4558
        %v4560 = vrot.slane %v4546, %v4559
        %v4561 = vcombine.low %v4528, %v4544
        %v4562 = vcombine.high %v4528, %v4544
        %v4564 = vunpack.c.l.s4 1934713408
        %v4565 = vunpack.c.0.s8 %v4564
        %v4566 = vlaneseq
        %v4567 = vshrl.u32 %v4566, 7
        %v4568 = vsub.s32 %v4565, %v4567
        %v4569 = vrot.slane %v4561, %v4568
        %v4571 = vunpack.c.l.s4 1934713408
        %v4572 = vunpack.c.0.s8 %v4571
        %v4573 = vlaneseq
        %v4574 = vshrl.u32 %v4573, 7
        %v4575 = vsub.s32 %v4572, %v4574
        %v4576 = vrot.slane %v4562, %v4575
        %v4577 = vcombine.high %v4553, 0.0
        %v4578 = vcombine.high %v4560, 0.0
        %v4579 = vcombine.high %v4569, 0.0
        %v4580 = vcombine.high %v4576, 0.0
        %v4581 = vcombine.low %v4553, %v4560
        %v4583 = vunpack.c.l.s4 1983009808
        %v4584 = vunpack.c.0.s8 %v4583
        %v4585 = vlaneseq
        %v4586 = vshrl.u32 %v4585, 7
        %v4587 = vsub.s32 %v4584, %v4586
        %v4588 = vrot.slane %v4581, %v4587
        %v4589 = vcombine.low %v4577, %v4578
        %v4591 = vunpack.c.l.s4 1983009808
        %v4592 = vunpack.c.0.s8 %v4591
        %v4593 = vlaneseq
        %v4594 = vshrl.u32 %v4593, 7
        %v4595 = vsub.s32 %v4592, %v4594
        %v4596 = vrot.slane %v4589, %v4595
        %v4597 = vcombine.low %v4569, %v4576
        %v4599 = vunpack.c.l.s4 1983009808
        %v4600 = vunpack.c.0.s8 %v4599
        %v4601 = vlaneseq
        %v4602 = vshrl.u32 %v4601, 7
        %v4603 = vsub.s32 %v4600, %v4602
        %v4604 = vrot.slane %v4597, %v4603
        %v4605 = vcombine.low %v4579, %v4580
        %v4607 = vunpack.c.l.s4 1983009808
        %v4608 = vunpack.c.0.s8 %v4607
        %v4609 = vlaneseq
        %v4610 = vshrl.u32 %v4609, 7
        %v4611 = vsub.s32 %v4608, %v4610
        %v4612 = vrot.slane %v4605, %v4611
        %v4613 = vcombine.low %v4588, %v4596
        %v4614 = vcombine.high %v4588, %v4596
        %v4616 = vunpack.c.l.s4 1934713408
        %v4617 = vunpack.c.0.s8 %v4616
        %v4618 = vlaneseq
        %v4619 = vshrl.u32 %v4618, 7
        %v4620 = vsub.s32 %v4617, %v4619
        %v4621 = vrot.slane %v4613, %v4620
        %v4623 = vunpack.c.l.s4 1934713408
        %v4624 = vunpack.c.0.s8 %v4623
        %v4625 = vlaneseq
        %v4626 = vshrl.u32 %v4625, 7
        %v4627 = vsub.s32 %v4624, %v4626
        %v4628 = vrot.slane %v4614, %v4627
        %v4629 = vcombine.low %v4604, %v4612
        %v4630 = vcombine.high %v4604, %v4612
        %v4632 = vunpack.c.l.s4 1934713408
        %v4633 = vunpack.c.0.s8 %v4632
        %v4634 = vlaneseq
        %v4635 = vshrl.u32 %v4634, 7
        %v4636 = vsub.s32 %v4633, %v4635
        %v4637 = vrot.slane %v4629, %v4636
        %v4639 = vunpack.c.l.s4 1934713408
        %v4640 = vunpack.c.0.s8 %v4639
        %v4641 = vlaneseq
        %v4642 = vshrl.u32 %v4641, 7
        %v4643 = vsub.s32 %v4640, %v4642
        %v4644 = vrot.slane %v4630, %v4643
        %v4645 = vcombine.low %v4621, %v4637
        %v4646 = vcombine.high %v4621, %v4637
        %v4647 = vcombine.low %v4628, %v4644
        %v4648 = vcombine.high %v4628, %v4644
        %4650 = vrot.lane.b32.xlu0 %v4646, 8
        %v4651 = vpop.permute.xlu0 %4650
        %4654 = vrot.lane.b32.xlu0 %v4647, 16
        %v4655 = vpop.permute.xlu0 %4654
        %4658 = vrot.lane.b32.xlu0 %v4648, 24
        %v4659 = vpop.permute.xlu0 %4658
        %v4661 = vsel %vm1331, %v4645, %v4651
        %v4662 = vsel %vm2444, %v4661, %v4655
        %v4663 = vsel %vm2446, %v4662, %v4659
        %v4664 = vpack.c.bf16 %v4663, %v4663
        %s4665 = scalar_lea.vmem %s7, 16
        %v4666 = vld [vmem:[%s4665] sm:$0xf]
        %v4667 = vld [vmem:[%s4665 + $0x4] sm:$0xf]
        %v4668 = vld [vmem:[%s4665 + $0x8] sm:$0xf]
        %v4669 = vld [vmem:[%s4665 + $0xc] sm:$0xf]
        %v4670 = vlaneseq
        %v4671 = vshrl.u32 %v4670, 7
        %v4672 = vsub.s32 1, %v4671
        %v4673 = vrot.slane %v2743, %v4672
        %v4678 = vunpack.c.l.b16 %v4666
        %v4679 = vunpack.c.l.b16 %v4667
        %v4680 = vunpack.c.l.b16 %v4668
        %v4681 = vunpack.c.l.b16 %v4669
        %v4682 = vpack.c.b16 %v4679, %v4678
        %v4683 = vpack.c.b16 %v4681, %v4680
        %v4687 = vsel %vm490, %v4664, 0
        %4689 = vmatprep.subr.bf16.mxu0 0
        %4690 = vmatpush1.bf16.msra.mxu0 0
        %4691 = vmatprep.subr.bf16.mxu0 0
        %4692 = vmatpush1.bf16.msra.mxu0 0
        %4693 = vmatprep.subr.bf16.mxu0 0
        %4694 = vmatpush1.bf16.msra.mxu0 0
        %4695 = vmatprep.subr.bf16.mxu0 0
        %4696 = vmatpush1.bf16.msra.mxu0 0
        %4697 = vmatprep.subr.bf16.mxu0 0
        %4698 = vmatpush1.bf16.msra.mxu0 0
        %4699 = vmatprep.subr.bf16.mxu0 0
        %4700 = vmatpush1.bf16.msra.mxu0 0
        %4701 = vmatprep.subr.bf16.mxu0 0
        %4702 = vmatpush1.bf16.msra.mxu0 %v4683
        %4703 = vmatprep.subr.bf16.mxu0 0
        %4704 = vmatpush1.bf16.msra.mxu0 %v4682
        %4705 = vmatprep.subr.bf16.mxu0 0
        %4706 = vmatpush2.bf16.msra.mxu0 0
        %4707 = vmatprep.subr.bf16.mxu0 0
        %4708 = vmatpush2.bf16.msra.mxu0 0
        %4709 = vmatprep.subr.bf16.mxu0 0
        %4710 = vmatpush2.bf16.msra.mxu0 0
        %4711 = vmatprep.subr.bf16.mxu0 0
        %4712 = vmatpush2.bf16.msra.mxu0 0
        %4713 = vmatprep.subr.bf16.mxu0 0
        %4714 = vmatpush2.bf16.msra.mxu0 0
        %4715 = vmatprep.subr.bf16.mxu0 0
        %4716 = vmatpush2.bf16.msra.mxu0 0
        %4717 = vmatprep.subr.bf16.mxu0 0
        %4718 = vmatpush2.bf16.msra.mxu0 0
        %4719 = vmatprep.subr.bf16.mxu0 0
        %4720 = vmatpush2.bf16.msra.mxu0 0
        %4721 = vmatprep.mubr.bf16.mxu0 0
        %4722 = vmatmul.mubr.bf16.gmra.mxu0 %v4687
        %v4723 = vpop.f32.mrf.mxu0
        %v4724 = vadd.f32 %v4673, %v4723
        %v4725 = vpop.f32.mrf.mxu0
        %v4726 = vpop.f32.mrf.mxu0
        %v4727 = vpop.f32.mrf.mxu0
        %4728 = vdwg.mxu0
        %v4729 = vadd.f32 %v4724, %v2741
        %v4730 = vsel %vm490, %v4729, 0.0
        %4731 = vadd.xlane.f32.xlu0 %v4730
        %v4732 = vpop.xlane.xlu0 %4731
        %v4733 = vmul.f32 %v4732, %v494
        %v4734 = vsub.f32 %v4729, %v4733
        %v4735 = vmul.f32 %v4734, %v4734
        %v4736 = vsel %vm490, %v4735, 0.0
        %4737 = vadd.xlane.f32.xlu0 %v4736
        %v4738 = vpop.xlane.xlu0 %4737
        %v4739 = vmul.f32 %v4738, %v494
        %v4740 = vadd.f32 %v4739, 1e-12
        %v4741 = vrsqrt.pop %v4740
        %v4742 = vmul.f32 %v4734, %v4741
        %v4743 = vlaneseq
        %v4744 = vshrl.u32 %v4743, 7
        %v4745 = vsub.s32 2, %v4744
        %v4746 = vrot.slane %v2743, %v4745
        %v4747 = vmul.f32 %v4742, %v4746
        %v4748 = vlaneseq
        %v4749 = vshrl.u32 %v4748, 7
        %v4750 = vsub.s32 3, %v4749
        %v4751 = vrot.slane %v2743, %v4750
        %v4752 = vadd.f32 %v4747, %v4751
        %v4753 = vpack.c.bf16 %v4752, %v4752
        %s4754 = scalar_lea.vmem %s8, 16
        %v4755 = vld [vmem:[%s4754] sm:$0xf]
        %v4756 = vld [vmem:[%s4754 + $0x4] sm:$0xf]
        %v4757 = vld [vmem:[%s4754 + $0x8] sm:$0xf]
        %v4758 = vld [vmem:[%s4754 + $0xc] sm:$0xf]
        %v4759 = vlaneseq
        %v4760 = vshrl.u32 %v4759, 7
        %v4761 = vsub.s32 4, %v4760
        %v4762 = vrot.slane %v2743, %v4761
        %v4767 = vunpack.c.l.b16 %v4755
        %v4768 = vunpack.c.l.b16 %v4756
        %v4769 = vunpack.c.l.b16 %v4757
        %v4770 = vunpack.c.l.b16 %v4758
        %v4771 = vpack.c.b16 %v4768, %v4767
        %v4772 = vpack.c.b16 %v4770, %v4769
        %v4776 = vsel %vm490, %v4753, 0
        %4778 = vmatprep.subr.bf16.mxu0 0
        %4779 = vmatpush1.bf16.msra.mxu0 0
        %4780 = vmatprep.subr.bf16.mxu0 0
        %4781 = vmatpush1.bf16.msra.mxu0 0
        %4782 = vmatprep.subr.bf16.mxu0 0
        %4783 = vmatpush1.bf16.msra.mxu0 0
        %4784 = vmatprep.subr.bf16.mxu0 0
        %4785 = vmatpush1.bf16.msra.mxu0 0
        %4786 = vmatprep.subr.bf16.mxu0 0
        %4787 = vmatpush1.bf16.msra.mxu0 0
        %4788 = vmatprep.subr.bf16.mxu0 0
        %4789 = vmatpush1.bf16.msra.mxu0 0
        %4790 = vmatprep.subr.bf16.mxu0 0
        %4791 = vmatpush1.bf16.msra.mxu0 %v4772
        %4792 = vmatprep.subr.bf16.mxu0 0
        %4793 = vmatpush1.bf16.msra.mxu0 %v4771
        %4794 = vmatprep.subr.bf16.mxu0 0
        %4795 = vmatpush2.bf16.msra.mxu0 0
        %4796 = vmatprep.subr.bf16.mxu0 0
        %4797 = vmatpush2.bf16.msra.mxu0 0
        %4798 = vmatprep.subr.bf16.mxu0 0
        %4799 = vmatpush2.bf16.msra.mxu0 0
        %4800 = vmatprep.subr.bf16.mxu0 0
        %4801 = vmatpush2.bf16.msra.mxu0 0
        %4802 = vmatprep.subr.bf16.mxu0 0
        %4803 = vmatpush2.bf16.msra.mxu0 0
        %4804 = vmatprep.subr.bf16.mxu0 0
        %4805 = vmatpush2.bf16.msra.mxu0 0
        %4806 = vmatprep.subr.bf16.mxu0 0
        %4807 = vmatpush2.bf16.msra.mxu0 0
        %4808 = vmatprep.subr.bf16.mxu0 0
        %4809 = vmatpush2.bf16.msra.mxu0 0
        %4810 = vmatprep.mubr.bf16.mxu0 0
        %4811 = vmatmul.mubr.bf16.gmra.mxu0 %v4776
        %v4812 = vpop.f32.mrf.mxu0
        %v4813 = vadd.f32 %v4762, %v4812
        %v4814 = vpop.f32.mrf.mxu0
        %v4815 = vpop.f32.mrf.mxu0
        %v4816 = vpop.f32.mrf.mxu0
        %4817 = vdwg.mxu0
        %v4818 = vmul.f32 %v4813, 0.5
        %v4819 = vmul.f32 %v4813, 0.044715
        %v4820 = vmul.f32 %v4819, %v4813
        %v4821 = vmul.f32 %v4820, %v4813
        %v4822 = vadd.f32 %v4813, %v4821
        %v4823 = vmul.f32 %v4822, 0.7978846
        %v4824 = vtanh.pop %v4823
        %v4825 = vadd.f32 %v4824, 1.0
        %v4826 = vmul.f32 %v4818, %v4825
        %v4827 = vpack.c.bf16 %v4826, %v4826
        %s4828 = scalar_lea.vmem %s9, 64
        %v4829 = vld [vmem:[%s4828] sm:$0xf]
        %v4830 = vld [vmem:[%s4828 + $0x4] sm:$0xf]
        %v4831 = vld [vmem:[%s4828 + $0x8] sm:$0xf]
        %v4832 = vld [vmem:[%s4828 + $0xc] sm:$0xf]
        %v4833 = vld [vmem:[%s4828 + $0x10] sm:$0xf]
        %v4834 = vld [vmem:[%s4828 + $0x14] sm:$0xf]
        %v4835 = vld [vmem:[%s4828 + $0x18] sm:$0xf]
        %v4836 = vld [vmem:[%s4828 + $0x1c] sm:$0xf]
        %v4837 = vld [vmem:[%s4828 + $0x20] sm:$0xf]
        %v4838 = vld [vmem:[%s4828 + $0x24] sm:$0xf]
        %v4839 = vld [vmem:[%s4828 + $0x28] sm:$0xf]
        %v4840 = vld [vmem:[%s4828 + $0x2c] sm:$0xf]
        %v4841 = vld [vmem:[%s4828 + $0x30] sm:$0xf]
        %v4842 = vld [vmem:[%s4828 + $0x34] sm:$0xf]
        %v4843 = vld [vmem:[%s4828 + $0x38] sm:$0xf]
        %v4844 = vld [vmem:[%s4828 + $0x3c] sm:$0xf]
        %v4845 = vlaneseq
        %v4846 = vshrl.u32 %v4845, 7
        %v4847 = vsub.s32 5, %v4846
        %v4848 = vrot.slane %v2743, %v4847
        %v4865 = vunpack.c.l.b16 %v4829
        %v4866 = vunpack.c.l.b16 %v4830
        %v4867 = vunpack.c.l.b16 %v4831
        %v4868 = vunpack.c.l.b16 %v4832
        %v4869 = vunpack.c.l.b16 %v4833
        %v4870 = vunpack.c.l.b16 %v4834
        %v4871 = vunpack.c.l.b16 %v4835
        %v4872 = vunpack.c.l.b16 %v4836
        %v4873 = vunpack.c.l.b16 %v4837
        %v4874 = vunpack.c.l.b16 %v4838
        %v4875 = vunpack.c.l.b16 %v4839
        %v4876 = vunpack.c.l.b16 %v4840
        %v4877 = vunpack.c.l.b16 %v4841
        %v4878 = vunpack.c.l.b16 %v4842
        %v4879 = vunpack.c.l.b16 %v4843
        %v4880 = vunpack.c.l.b16 %v4844
        %v4881 = vpack.c.b16 %v4866, %v4865
        %v4882 = vpack.c.b16 %v4868, %v4867
        %v4883 = vpack.c.b16 %v4870, %v4869
        %v4884 = vpack.c.b16 %v4872, %v4871
        %v4885 = vpack.c.b16 %v4874, %v4873
        %v4886 = vpack.c.b16 %v4876, %v4875
        %v4887 = vpack.c.b16 %v4878, %v4877
        %v4888 = vpack.c.b16 %v4880, %v4879
        %4897 = vmatprep.subr.bf16.mxu0 0
        %4898 = vmatpush1.bf16.msra.mxu0 %v4888
        %4899 = vmatprep.subr.bf16.mxu0 0
        %4900 = vmatpush1.bf16.msra.mxu0 %v4887
        %4901 = vmatprep.subr.bf16.mxu0 0
        %4902 = vmatpush1.bf16.msra.mxu0 %v4886
        %4903 = vmatprep.subr.bf16.mxu0 0
        %4904 = vmatpush1.bf16.msra.mxu0 %v4885
        %4905 = vmatprep.subr.bf16.mxu0 0
        %4906 = vmatpush1.bf16.msra.mxu0 %v4884
        %4907 = vmatprep.subr.bf16.mxu0 0
        %4908 = vmatpush1.bf16.msra.mxu0 %v4883
        %4909 = vmatprep.subr.bf16.mxu0 0
        %4910 = vmatpush1.bf16.msra.mxu0 %v4882
        %4911 = vmatprep.subr.bf16.mxu0 0
        %4912 = vmatpush1.bf16.msra.mxu0 %v4881
        %4913 = vmatprep.subr.bf16.mxu0 0
        %4914 = vmatpush2.bf16.msra.mxu0 0
        %4915 = vmatprep.subr.bf16.mxu0 0
        %4916 = vmatpush2.bf16.msra.mxu0 0
        %4917 = vmatprep.subr.bf16.mxu0 0
        %4918 = vmatpush2.bf16.msra.mxu0 0
        %4919 = vmatprep.subr.bf16.mxu0 0
        %4920 = vmatpush2.bf16.msra.mxu0 0
        %4921 = vmatprep.subr.bf16.mxu0 0
        %4922 = vmatpush2.bf16.msra.mxu0 0
        %4923 = vmatprep.subr.bf16.mxu0 0
        %4924 = vmatpush2.bf16.msra.mxu0 0
        %4925 = vmatprep.subr.bf16.mxu0 0
        %4926 = vmatpush2.bf16.msra.mxu0 0
        %4927 = vmatprep.subr.bf16.mxu0 0
        %4928 = vmatpush2.bf16.msra.mxu0 0
        %4929 = vmatprep.mubr.bf16.mxu0 0
        %4930 = vmatmul.mubr.bf16.gmra.mxu0 %v4827
        %v4931 = vpop.f32.mrf.mxu0
        %v4932 = vadd.f32 %v4848, %v4931
        %v4933 = vpop.f32.mrf.mxu0
        %v4934 = vpop.f32.mrf.mxu0
        %v4935 = vpop.f32.mrf.mxu0
        %4936 = vdwg.mxu0
        %v4937 = vadd.f32 %v4932, %v4752
        %v4938 = vsel %vm490, %v4937, 0.0
        %4939 = vadd.xlane.f32.xlu0 %v4938
        %v4940 = vpop.xlane.xlu0 %4939
        %v4941 = vmul.f32 %v4940, %v494
        %v4942 = vsub.f32 %v4937, %v4941
        %v4943 = vmul.f32 %v4942, %v4942
        %v4944 = vsel %vm490, %v4943, 0.0
        %4945 = vadd.xlane.f32.xlu0 %v4944
        %v4946 = vpop.xlane.xlu0 %4945
        %v4947 = vmul.f32 %v4946, %v494
        %v4948 = vadd.f32 %v4947, 1e-12
        %v4949 = vrsqrt.pop %v4948
        %v4950 = vmul.f32 %v4942, %v4949
        %v4951 = vlaneseq
        %v4952 = vshrl.u32 %v4951, 7
        %v4953 = vsub.s32 6, %v4952
        %v4954 = vrot.slane %v2743, %v4953
        %v4955 = vmul.f32 %v4950, %v4954
        %v4956 = vlaneseq
        %v4957 = vshrl.u32 %v4956, 7
        %v4958 = vsub.s32 7, %v4957
        %v4959 = vrot.slane %v2743, %v4958
        %v4960 = vadd.f32 %v4955, %v4959
        %v4961 = vpack.c.bf16 %v4960, %v4960
        %v4962 = vld [vmem:[%s10] sm:$0xf]
        %v4963 = vld [vmem:[%s10 + $0x4] sm:$0xf]
        %v4964 = vld [vmem:[%s10 + $0x8] sm:$0xf]
        %v4965 = vld [vmem:[%s10 + $0xc] sm:$0xf]
        %v4966 = vlaneseq
        %v4967 = vshrl.u32 %v4966, 7
        %v4968 = vsub.s32 2, %v4967
        %v4969 = vrot.slane %v397, %v4968
        %v4974 = vunpack.c.l.b16 %v4962
        %v4975 = vunpack.c.l.b16 %v4963
        %v4976 = vunpack.c.l.b16 %v4964
        %v4977 = vunpack.c.l.b16 %v4965
        %v4978 = vpack.c.b16 %v4975, %v4974
        %v4979 = vpack.c.b16 %v4977, %v4976
        %v4983 = vsel %vm490, %v4961, 0
        %4985 = vmatprep.subr.bf16.mxu0 0
        %4986 = vmatpush1.bf16.msra.mxu0 0
        %4987 = vmatprep.subr.bf16.mxu0 0
        %4988 = vmatpush1.bf16.msra.mxu0 0
        %4989 = vmatprep.subr.bf16.mxu0 0
        %4990 = vmatpush1.bf16.msra.mxu0 0
        %4991 = vmatprep.subr.bf16.mxu0 0
        %4992 = vmatpush1.bf16.msra.mxu0 0
        %4993 = vmatprep.subr.bf16.mxu0 0
        %4994 = vmatpush1.bf16.msra.mxu0 0
        %4995 = vmatprep.subr.bf16.mxu0 0
        %4996 = vmatpush1.bf16.msra.mxu0 0
        %4997 = vmatprep.subr.bf16.mxu0 0
        %4998 = vmatpush1.bf16.msra.mxu0 %v4979
        %4999 = vmatprep.subr.bf16.mxu0 0
        %5000 = vmatpush1.bf16.msra.mxu0 %v4978
        %5001 = vmatprep.subr.bf16.mxu0 0
        %5002 = vmatpush2.bf16.msra.mxu0 0
        %5003 = vmatprep.subr.bf16.mxu0 0
        %5004 = vmatpush2.bf16.msra.mxu0 0
        %5005 = vmatprep.subr.bf16.mxu0 0
        %5006 = vmatpush2.bf16.msra.mxu0 0
        %5007 = vmatprep.subr.bf16.mxu0 0
        %5008 = vmatpush2.bf16.msra.mxu0 0
        %5009 = vmatprep.subr.bf16.mxu0 0
        %5010 = vmatpush2.bf16.msra.mxu0 0
        %5011 = vmatprep.subr.bf16.mxu0 0
        %5012 = vmatpush2.bf16.msra.mxu0 0
        %5013 = vmatprep.subr.bf16.mxu0 0
        %5014 = vmatpush2.bf16.msra.mxu0 0
        %5015 = vmatprep.subr.bf16.mxu0 0
        %5016 = vmatpush2.bf16.msra.mxu0 0
        %5017 = vmatprep.mubr.bf16.mxu0 0
        %5018 = vmatmul.mubr.bf16.gmra.mxu0 %v4983
        %v5019 = vpop.f32.mrf.mxu0
        %v5020 = vadd.f32 %v4969, %v5019
        %v5021 = vpop.f32.mrf.mxu0
        %v5022 = vpop.f32.mrf.mxu0
        %v5023 = vpop.f32.mrf.mxu0
        %5024 = vdwg.mxu0
        %5025 = vmax.xlane.f32.xlu0 %v5020
        %v5026 = vpop.xlane.xlu0 %5025
        %v5027 = vsub.f32 %v5020, %v5026
        %v5028 = vmul.f32 %v5027, 1.442695
        %v5029 = vpow.pop %v5028
        %5030 = vadd.xlane.f32.xlu0 %v5029
        %v5031 = vpop.xlane.xlu0 %5030
        %v5032 = vrcp.pop %v5031
        %v5033 = vmul.f32 %v5029, %v5032
        %5034 = vst [vmem:[%s388] sm:$0xff] %v5033
        %s5035 = sand.u32 %s274, 1
        %s5036 = scalar_lea.sflag [#allocation3], %s5035
        %s5037 = sand.u32 %s274, 1
        %s5038 = smul.addr %s5037, 8
        %s5039 = scalar_lea.vmem [#allocation2], %s5038
        // Predicated region
        $region65: #{tpu_custom_call.1} parent=63 // pred_check
          %p5040 = pneg %p284
        $region66: #{tpu_custom_call.1} parent=63 // pred_check_branch
          %5042 = sbr.rel (%p5040) target = $region68
        $region67: #{tpu_custom_call.1} parent=63 // pred_region
          %s5044 = ssub.s32 128, 128
          %5045 = vsyncadd %s5036, %s5044
          %s5046 = smul.addr %s25, 128
          %s5047 = scalar_lea.hbm %s11, %s5046
          %s5049 = sshll.u32 %s5039, 4
          %s5050 = int_to_ptr.vmem [resolvable:$true] %s5049
          %5052 = dma.vmem_to_hbm [thread:$0]  %s5050, 128, %s5047, %s5036
        $region68: #{tpu_custom_call.1} parent=63 // pred_fallthru
          _
      $region64: #{tpu_custom_call.1} parent=5 // pred_fallthru
        _
      %p5053 = scmp.le.s32.totalorder 2, %s20
      // Predicated region
      $region69: #{tpu_custom_call.1} parent=5 // pred_check
        %p5054 = pneg %p5053
      $region70: #{tpu_custom_call.1} parent=5 // pred_check_branch
        %5056 = sbr.rel (%p5054) target = $region72
      $region71: #{tpu_custom_call.1} parent=5 // pred_region
        %s5057 = ssub.s32 %s20, 2
        // Predicated region
        $region73: #{tpu_custom_call.1} parent=71 // pred_check
          %p5058 = pneg %p290
        $region74: #{tpu_custom_call.1} parent=71 // pred_check_branch
          %5060 = sbr.rel (%p5058) target = $region76
        $region75: #{tpu_custom_call.1} parent=71 // pred_region
          %s5061 = sand.u32 %s275, 1
          %s5062 = scalar_lea.sflag [#allocation3], %s5061
          %s5063 = sand.u32 %s275, 1
          %s5064 = smul.addr %s5063, 8
          %s5065 = scalar_lea.vmem [#allocation2], %s5064
          %5066 = dma.done %s5062, 128
        $region76: #{tpu_custom_call.1} parent=71 // pred_fallthru
          _
      $region72: #{tpu_custom_call.1} parent=5 // pred_fallthru
        _
    $region6: #{tpu_custom_call.1} parent=1 // loop_footer
      %s24 = sadd.s32 1, %s20
    $region7: #{tpu_custom_call.1} parent=1 // loop_footer_branch
      %19 = sbr.rel target = $region3
    $region8: #{tpu_custom_call.1} parent=1 // loop_exit
      _
    %5067 = vsyncpa [#allocation3], 1
    %s5068 = scalar_lea.sflag [#allocation3], 1
    %5069 = vsyncpa %s5068, 1

</llo_original>
